<compile_context>
chip_gen: v5e
topology: v5e:2x2
jax: 0.10.0
libtpu: 0.0.40
codegen_flags: <defaults>
</compile_context>

<pallas_src>
import math
from functools import partial

import jax
import jax.numpy as jnp
from jax.experimental import pallas as pl
from jax.experimental.pallas import tpu as pltpu

NORM_EPS = 1e-6
MASK_FILL = -1e9
D_K = 256  # hard-coded in the PyTorch MultiHeadAttention


def _torch_norm(x, alpha, bias):
    """PyTorch `Norm`: alpha*(x-mean)/(std+eps)+bias, unbiased std over last dim."""
    d = x.shape[-1]
    mean = jnp.mean(x, axis=-1, keepdims=True)
    c = x - mean
    var = jnp.sum(c * c, axis=-1, keepdims=True) * (1.0 / (d - 1))
    inv = 1.0 / (jnp.sqrt(var) + NORM_EPS)          # (rows, 1) exact divide, cheap
    return alpha * (c * inv) + bias


# ------------------------------ fused kernel --------------------------------
def fused_transformer_kernel(
        x_ref, peseg_ref, bias_ref, na_ref, nb_ref,
        a1_ref, c1_ref, wq_ref, bq_ref, wk_ref, bk_ref, wv_ref, bv_ref,
        wo_ref, bo_ref, a2_ref, c2_ref, w1_ref, b1_ref, w2_ref, b2_ref,
        o_ref, attn_scr, *, batch, seq, heads, scale):
    layer = pl.program_id(0)

    # ---- prologue: positional + segment encoding (layer 0 only) ------------
    @pl.when(layer == 0)
    def _():
        o_ref[...] = x_ref[...] * scale + peseg_ref[...]

    x = o_ref[...]                                    # (B*S, D) f32, VMEM-resident

    # ---- self-attention sub-block -------------------------------------------
    x2 = _torch_norm(x, a1_ref[0], c1_ref[0])
    x2b = x2.astype(jnp.bfloat16)                     # MXU operand; accum stays f32
    q = jnp.dot(x2b, wq_ref[0], preferred_element_type=jnp.float32) + bq_ref[0]
    k = jnp.dot(x2b, wk_ref[0], preferred_element_type=jnp.float32) + bk_ref[0]
    v = jnp.dot(x2b, wv_ref[0], preferred_element_type=jnp.float32) + bv_ref[0]

    biasv = bias_ref[...]                             # (B, S) additive mask bias
    inv_sqrt_dk = 1.0 / math.sqrt(D_K)
    for b in range(batch):                            # static: batch/heads tiny
        rows = slice(b * seq, (b + 1) * seq)
        bias_b = biasv[b:b + 1, :]                    # (1, S) -> broadcast over queries
        for h in range(heads):
            cols = slice(h * D_K, (h + 1) * D_K)
            qh = q[rows, cols]
            kh = k[rows, cols]
            vh = v[rows, cols]
            # contract on the feature dim (no materialized transpose)
            s = jax.lax.dot_general(qh, kh, (((1,), (1,)), ((), ())),
                                    preferred_element_type=jnp.float32)
            s = s * inv_sqrt_dk + bias_b
            m = jnp.max(s, axis=-1, keepdims=True)
            e = jnp.exp(s - m)
            p = e * pl.reciprocal(jnp.sum(e, axis=-1, keepdims=True), approx=True)
            # lane/sublane-aligned slice write (b*8 rows, h*256 lanes)
            attn_scr[rows, cols] = jnp.dot(p, vh, preferred_element_type=jnp.float32)

    attn = jnp.dot(attn_scr[...].astype(jnp.bfloat16), wo_ref[0],
                   preferred_element_type=jnp.float32) + bo_ref[0]
    x = x + attn                                      # residual 1 (f32)

    # ---- feed-forward sub-block ----------------------------------------------
    x2 = _torch_norm(x, a2_ref[0], c2_ref[0])
    h1 = jnp.dot(x2.astype(jnp.bfloat16), w1_ref[0],
                 preferred_element_type=jnp.float32) + b1_ref[0]
    h1 = jnp.maximum(h1, 0.0)
    ffo = jnp.dot(h1.astype(jnp.bfloat16), w2_ref[0],
                  preferred_element_type=jnp.float32) + b2_ref[0]
    o_ref[...] = x + ffo                              # residual 2, stays resident

    # ---- epilogue: final Norm (last layer only) ------------------------------
    @pl.when(layer == pl.num_programs(0) - 1)
    def _():
        o_ref[...] = _torch_norm(o_ref[...], na_ref[...], nb_ref[...])


# -------------------------------- wrapper ------------------------------------
def transformer_forward(data, attn_m, view_idx, params, *, heads):
    """data: (B, S, d_f) f32, attn_m: (B, S) f32 (1.0 => masked key position)."""
    B, S, D = data.shape
    layers = params["layers"]
    L = len(layers)
    HDK = heads * D_K
    DFF = layers[0]["w1"].shape[-1]

    x2d = data.reshape(B * S, D)
    # positional + segment embedding, pre-tiled to the flattened (B*S, D) layout
    peseg = (jnp.tile(params["pe"][:S], (B, 1))
             + params["seg_table"][view_idx][None, :]).astype(jnp.float32)
    # additive mask bias: -1e9 on padded key positions (broadcast over queries)
    mask_bias = jnp.where(attn_m > 0.5, MASK_FILL, 0.0).astype(jnp.float32)

    def stack(name, dtype=jnp.float32):
        return jnp.stack([lp[name] for lp in layers]).astype(dtype)

    # bf16 only for MXU weight operands; biases / norm params stay f32
    w_args = (
        stack("a1"), stack("c1"),
        stack("wq", jnp.bfloat16), stack("bq"),
        stack("wk", jnp.bfloat16), stack("bk"),
        stack("wv", jnp.bfloat16), stack("bv"),
        stack("wo", jnp.bfloat16), stack("bo"),
        stack("a2"), stack("c2"),
        stack("w1", jnp.bfloat16), stack("b1"),
        stack("w2", jnp.bfloat16), stack("b2"),
    )
    const_args = (x2d, peseg, mask_bias, params["norm_a"], params["norm_b"])

    def const_spec(a):
        nd = a.ndim
        return pl.BlockSpec(a.shape, lambda l, _nd=nd: (0,) * _nd)

    def layer_spec(a):
        nd = a.ndim
        return pl.BlockSpec((1,) + tuple(a.shape[1:]),
                            lambda l, _nd=nd: (l,) + (0,) * (_nd - 1))

    in_specs = ([const_spec(a) for a in const_args]
                + [layer_spec(a) for a in w_args])

    flops = L * B * (3 * 2 * S * D * HDK        # QKV projections
                     + 2 * 2 * S * S * HDK      # QK^T and PV
                     + 2 * S * HDK * D          # out projection
                     + 4 * S * D * DFF)         # FFN
    bytes_accessed = int(sum(int(a.size) * a.dtype.itemsize
                             for a in const_args + w_args) + B * S * D * 4)

    out2d = pl.pallas_call(
        partial(fused_transformer_kernel, batch=B, seq=S, heads=heads,
                scale=math.sqrt(D)),
        out_shape=jax.ShapeDtypeStruct((B * S, D), jnp.float32),
        grid_spec=pltpu.PrefetchScalarGridSpec(
            num_scalar_prefetch=0,
            grid=(L,),                                       # stream weights per layer
            in_specs=in_specs,
            out_specs=pl.BlockSpec((B * S, D), lambda l: (0, 0)),  # resident accumulator
            scratch_shapes=[pltpu.VMEM((B * S, HDK), jnp.float32)],
        ),
        compiler_params=pltpu.CompilerParams(
            dimension_semantics=("arbitrary",),              # layers are sequential
            vmem_limit_bytes=64 * 1024 * 1024,
        ),
        cost_estimate=pl.CostEstimate(flops=int(flops),
                                      transcendentals=int(L * B * heads * S * S),
                                      bytes_accessed=bytes_accessed),
    )(*(const_args + w_args))
    return out2d.reshape(B, S, D)
    # TODO(synk): nn.Dropout (attention probs / residual / FFN) omitted — eval mode.


# -------------------- pure-JAX reference (correctness) ----------------------
def ref_transformer(data, attn_m, view_idx, params, *, heads):
    B, S, D = data.shape
    h = (data * math.sqrt(D)
         + params["pe"][:S][None]
         + params["seg_table"][view_idx][None, None, :])
    mask = jnp.broadcast_to(attn_m[:, None, :], (B, S, S))
    for lp in params["layers"]:
        x2 = _torch_norm(h, lp["a1"], lp["c1"])
        q = (x2 @ lp["wq"] + lp["bq"]).reshape(B, S, heads, D_K).transpose(0, 2, 1, 3)
        k = (x2 @ lp["wk"] + lp["bk"]).reshape(B, S, heads, D_K).transpose(0, 2, 1, 3)
        v = (x2 @ lp["wv"] + lp["bv"]).reshape(B, S, heads, D_K).transpose(0, 2, 1, 3)
        s = jnp.einsum("bhqd,bhkd->bhqk", q, k) / math.sqrt(D_K)
        s = jnp.where(mask[:, None] > 0.5, MASK_FILL, s)
        p = jax.nn.softmax(s, axis=-1)
        o = jnp.einsum("bhqk,bhkd->bhqd", p, v).transpose(0, 2, 1, 3)
        o = o.reshape(B, S, heads * D_K)
        h = h + (o @ lp["wo"] + lp["bo"])
        x2 = _torch_norm(h, lp["a2"], lp["c2"])
        ff = jnp.maximum(x2 @ lp["w1"] + lp["b1"], 0.0) @ lp["w2"] + lp["b2"]
        h = h + ff
    return _torch_norm(h, params["norm_a"], params["norm_b"])


# --------------------------------- main --------------------------------------
if __name__ == "__main__":
    key = jax.random.PRNGKey(0)

    # small, lane-friendly shapes implied by the module
    B, S, D_F, HEADS, D_FF, N_STACK = 2, 8, 128, 2, 256, 2
    MAX_SLICELEN = 16
    VIEW_IDX = 1
    HDK = HEADS * D_K

    keys = jax.random.split(key, 4 + N_STACK)
    k_data, k_seg, k_na, k_nb = keys[0], keys[1], keys[2], keys[3]
    layer_keys = keys[4:]

    data = jax.random.normal(k_data, (B, S, D_F), dtype=jnp.float32)
    # 1.0 marks padded (masked-out) key positions; last two keys padded
    attn_m = jnp.zeros((B, S), jnp.float32).at[:, S - 2:].set(1.0)

    # sinusoidal positional table (exact PyTorch loop semantics)
    pe_rows = []
    for pos in range(MAX_SLICELEN):
        row = [0.0] * D_F
        for i in range(0, D_F, 2):
            row[i] = math.sin(pos / MAX_SLICELEN ** (2 * i / D_F))
            row[i + 1] = math.cos(pos / MAX_SLICELEN ** (2 * (i + 1) / D_F))
        pe_rows.append(row)
    pe = jnp.asarray(pe_rows, dtype=jnp.float32)

    seg_table = 0.1 * jax.random.normal(k_seg, (3, D_F), dtype=jnp.float32)

    def make_layer(k):
        kk = jax.random.split(k, 16)
        return dict(
            a1=jnp.ones((1, D_F), jnp.float32) + 0.05 * jax.random.normal(kk[0], (1, D_F)),
            c1=0.05 * jax.random.normal(kk[1], (1, D_F)),
            wq=0.05 * jax.random.normal(kk[2], (D_F, HDK)),
            bq=0.02 * jax.random.normal(kk[3], (1, HDK)),
            wk=0.05 * jax.random.normal(kk[4], (D_F, HDK)),
            bk=0.02 * jax.random.normal(kk[5], (1, HDK)),
            wv=0.05 * jax.random.normal(kk[6], (D_F, HDK)),
            bv=0.02 * jax.random.normal(kk[7], (1, HDK)),
            wo=0.05 * jax.random.normal(kk[8], (HDK, D_F)),
            bo=0.02 * jax.random.normal(kk[9], (1, D_F)),
            a2=jnp.ones((1, D_F), jnp.float32) + 0.05 * jax.random.normal(kk[10], (1, D_F)),
            c2=0.05 * jax.random.normal(kk[11], (1, D_F)),
            w1=0.05 * jax.random.normal(kk[12], (D_F, D_FF)),
            b1=0.02 * jax.random.normal(kk[13], (1, D_FF)),
            w2=0.05 * jax.random.normal(kk[14], (D_FF, D_F)),
            b2=0.02 * jax.random.normal(kk[15], (1, D_F)),
        )

    params = dict(
        pe=pe,
        seg_table=seg_table,
        layers=[make_layer(k) for k in layer_keys],
        norm_a=jnp.ones((1, D_F), jnp.float32) + 0.05 * jax.random.normal(k_na, (1, D_F)),
        norm_b=0.05 * jax.random.normal(k_nb, (1, D_F)),
    )

    fwd = jax.jit(lambda d, m: transformer_forward(d, m, VIEW_IDX, params, heads=HEADS))
    out = jax.block_until_ready(fwd(data, attn_m))

    ref = ref_transformer(data, attn_m, VIEW_IDX, params, heads=HEADS)
    assert out.shape == (B, S, D_F)
    max_err = float(jnp.max(jnp.abs(out - ref)))
    assert jnp.allclose(out, ref, rtol=2e-2, atol=2e-2), (
        f"mismatch vs reference, max abs err = {max_err}")

    print("KERNEL_OK")
</pallas_src>

<mosaic_0001>
module attributes {stable_mosaic.version = 11 : i64} {
  func.func @fused_transformer_kernel(%arg0: i32, %arg1: memref<16x128xf32, #tpu.memory_space<vmem>>, %arg2: memref<16x128xf32, #tpu.memory_space<vmem>>, %arg3: memref<2x8xf32, #tpu.memory_space<vmem>>, %arg4: memref<1x128xf32, #tpu.memory_space<vmem>>, %arg5: memref<1x128xf32, #tpu.memory_space<vmem>>, %arg6: memref<1x1x128xf32, #tpu.memory_space<vmem>>, %arg7: memref<1x1x128xf32, #tpu.memory_space<vmem>>, %arg8: memref<1x128x512xbf16, #tpu.memory_space<vmem>>, %arg9: memref<1x1x512xf32, #tpu.memory_space<vmem>>, %arg10: memref<1x128x512xbf16, #tpu.memory_space<vmem>>, %arg11: memref<1x1x512xf32, #tpu.memory_space<vmem>>, %arg12: memref<1x128x512xbf16, #tpu.memory_space<vmem>>, %arg13: memref<1x1x512xf32, #tpu.memory_space<vmem>>, %arg14: memref<1x512x128xbf16, #tpu.memory_space<vmem>>, %arg15: memref<1x1x128xf32, #tpu.memory_space<vmem>>, %arg16: memref<1x1x128xf32, #tpu.memory_space<vmem>>, %arg17: memref<1x1x128xf32, #tpu.memory_space<vmem>>, %arg18: memref<1x128x256xbf16, #tpu.memory_space<vmem>>, %arg19: memref<1x1x256xf32, #tpu.memory_space<vmem>>, %arg20: memref<1x256x128xbf16, #tpu.memory_space<vmem>>, %arg21: memref<1x1x128xf32, #tpu.memory_space<vmem>>, %arg22: memref<16x128xf32, #tpu.memory_space<vmem>>, %arg23: memref<16x512xf32, #tpu.memory_space<vmem>>) attributes {dimension_semantics = [#tpu.dimension_semantics<arbitrary>], iteration_bounds = array<i64: 2>, scalar_prefetch = 0 : i64, scratch_operands = 1 : i64, tpu.core_type = #tpu.core_type<tc>, window_params = [{pipeline_mode = #tpu.pipeline_mode<synchronous>, transform_indices = @transform_0, window_bounds = array<i64: 16, 128>}, {pipeline_mode = #tpu.pipeline_mode<synchronous>, transform_indices = @transform_1, window_bounds = array<i64: 16, 128>}, {pipeline_mode = #tpu.pipeline_mode<synchronous>, transform_indices = @transform_2, window_bounds = array<i64: 2, 8>}, {pipeline_mode = #tpu.pipeline_mode<synchronous>, transform_indices = @transform_3, window_bounds = array<i64: 1, 128>}, {pipeline_mode = #tpu.pipeline_mode<synchronous>, transform_indices = @transform_4, window_bounds = array<i64: 1, 128>}, {transform_indices = @transform_5, window_bounds = array<i64: 1, 1, 128>}, {transform_indices = @transform_6, window_bounds = array<i64: 1, 1, 128>}, {transform_indices = @transform_7, window_bounds = array<i64: 1, 128, 512>}, {transform_indices = @transform_8, window_bounds = array<i64: 1, 1, 512>}, {transform_indices = @transform_9, window_bounds = array<i64: 1, 128, 512>}, {transform_indices = @transform_10, window_bounds = array<i64: 1, 1, 512>}, {transform_indices = @transform_11, window_bounds = array<i64: 1, 128, 512>}, {transform_indices = @transform_12, window_bounds = array<i64: 1, 1, 512>}, {transform_indices = @transform_13, window_bounds = array<i64: 1, 512, 128>}, {transform_indices = @transform_14, window_bounds = array<i64: 1, 1, 128>}, {transform_indices = @transform_15, window_bounds = array<i64: 1, 1, 128>}, {transform_indices = @transform_16, window_bounds = array<i64: 1, 1, 128>}, {transform_indices = @transform_17, window_bounds = array<i64: 1, 128, 256>}, {transform_indices = @transform_18, window_bounds = array<i64: 1, 1, 256>}, {transform_indices = @transform_19, window_bounds = array<i64: 1, 256, 128>}, {transform_indices = @transform_20, window_bounds = array<i64: 1, 1, 128>}, {pipeline_mode = #tpu.pipeline_mode<synchronous>, transform_indices = @transform_21, window_bounds = array<i64: 16, 128>}]} {
    %c0_i32 = arith.constant 0 : i32
    %0 = arith.cmpi eq, %arg0, %c0_i32 : i32
    %1 = arith.extui %0 : i1 to i32
    %c0_i32_0 = arith.constant 0 : i32
    %2 = arith.cmpi ne, %1, %c0_i32_0 : i32
    scf.if %2 {
      %c0_101 = arith.constant 0 : index
      %c0_102 = arith.constant 0 : index
      %194 = vector.load %arg1[%c0_101, %c0_102] : memref<16x128xf32, #tpu.memory_space<vmem>>, vector<16x128xf32>
      %cst_103 = arith.constant 11.3137083 : f32
      %195 = vector.broadcast %cst_103 : f32 to vector<16x128xf32>
      %196 = arith.mulf %194, %195 : vector<16x128xf32>
      %c0_104 = arith.constant 0 : index
      %c0_105 = arith.constant 0 : index
      %197 = vector.load %arg2[%c0_104, %c0_105] : memref<16x128xf32, #tpu.memory_space<vmem>>, vector<16x128xf32>
      %198 = arith.addf %196, %197 : vector<16x128xf32>
      %c0_106 = arith.constant 0 : index
      %c0_107 = arith.constant 0 : index
      %199 = vector.load %arg22[%c0_106, %c0_107] : memref<16x128xf32, #tpu.memory_space<vmem>>, vector<16x128xf32>
      tpu.vector_store %arg22[%c0_106, %c0_107], %198 {strides = array<i32>} : memref<16x128xf32, #tpu.memory_space<vmem>>, vector<16x128xf32>,
    } else {
    }
    %c0 = arith.constant 0 : index
    %c0_1 = arith.constant 0 : index
    %3 = vector.load %arg22[%c0, %c0_1] : memref<16x128xf32, #tpu.memory_space<vmem>>, vector<16x128xf32>
    %c0_2 = arith.constant 0 : index
    %c0_3 = arith.constant 0 : index
    %c0_4 = arith.constant 0 : index
    %4 = vector.load %arg6[%c0_2, %c0_3, %c0_4] : memref<1x1x128xf32, #tpu.memory_space<vmem>>, vector<1x1x128xf32>
    %5 = vector.shape_cast %4 : vector<1x1x128xf32> to vector<1x128xf32>
    %c0_5 = arith.constant 0 : index
    %c0_6 = arith.constant 0 : index
    %c0_7 = arith.constant 0 : index
    %6 = vector.load %arg7[%c0_5, %c0_6, %c0_7] : memref<1x1x128xf32, #tpu.memory_space<vmem>>, vector<1x1x128xf32>
    %7 = vector.shape_cast %6 : vector<1x1x128xf32> to vector<1x128xf32>
    %cst = arith.constant dense<0.000000e+00> : vector<16xf32>
    %8 = vector.multi_reduction <add>, %3, %cst [1] : vector<16x128xf32> to vector<16xf32>
    %9 = vector.shape_cast %8 : vector<16xf32> to vector<16x1xf32>
    %cst_8 = arith.constant 1.280000e+02 : f32
    %10 = vector.broadcast %cst_8 : f32 to vector<16x1xf32>
    %11 = arith.divf %9, %10 : vector<16x1xf32>
    %12 = vector.broadcast %11 : vector<16x1xf32> to vector<16x128xf32>
    %13 = arith.subf %3, %12 : vector<16x128xf32>
    %14 = arith.mulf %13, %13 : vector<16x128xf32>
    %cst_9 = arith.constant dense<0.000000e+00> : vector<16xf32>
    %15 = vector.multi_reduction <add>, %14, %cst_9 [1] : vector<16x128xf32> to vector<16xf32>
    %16 = vector.shape_cast %15 : vector<16xf32> to vector<16x1xf32>
    %cst_10 = arith.constant 0.00787401571 : f32
    %17 = vector.broadcast %cst_10 : f32 to vector<16x1xf32>
    %18 = arith.mulf %16, %17 : vector<16x1xf32>
    %19 = math.sqrt %18 : vector<16x1xf32>
    %cst_11 = arith.constant 9.99999997E-7 : f32
    %20 = vector.broadcast %cst_11 : f32 to vector<16x1xf32>
    %21 = arith.addf %19, %20 : vector<16x1xf32>
    %cst_12 = arith.constant 1.000000e+00 : f32
    %22 = vector.broadcast %cst_12 : f32 to vector<16x1xf32>
    %23 = arith.divf %22, %21 : vector<16x1xf32>
    %24 = vector.broadcast %23 : vector<16x1xf32> to vector<16x128xf32>
    %25 = arith.mulf %13, %24 : vector<16x128xf32>
    %26 = vector.broadcast %5 : vector<1x128xf32> to vector<16x128xf32>
    %27 = arith.mulf %26, %25 : vector<16x128xf32>
    %28 = vector.broadcast %7 : vector<1x128xf32> to vector<16x128xf32>
    %29 = arith.addf %27, %28 : vector<16x128xf32>
    %30 = arith.truncf %29 : vector<16x128xf32> to vector<16x128xbf16>
    %c0_13 = arith.constant 0 : index
    %c0_14 = arith.constant 0 : index
    %c0_15 = arith.constant 0 : index
    %31 = vector.load %arg8[%c0_13, %c0_14, %c0_15] : memref<1x128x512xbf16, #tpu.memory_space<vmem>>, vector<1x128x512xbf16>
    %32 = vector.shape_cast %31 : vector<1x128x512xbf16> to vector<128x512xbf16>
    %cst_16 = arith.constant dense<0.000000e+00> : vector<16x512xf32>
    %33 = tpu.matmul %30, %32, %cst_16 {dimension_numbers = #tpu.dot_dimension_numbers<[1], [0], [0], [1], [0, 0, 1, 1], [], []>} : vector<16x128xbf16>, vector<128x512xbf16>, vector<16x512xf32> -> vector<16x512xf32>
    %c0_17 = arith.constant 0 : index
    %c0_18 = arith.constant 0 : index
    %c0_19 = arith.constant 0 : index
    %34 = vector.load %arg9[%c0_17, %c0_18, %c0_19] : memref<1x1x512xf32, #tpu.memory_space<vmem>>, vector<1x1x512xf32>
    %35 = vector.shape_cast %34 : vector<1x1x512xf32> to vector<1x512xf32>
    %36 = vector.broadcast %35 : vector<1x512xf32> to vector<16x512xf32>
    %37 = arith.addf %33, %36 : vector<16x512xf32>
    %c0_20 = arith.constant 0 : index
    %c0_21 = arith.constant 0 : index
    %c0_22 = arith.constant 0 : index
    %38 = vector.load %arg10[%c0_20, %c0_21, %c0_22] : memref<1x128x512xbf16, #tpu.memory_space<vmem>>, vector<1x128x512xbf16>
    %39 = vector.shape_cast %38 : vector<1x128x512xbf16> to vector<128x512xbf16>
    %cst_23 = arith.constant dense<0.000000e+00> : vector<16x512xf32>
    %40 = tpu.matmul %30, %39, %cst_23 {dimension_numbers = #tpu.dot_dimension_numbers<[1], [0], [0], [1], [0, 0, 1, 1], [], []>} : vector<16x128xbf16>, vector<128x512xbf16>, vector<16x512xf32> -> vector<16x512xf32>
    %c0_24 = arith.constant 0 : index
    %c0_25 = arith.constant 0 : index
    %c0_26 = arith.constant 0 : index
    %41 = vector.load %arg11[%c0_24, %c0_25, %c0_26] : memref<1x1x512xf32, #tpu.memory_space<vmem>>, vector<1x1x512xf32>
    %42 = vector.shape_cast %41 : vector<1x1x512xf32> to vector<1x512xf32>
    %43 = vector.broadcast %42 : vector<1x512xf32> to vector<16x512xf32>
    %44 = arith.addf %40, %43 : vector<16x512xf32>
    %c0_27 = arith.constant 0 : index
    %c0_28 = arith.constant 0 : index
    %c0_29 = arith.constant 0 : index
    %45 = vector.load %arg12[%c0_27, %c0_28, %c0_29] : memref<1x128x512xbf16, #tpu.memory_space<vmem>>, vector<1x128x512xbf16>
    %46 = vector.shape_cast %45 : vector<1x128x512xbf16> to vector<128x512xbf16>
    %cst_30 = arith.constant dense<0.000000e+00> : vector<16x512xf32>
    %47 = tpu.matmul %30, %46, %cst_30 {dimension_numbers = #tpu.dot_dimension_numbers<[1], [0], [0], [1], [0, 0, 1, 1], [], []>} : vector<16x128xbf16>, vector<128x512xbf16>, vector<16x512xf32> -> vector<16x512xf32>
    %c0_31 = arith.constant 0 : index
    %c0_32 = arith.constant 0 : index
    %c0_33 = arith.constant 0 : index
    %48 = vector.load %arg13[%c0_31, %c0_32, %c0_33] : memref<1x1x512xf32, #tpu.memory_space<vmem>>, vector<1x1x512xf32>
    %49 = vector.shape_cast %48 : vector<1x1x512xf32> to vector<1x512xf32>
    %50 = vector.broadcast %49 : vector<1x512xf32> to vector<16x512xf32>
    %51 = arith.addf %47, %50 : vector<16x512xf32>
    %c0_34 = arith.constant 0 : index
    %c0_35 = arith.constant 0 : index
    %52 = vector.load %arg3[%c0_34, %c0_35] : memref<2x8xf32, #tpu.memory_space<vmem>>, vector<2x8xf32>
    %53 = vector.extract_strided_slice %52 {offsets = [0, 0], sizes = [1, 8], strides = [1, 1]} : vector<2x8xf32> to vector<1x8xf32>
    %54 = vector.extract_strided_slice %37 {offsets = [0, 0], sizes = [8, 256], strides = [1, 1]} : vector<16x512xf32> to vector<8x256xf32>
    %55 = vector.extract_strided_slice %44 {offsets = [0, 0], sizes = [8, 256], strides = [1, 1]} : vector<16x512xf32> to vector<8x256xf32>
    %56 = vector.extract_strided_slice %51 {offsets = [0, 0], sizes = [8, 256], strides = [1, 1]} : vector<16x512xf32> to vector<8x256xf32>
    %cst_36 = arith.constant dense<0.000000e+00> : vector<8x8xf32>
    %57 = tpu.matmul %54, %55, %cst_36 {dimension_numbers = #tpu.dot_dimension_numbers<[1], [1], [0], [0], [0, 0, 1, 0], [], []>} : vector<8x256xf32>, vector<8x256xf32>, vector<8x8xf32> -> vector<8x8xf32>
    %cst_37 = arith.constant 6.250000e-02 : f32
    %58 = vector.broadcast %cst_37 : f32 to vector<8x8xf32>
    %59 = arith.mulf %57, %58 : vector<8x8xf32>
    %60 = vector.broadcast %53 : vector<1x8xf32> to vector<8x8xf32>
    %61 = arith.addf %59, %60 : vector<8x8xf32>
    %cst_38 = arith.constant dense<0xFF800000> : vector<8xf32>
    %62 = vector.multi_reduction <maximumf>, %61, %cst_38 [1] : vector<8x8xf32> to vector<8xf32>
    %63 = vector.shape_cast %62 : vector<8xf32> to vector<8x1xf32>
    %64 = vector.broadcast %63 : vector<8x1xf32> to vector<8x8xf32>
    %65 = arith.subf %61, %64 : vector<8x8xf32>
    %66 = math.exp %65 : vector<8x8xf32>
    %cst_39 = arith.constant dense<0.000000e+00> : vector<8xf32>
    %67 = vector.multi_reduction <add>, %66, %cst_39 [1] : vector<8x8xf32> to vector<8xf32>
    %68 = vector.shape_cast %67 : vector<8xf32> to vector<8x1xf32>
    %69 = tpu.reciprocal %68 {approx = true} : vector<8x1xf32> -> vector<8x1xf32>
    %70 = vector.broadcast %69 : vector<8x1xf32> to vector<8x8xf32>
    %71 = arith.mulf %66, %70 : vector<8x8xf32>
    %cst_40 = arith.constant dense<0.000000e+00> : vector<8x256xf32>
    %72 = tpu.matmul %71, %56, %cst_40 {dimension_numbers = #tpu.dot_dimension_numbers<[1], [0], [0], [1], [0, 0, 1, 1], [], []>} : vector<8x8xf32>, vector<8x256xf32>, vector<8x256xf32> -> vector<8x256xf32>
    %c0_41 = arith.constant 0 : index
    %c0_42 = arith.constant 0 : index
    %73 = vector.load %arg23[%c0_41, %c0_42] : memref<16x512xf32, #tpu.memory_space<vmem>>, vector<8x256xf32>
    tpu.vector_store %arg23[%c0_41, %c0_42], %72 {strides = array<i32>} : memref<16x512xf32, #tpu.memory_space<vmem>>, vector<8x256xf32>,
    %74 = vector.extract_strided_slice %37 {offsets = [0, 256], sizes = [8, 256], strides = [1, 1]} : vector<16x512xf32> to vector<8x256xf32>
    %75 = vector.extract_strided_slice %44 {offsets = [0, 256], sizes = [8, 256], strides = [1, 1]} : vector<16x512xf32> to vector<8x256xf32>
    %76 = vector.extract_strided_slice %51 {offsets = [0, 256], sizes = [8, 256], strides = [1, 1]} : vector<16x512xf32> to vector<8x256xf32>
    %cst_43 = arith.constant dense<0.000000e+00> : vector<8x8xf32>
    %77 = tpu.matmul %74, %75, %cst_43 {dimension_numbers = #tpu.dot_dimension_numbers<[1], [1], [0], [0], [0, 0, 1, 0], [], []>} : vector<8x256xf32>, vector<8x256xf32>, vector<8x8xf32> -> vector<8x8xf32>
    %cst_44 = arith.constant 6.250000e-02 : f32
    %78 = vector.broadcast %cst_44 : f32 to vector<8x8xf32>
    %79 = arith.mulf %77, %78 : vector<8x8xf32>
    %80 = vector.broadcast %53 : vector<1x8xf32> to vector<8x8xf32>
    %81 = arith.addf %79, %80 : vector<8x8xf32>
    %cst_45 = arith.constant dense<0xFF800000> : vector<8xf32>
    %82 = vector.multi_reduction <maximumf>, %81, %cst_45 [1] : vector<8x8xf32> to vector<8xf32>
    %83 = vector.shape_cast %82 : vector<8xf32> to vector<8x1xf32>
    %84 = vector.broadcast %83 : vector<8x1xf32> to vector<8x8xf32>
    %85 = arith.subf %81, %84 : vector<8x8xf32>
    %86 = math.exp %85 : vector<8x8xf32>
    %cst_46 = arith.constant dense<0.000000e+00> : vector<8xf32>
    %87 = vector.multi_reduction <add>, %86, %cst_46 [1] : vector<8x8xf32> to vector<8xf32>
    %88 = vector.shape_cast %87 : vector<8xf32> to vector<8x1xf32>
    %89 = tpu.reciprocal %88 {approx = true} : vector<8x1xf32> -> vector<8x1xf32>
    %90 = vector.broadcast %89 : vector<8x1xf32> to vector<8x8xf32>
    %91 = arith.mulf %86, %90 : vector<8x8xf32>
    %cst_47 = arith.constant dense<0.000000e+00> : vector<8x256xf32>
    %92 = tpu.matmul %91, %76, %cst_47 {dimension_numbers = #tpu.dot_dimension_numbers<[1], [0], [0], [1], [0, 0, 1, 1], [], []>} : vector<8x8xf32>, vector<8x256xf32>, vector<8x256xf32> -> vector<8x256xf32>
    %c0_48 = arith.constant 0 : index
    %c256 = arith.constant 256 : index
    %93 = vector.load %arg23[%c0_48, %c256] : memref<16x512xf32, #tpu.memory_space<vmem>>, vector<8x256xf32>
    tpu.vector_store %arg23[%c0_48, %c256], %92 {strides = array<i32>} : memref<16x512xf32, #tpu.memory_space<vmem>>, vector<8x256xf32>,
    %94 = vector.extract_strided_slice %52 {offsets = [1, 0], sizes = [1, 8], strides = [1, 1]} : vector<2x8xf32> to vector<1x8xf32>
    %95 = vector.extract_strided_slice %37 {offsets = [8, 0], sizes = [8, 256], strides = [1, 1]} : vector<16x512xf32> to vector<8x256xf32>
    %96 = vector.extract_strided_slice %44 {offsets = [8, 0], sizes = [8, 256], strides = [1, 1]} : vector<16x512xf32> to vector<8x256xf32>
    %97 = vector.extract_strided_slice %51 {offsets = [8, 0], sizes = [8, 256], strides = [1, 1]} : vector<16x512xf32> to vector<8x256xf32>
    %cst_49 = arith.constant dense<0.000000e+00> : vector<8x8xf32>
    %98 = tpu.matmul %95, %96, %cst_49 {dimension_numbers = #tpu.dot_dimension_numbers<[1], [1], [0], [0], [0, 0, 1, 0], [], []>} : vector<8x256xf32>, vector<8x256xf32>, vector<8x8xf32> -> vector<8x8xf32>
    %cst_50 = arith.constant 6.250000e-02 : f32
    %99 = vector.broadcast %cst_50 : f32 to vector<8x8xf32>
    %100 = arith.mulf %98, %99 : vector<8x8xf32>
    %101 = vector.broadcast %94 : vector<1x8xf32> to vector<8x8xf32>
    %102 = arith.addf %100, %101 : vector<8x8xf32>
    %cst_51 = arith.constant dense<0xFF800000> : vector<8xf32>
    %103 = vector.multi_reduction <maximumf>, %102, %cst_51 [1] : vector<8x8xf32> to vector<8xf32>
    %104 = vector.shape_cast %103 : vector<8xf32> to vector<8x1xf32>
    %105 = vector.broadcast %104 : vector<8x1xf32> to vector<8x8xf32>
    %106 = arith.subf %102, %105 : vector<8x8xf32>
    %107 = math.exp %106 : vector<8x8xf32>
    %cst_52 = arith.constant dense<0.000000e+00> : vector<8xf32>
    %108 = vector.multi_reduction <add>, %107, %cst_52 [1] : vector<8x8xf32> to vector<8xf32>
    %109 = vector.shape_cast %108 : vector<8xf32> to vector<8x1xf32>
    %110 = tpu.reciprocal %109 {approx = true} : vector<8x1xf32> -> vector<8x1xf32>
    %111 = vector.broadcast %110 : vector<8x1xf32> to vector<8x8xf32>
    %112 = arith.mulf %107, %111 : vector<8x8xf32>
    %cst_53 = arith.constant dense<0.000000e+00> : vector<8x256xf32>
    %113 = tpu.matmul %112, %97, %cst_53 {dimension_numbers = #tpu.dot_dimension_numbers<[1], [0], [0], [1], [0, 0, 1, 1], [], []>} : vector<8x8xf32>, vector<8x256xf32>, vector<8x256xf32> -> vector<8x256xf32>
    %c8 = arith.constant 8 : index
    %c0_54 = arith.constant 0 : index
    %114 = vector.load %arg23[%c8, %c0_54] : memref<16x512xf32, #tpu.memory_space<vmem>>, vector<8x256xf32>
    tpu.vector_store %arg23[%c8, %c0_54], %113 {strides = array<i32>} : memref<16x512xf32, #tpu.memory_space<vmem>>, vector<8x256xf32>,
    %115 = vector.extract_strided_slice %37 {offsets = [8, 256], sizes = [8, 256], strides = [1, 1]} : vector<16x512xf32> to vector<8x256xf32>
    %116 = vector.extract_strided_slice %44 {offsets = [8, 256], sizes = [8, 256], strides = [1, 1]} : vector<16x512xf32> to vector<8x256xf32>
    %117 = vector.extract_strided_slice %51 {offsets = [8, 256], sizes = [8, 256], strides = [1, 1]} : vector<16x512xf32> to vector<8x256xf32>
    %cst_55 = arith.constant dense<0.000000e+00> : vector<8x8xf32>
    %118 = tpu.matmul %115, %116, %cst_55 {dimension_numbers = #tpu.dot_dimension_numbers<[1], [1], [0], [0], [0, 0, 1, 0], [], []>} : vector<8x256xf32>, vector<8x256xf32>, vector<8x8xf32> -> vector<8x8xf32>
    %cst_56 = arith.constant 6.250000e-02 : f32
    %119 = vector.broadcast %cst_56 : f32 to vector<8x8xf32>
    %120 = arith.mulf %118, %119 : vector<8x8xf32>
    %121 = vector.broadcast %94 : vector<1x8xf32> to vector<8x8xf32>
    %122 = arith.addf %120, %121 : vector<8x8xf32>
    %cst_57 = arith.constant dense<0xFF800000> : vector<8xf32>
    %123 = vector.multi_reduction <maximumf>, %122, %cst_57 [1] : vector<8x8xf32> to vector<8xf32>
    %124 = vector.shape_cast %123 : vector<8xf32> to vector<8x1xf32>
    %125 = vector.broadcast %124 : vector<8x1xf32> to vector<8x8xf32>
    %126 = arith.subf %122, %125 : vector<8x8xf32>
    %127 = math.exp %126 : vector<8x8xf32>
    %cst_58 = arith.constant dense<0.000000e+00> : vector<8xf32>
    %128 = vector.multi_reduction <add>, %127, %cst_58 [1] : vector<8x8xf32> to vector<8xf32>
    %129 = vector.shape_cast %128 : vector<8xf32> to vector<8x1xf32>
    %130 = tpu.reciprocal %129 {approx = true} : vector<8x1xf32> -> vector<8x1xf32>
    %131 = vector.broadcast %130 : vector<8x1xf32> to vector<8x8xf32>
    %132 = arith.mulf %127, %131 : vector<8x8xf32>
    %cst_59 = arith.constant dense<0.000000e+00> : vector<8x256xf32>
    %133 = tpu.matmul %132, %117, %cst_59 {dimension_numbers = #tpu.dot_dimension_numbers<[1], [0], [0], [1], [0, 0, 1, 1], [], []>} : vector<8x8xf32>, vector<8x256xf32>, vector<8x256xf32> -> vector<8x256xf32>
    %c8_60 = arith.constant 8 : index
    %c256_61 = arith.constant 256 : index
    %134 = vector.load %arg23[%c8_60, %c256_61] : memref<16x512xf32, #tpu.memory_space<vmem>>, vector<8x256xf32>
    tpu.vector_store %arg23[%c8_60, %c256_61], %133 {strides = array<i32>} : memref<16x512xf32, #tpu.memory_space<vmem>>, vector<8x256xf32>,
    %c0_62 = arith.constant 0 : index
    %c0_63 = arith.constant 0 : index
    %135 = vector.load %arg23[%c0_62, %c0_63] : memref<16x512xf32, #tpu.memory_space<vmem>>, vector<16x512xf32>
    %136 = arith.truncf %135 : vector<16x512xf32> to vector<16x512xbf16>
    %c0_64 = arith.constant 0 : index
    %c0_65 = arith.constant 0 : index
    %c0_66 = arith.constant 0 : index
    %137 = vector.load %arg14[%c0_64, %c0_65, %c0_66] : memref<1x512x128xbf16, #tpu.memory_space<vmem>>, vector<1x512x128xbf16>
    %138 = vector.shape_cast %137 : vector<1x512x128xbf16> to vector<512x128xbf16>
    %cst_67 = arith.constant dense<0.000000e+00> : vector<16x128xf32>
    %139 = tpu.matmul %136, %138, %cst_67 {dimension_numbers = #tpu.dot_dimension_numbers<[1], [0], [0], [1], [0, 0, 1, 1], [], []>} : vector<16x512xbf16>, vector<512x128xbf16>, vector<16x128xf32> -> vector<16x128xf32>
    %c0_68 = arith.constant 0 : index
    %c0_69 = arith.constant 0 : index
    %c0_70 = arith.constant 0 : index
    %140 = vector.load %arg15[%c0_68, %c0_69, %c0_70] : memref<1x1x128xf32, #tpu.memory_space<vmem>>, vector<1x1x128xf32>
    %141 = vector.shape_cast %140 : vector<1x1x128xf32> to vector<1x128xf32>
    %142 = vector.broadcast %141 : vector<1x128xf32> to vector<16x128xf32>
    %143 = arith.addf %139, %142 : vector<16x128xf32>
    %144 = arith.addf %3, %143 : vector<16x128xf32>
    %c0_71 = arith.constant 0 : index
    %c0_72 = arith.constant 0 : index
    %c0_73 = arith.constant 0 : index
    %145 = vector.load %arg16[%c0_71, %c0_72, %c0_73] : memref<1x1x128xf32, #tpu.memory_space<vmem>>, vector<1x1x128xf32>
    %146 = vector.shape_cast %145 : vector<1x1x128xf32> to vector<1x128xf32>
    %c0_74 = arith.constant 0 : index
    %c0_75 = arith.constant 0 : index
    %c0_76 = arith.constant 0 : index
    %147 = vector.load %arg17[%c0_74, %c0_75, %c0_76] : memref<1x1x128xf32, #tpu.memory_space<vmem>>, vector<1x1x128xf32>
    %148 = vector.shape_cast %147 : vector<1x1x128xf32> to vector<1x128xf32>
    %cst_77 = arith.constant dense<0.000000e+00> : vector<16xf32>
    %149 = vector.multi_reduction <add>, %144, %cst_77 [1] : vector<16x128xf32> to vector<16xf32>
    %150 = vector.shape_cast %149 : vector<16xf32> to vector<16x1xf32>
    %cst_78 = arith.constant 1.280000e+02 : f32
    %151 = vector.broadcast %cst_78 : f32 to vector<16x1xf32>
    %152 = arith.divf %150, %151 : vector<16x1xf32>
    %153 = vector.broadcast %152 : vector<16x1xf32> to vector<16x128xf32>
    %154 = arith.subf %144, %153 : vector<16x128xf32>
    %155 = arith.mulf %154, %154 : vector<16x128xf32>
    %cst_79 = arith.constant dense<0.000000e+00> : vector<16xf32>
    %156 = vector.multi_reduction <add>, %155, %cst_79 [1] : vector<16x128xf32> to vector<16xf32>
    %157 = vector.shape_cast %156 : vector<16xf32> to vector<16x1xf32>
    %cst_80 = arith.constant 0.00787401571 : f32
    %158 = vector.broadcast %cst_80 : f32 to vector<16x1xf32>
    %159 = arith.mulf %157, %158 : vector<16x1xf32>
    %160 = math.sqrt %159 : vector<16x1xf32>
    %cst_81 = arith.constant 9.99999997E-7 : f32
    %161 = vector.broadcast %cst_81 : f32 to vector<16x1xf32>
    %162 = arith.addf %160, %161 : vector<16x1xf32>
    %cst_82 = arith.constant 1.000000e+00 : f32
    %163 = vector.broadcast %cst_82 : f32 to vector<16x1xf32>
    %164 = arith.divf %163, %162 : vector<16x1xf32>
    %165 = vector.broadcast %164 : vector<16x1xf32> to vector<16x128xf32>
    %166 = arith.mulf %154, %165 : vector<16x128xf32>
    %167 = vector.broadcast %146 : vector<1x128xf32> to vector<16x128xf32>
    %168 = arith.mulf %167, %166 : vector<16x128xf32>
    %169 = vector.broadcast %148 : vector<1x128xf32> to vector<16x128xf32>
    %170 = arith.addf %168, %169 : vector<16x128xf32>
    %171 = arith.truncf %170 : vector<16x128xf32> to vector<16x128xbf16>
    %c0_83 = arith.constant 0 : index
    %c0_84 = arith.constant 0 : index
    %c0_85 = arith.constant 0 : index
    %172 = vector.load %arg18[%c0_83, %c0_84, %c0_85] : memref<1x128x256xbf16, #tpu.memory_space<vmem>>, vector<1x128x256xbf16>
    %173 = vector.shape_cast %172 : vector<1x128x256xbf16> to vector<128x256xbf16>
    %cst_86 = arith.constant dense<0.000000e+00> : vector<16x256xf32>
    %174 = tpu.matmul %171, %173, %cst_86 {dimension_numbers = #tpu.dot_dimension_numbers<[1], [0], [0], [1], [0, 0, 1, 1], [], []>} : vector<16x128xbf16>, vector<128x256xbf16>, vector<16x256xf32> -> vector<16x256xf32>
    %c0_87 = arith.constant 0 : index
    %c0_88 = arith.constant 0 : index
    %c0_89 = arith.constant 0 : index
    %175 = vector.load %arg19[%c0_87, %c0_88, %c0_89] : memref<1x1x256xf32, #tpu.memory_space<vmem>>, vector<1x1x256xf32>
    %176 = vector.shape_cast %175 : vector<1x1x256xf32> to vector<1x256xf32>
    %177 = vector.broadcast %176 : vector<1x256xf32> to vector<16x256xf32>
    %178 = arith.addf %174, %177 : vector<16x256xf32>
    %cst_90 = arith.constant 0.000000e+00 : f32
    %179 = vector.broadcast %cst_90 : f32 to vector<16x256xf32>
    %180 = arith.maximumf %178, %179 : vector<16x256xf32>
    %181 = arith.truncf %180 : vector<16x256xf32> to vector<16x256xbf16>
    %c0_91 = arith.constant 0 : index
    %c0_92 = arith.constant 0 : index
    %c0_93 = arith.constant 0 : index
    %182 = vector.load %arg20[%c0_91, %c0_92, %c0_93] : memref<1x256x128xbf16, #tpu.memory_space<vmem>>, vector<1x256x128xbf16>
    %183 = vector.shape_cast %182 : vector<1x256x128xbf16> to vector<256x128xbf16>
    %cst_94 = arith.constant dense<0.000000e+00> : vector<16x128xf32>
    %184 = tpu.matmul %181, %183, %cst_94 {dimension_numbers = #tpu.dot_dimension_numbers<[1], [0], [0], [1], [0, 0, 1, 1], [], []>} : vector<16x256xbf16>, vector<256x128xbf16>, vector<16x128xf32> -> vector<16x128xf32>
    %c0_95 = arith.constant 0 : index
    %c0_96 = arith.constant 0 : index
    %c0_97 = arith.constant 0 : index
    %185 = vector.load %arg21[%c0_95, %c0_96, %c0_97] : memref<1x1x128xf32, #tpu.memory_space<vmem>>, vector<1x1x128xf32>
    %186 = vector.shape_cast %185 : vector<1x1x128xf32> to vector<1x128xf32>
    %187 = vector.broadcast %186 : vector<1x128xf32> to vector<16x128xf32>
    %188 = arith.addf %184, %187 : vector<16x128xf32>
    %189 = arith.addf %144, %188 : vector<16x128xf32>
    %c0_98 = arith.constant 0 : index
    %c0_99 = arith.constant 0 : index
    %190 = vector.load %arg22[%c0_98, %c0_99] : memref<16x128xf32, #tpu.memory_space<vmem>>, vector<16x128xf32>
    tpu.vector_store %arg22[%c0_98, %c0_99], %189 {strides = array<i32>} : memref<16x128xf32, #tpu.memory_space<vmem>>, vector<16x128xf32>,
    %c1_i32 = arith.constant 1 : i32
    %191 = arith.cmpi eq, %arg0, %c1_i32 : i32
    %192 = arith.extui %191 : i1 to i32
    %c0_i32_100 = arith.constant 0 : i32
    %193 = arith.cmpi ne, %192, %c0_i32_100 : i32
    scf.if %193 {
      %c0_101 = arith.constant 0 : index
      %c0_102 = arith.constant 0 : index
      %194 = vector.load %arg22[%c0_101, %c0_102] : memref<16x128xf32, #tpu.memory_space<vmem>>, vector<16x128xf32>
      %c0_103 = arith.constant 0 : index
      %c0_104 = arith.constant 0 : index
      %195 = vector.load %arg4[%c0_103, %c0_104] : memref<1x128xf32, #tpu.memory_space<vmem>>, vector<1x128xf32>
      %c0_105 = arith.constant 0 : index
      %c0_106 = arith.constant 0 : index
      %196 = vector.load %arg5[%c0_105, %c0_106] : memref<1x128xf32, #tpu.memory_space<vmem>>, vector<1x128xf32>
      %cst_107 = arith.constant dense<0.000000e+00> : vector<16xf32>
      %197 = vector.multi_reduction <add>, %194, %cst_107 [1] : vector<16x128xf32> to vector<16xf32>
      %198 = vector.shape_cast %197 : vector<16xf32> to vector<16x1xf32>
      %cst_108 = arith.constant 1.280000e+02 : f32
      %199 = vector.broadcast %cst_108 : f32 to vector<16x1xf32>
      %200 = arith.divf %198, %199 : vector<16x1xf32>
      %201 = vector.broadcast %200 : vector<16x1xf32> to vector<16x128xf32>
      %202 = arith.subf %194, %201 : vector<16x128xf32>
      %203 = arith.mulf %202, %202 : vector<16x128xf32>
      %cst_109 = arith.constant dense<0.000000e+00> : vector<16xf32>
      %204 = vector.multi_reduction <add>, %203, %cst_109 [1] : vector<16x128xf32> to vector<16xf32>
      %205 = vector.shape_cast %204 : vector<16xf32> to vector<16x1xf32>
      %cst_110 = arith.constant 0.00787401571 : f32
      %206 = vector.broadcast %cst_110 : f32 to vector<16x1xf32>
      %207 = arith.mulf %205, %206 : vector<16x1xf32>
      %208 = math.sqrt %207 : vector<16x1xf32>
      %cst_111 = arith.constant 9.99999997E-7 : f32
      %209 = vector.broadcast %cst_111 : f32 to vector<16x1xf32>
      %210 = arith.addf %208, %209 : vector<16x1xf32>
      %cst_112 = arith.constant 1.000000e+00 : f32
      %211 = vector.broadcast %cst_112 : f32 to vector<16x1xf32>
      %212 = arith.divf %211, %210 : vector<16x1xf32>
      %213 = vector.broadcast %212 : vector<16x1xf32> to vector<16x128xf32>
      %214 = arith.mulf %202, %213 : vector<16x128xf32>
      %215 = vector.broadcast %195 : vector<1x128xf32> to vector<16x128xf32>
      %216 = arith.mulf %215, %214 : vector<16x128xf32>
      %217 = vector.broadcast %196 : vector<1x128xf32> to vector<16x128xf32>
      %218 = arith.addf %216, %217 : vector<16x128xf32>
      %c0_113 = arith.constant 0 : index
      %c0_114 = arith.constant 0 : index
      %219 = vector.load %arg22[%c0_113, %c0_114] : memref<16x128xf32, #tpu.memory_space<vmem>>, vector<16x128xf32>
      tpu.vector_store %arg22[%c0_113, %c0_114], %218 {strides = array<i32>} : memref<16x128xf32, #tpu.memory_space<vmem>>, vector<16x128xf32>,
    } else {
    }
    return
  }
  func.func @transform_0(%arg0: i32) -> (i32, i32) {
    %c0_i32 = arith.constant 0 : i32
    %c0_i32_0 = arith.constant 0 : i32
    %c0_i32_1 = arith.constant 0 : i32
    return %c0_i32, %c0_i32_0 : i32, i32
  }
  func.func @transform_1(%arg0: i32) -> (i32, i32) {
    %c0_i32 = arith.constant 0 : i32
    %c0_i32_0 = arith.constant 0 : i32
    %c0_i32_1 = arith.constant 0 : i32
    return %c0_i32, %c0_i32_0 : i32, i32
  }
  func.func @transform_2(%arg0: i32) -> (i32, i32) {
    %c0_i32 = arith.constant 0 : i32
    %c0_i32_0 = arith.constant 0 : i32
    %c0_i32_1 = arith.constant 0 : i32
    return %c0_i32, %c0_i32_0 : i32, i32
  }
  func.func @transform_3(%arg0: i32) -> (i32, i32) {
    %c0_i32 = arith.constant 0 : i32
    %c0_i32_0 = arith.constant 0 : i32
    %c0_i32_1 = arith.constant 0 : i32
    return %c0_i32, %c0_i32_0 : i32, i32
  }
  func.func @transform_4(%arg0: i32) -> (i32, i32) {
    %c0_i32 = arith.constant 0 : i32
    %c0_i32_0 = arith.constant 0 : i32
    %c0_i32_1 = arith.constant 0 : i32
    return %c0_i32, %c0_i32_0 : i32, i32
  }
  func.func @transform_5(%arg0: i32) -> (i32, i32, i32) {
    %c0_i32 = arith.constant 0 : i32
    %c0_i32_0 = arith.constant 0 : i32
    %c0_i32_1 = arith.constant 0 : i32
    return %arg0, %c0_i32, %c0_i32_0 : i32, i32, i32
  }
  func.func @transform_6(%arg0: i32) -> (i32, i32, i32) {
    %c0_i32 = arith.constant 0 : i32
    %c0_i32_0 = arith.constant 0 : i32
    %c0_i32_1 = arith.constant 0 : i32
    return %arg0, %c0_i32, %c0_i32_0 : i32, i32, i32
  }
  func.func @transform_7(%arg0: i32) -> (i32, i32, i32) {
    %c0_i32 = arith.constant 0 : i32
    %c0_i32_0 = arith.constant 0 : i32
    %c0_i32_1 = arith.constant 0 : i32
    return %arg0, %c0_i32, %c0_i32_0 : i32, i32, i32
  }
  func.func @transform_8(%arg0: i32) -> (i32, i32, i32) {
    %c0_i32 = arith.constant 0 : i32
    %c0_i32_0 = arith.constant 0 : i32
    %c0_i32_1 = arith.constant 0 : i32
    return %arg0, %c0_i32, %c0_i32_0 : i32, i32, i32
  }
  func.func @transform_9(%arg0: i32) -> (i32, i32, i32) {
    %c0_i32 = arith.constant 0 : i32
    %c0_i32_0 = arith.constant 0 : i32
    %c0_i32_1 = arith.constant 0 : i32
    return %arg0, %c0_i32, %c0_i32_0 : i32, i32, i32
  }
  func.func @transform_10(%arg0: i32) -> (i32, i32, i32) {
    %c0_i32 = arith.constant 0 : i32
    %c0_i32_0 = arith.constant 0 : i32
    %c0_i32_1 = arith.constant 0 : i32
    return %arg0, %c0_i32, %c0_i32_0 : i32, i32, i32
  }
  func.func @transform_11(%arg0: i32) -> (i32, i32, i32) {
    %c0_i32 = arith.constant 0 : i32
    %c0_i32_0 = arith.constant 0 : i32
    %c0_i32_1 = arith.constant 0 : i32
    return %arg0, %c0_i32, %c0_i32_0 : i32, i32, i32
  }
  func.func @transform_12(%arg0: i32) -> (i32, i32, i32) {
    %c0_i32 = arith.constant 0 : i32
    %c0_i32_0 = arith.constant 0 : i32
    %c0_i32_1 = arith.constant 0 : i32
    return %arg0, %c0_i32, %c0_i32_0 : i32, i32, i32
  }
  func.func @transform_13(%arg0: i32) -> (i32, i32, i32) {
    %c0_i32 = arith.constant 0 : i32
    %c0_i32_0 = arith.constant 0 : i32
    %c0_i32_1 = arith.constant 0 : i32
    return %arg0, %c0_i32, %c0_i32_0 : i32, i32, i32
  }
  func.func @transform_14(%arg0: i32) -> (i32, i32, i32) {
    %c0_i32 = arith.constant 0 : i32
    %c0_i32_0 = arith.constant 0 : i32
    %c0_i32_1 = arith.constant 0 : i32
    return %arg0, %c0_i32, %c0_i32_0 : i32, i32, i32
  }
  func.func @transform_15(%arg0: i32) -> (i32, i32, i32) {
    %c0_i32 = arith.constant 0 : i32
    %c0_i32_0 = arith.constant 0 : i32
    %c0_i32_1 = arith.constant 0 : i32
    return %arg0, %c0_i32, %c0_i32_0 : i32, i32, i32
  }
  func.func @transform_16(%arg0: i32) -> (i32, i32, i32) {
    %c0_i32 = arith.constant 0 : i32
    %c0_i32_0 = arith.constant 0 : i32
    %c0_i32_1 = arith.constant 0 : i32
    return %arg0, %c0_i32, %c0_i32_0 : i32, i32, i32
  }
  func.func @transform_17(%arg0: i32) -> (i32, i32, i32) {
    %c0_i32 = arith.constant 0 : i32
    %c0_i32_0 = arith.constant 0 : i32
    %c0_i32_1 = arith.constant 0 : i32
    return %arg0, %c0_i32, %c0_i32_0 : i32, i32, i32
  }
  func.func @transform_18(%arg0: i32) -> (i32, i32, i32) {
    %c0_i32 = arith.constant 0 : i32
    %c0_i32_0 = arith.constant 0 : i32
    %c0_i32_1 = arith.constant 0 : i32
    return %arg0, %c0_i32, %c0_i32_0 : i32, i32, i32
  }
  func.func @transform_19(%arg0: i32) -> (i32, i32, i32) {
    %c0_i32 = arith.constant 0 : i32
    %c0_i32_0 = arith.constant 0 : i32
    %c0_i32_1 = arith.constant 0 : i32
    return %arg0, %c0_i32, %c0_i32_0 : i32, i32, i32
  }
  func.func @transform_20(%arg0: i32) -> (i32, i32, i32) {
    %c0_i32 = arith.constant 0 : i32
    %c0_i32_0 = arith.constant 0 : i32
    %c0_i32_1 = arith.constant 0 : i32
    return %arg0, %c0_i32, %c0_i32_0 : i32, i32, i32
  }
  func.func @transform_21(%arg0: i32) -> (i32, i32) {
    %c0_i32 = arith.constant 0 : i32
    %c0_i32_0 = arith.constant 0 : i32
    %c0_i32_1 = arith.constant 0 : i32
    return %c0_i32, %c0_i32_0 : i32, i32
  }
}

</mosaic_0001>

<llo_original>
// kernel: _lambda_.1
$region0: #{_lambda_.1}
  #allocation0 [shape = 'u32[]', space=smem, size = 0x4, offset = 0x4, fixed_abs, tag = 'smem constant byte address 0x4 - core index']
  #allocation1 [shape = 'u32[72,128]{1,0:T(1,128)}', space=vmem, size = 0x9000, scoped, tag = 'internal scratch']
  #allocation2 [shape = 'f32[16,512]{1,0:T(8,128)}', space=vmem, size = 0x8000, scoped, tag = 'scratch operand']
  %s0 = inlined_call_operand.vmem [shape: f32[16,128], index: 0, kind: input, shape index: {}]
  %s1 = inlined_call_operand.vmem [shape: f32[16,128], index: 1, kind: input, shape index: {}]
  %s2 = inlined_call_operand.vmem [shape: f32[2,8], index: 2, kind: input, shape index: {}]
  %s3 = inlined_call_operand.hbm [shape: f32[1,128], index: 3, kind: input, shape index: {}]
  %s4 = inlined_call_operand.vmem [shape: f32[1,128], index: 4, kind: input, shape index: {}]
  %s5 = inlined_call_operand.vmem [shape: f32[2,1,128], index: 5, kind: input, shape index: {}]
  %s6 = inlined_call_operand.hbm [shape: f32[2,1,128], index: 6, kind: input, shape index: {}]
  %s7 = inlined_call_operand.hbm [shape: bf16[2,128,512], index: 7, kind: input, shape index: {}]
  %s8 = inlined_call_operand.vmem [shape: f32[2,1,512], index: 8, kind: input, shape index: {}]
  %s9 = inlined_call_operand.hbm [shape: bf16[2,128,512], index: 9, kind: input, shape index: {}]
  %s10 = inlined_call_operand.vmem [shape: f32[2,1,512], index: 10, kind: input, shape index: {}]
  %s11 = inlined_call_operand.hbm [shape: bf16[2,128,512], index: 11, kind: input, shape index: {}]
  %s12 = inlined_call_operand.hbm [shape: f32[2,1,512], index: 12, kind: input, shape index: {}]
  %s13 = inlined_call_operand.hbm [shape: bf16[2,512,128], index: 13, kind: input, shape index: {}]
  %s14 = inlined_call_operand.hbm [shape: f32[2,1,128], index: 14, kind: input, shape index: {}]
  %s15 = inlined_call_operand.hbm [shape: f32[2,1,128], index: 15, kind: input, shape index: {}]
  %s16 = inlined_call_operand.hbm [shape: f32[2,1,128], index: 16, kind: input, shape index: {}]
  %s17 = inlined_call_operand.hbm [shape: bf16[2,128,256], index: 17, kind: input, shape index: {}]
  %s18 = inlined_call_operand.hbm [shape: f32[2,1,256], index: 18, kind: input, shape index: {}]
  %s19 = inlined_call_operand.hbm [shape: bf16[2,256,128], index: 19, kind: input, shape index: {}]
  %s20 = inlined_call_operand.hbm [shape: f32[2,1,128], index: 20, kind: input, shape index: {}]
  %s21 = inlined_call_operand.hbm [shape: f32[16,128], index: 21, kind: output, shape index: {}]
  %s22 = sld [smem:[#allocation0]]
  $region181: #{_lambda_.1} parent=0
    _
  %s24 = ssub.s32 1, %s22
  %s25 = scalar_select 0, %s24, %s22
  $region1: #{_lambda_.1} parent=0
    #allocation3 [shape = 'u8[512]{0}', space=vmem, size = 0x400, scoped, tag = 'input window, operand 3, single buffered']
    #allocation4 [shape = 's32[2]{0}', space=sflag, size = 0x8, scoped, tag = 'scoped memory for _lambda_.1']
    #allocation5 [shape = 's32[2]{0}', space=sflag, size = 0x8, scoped, tag = 'scoped memory for _lambda_.1']
    #allocation6 [shape = 'u8[1024]{0}', space=vmem, size = 0x400, scoped, tag = 'input window, operand 6']
    #allocation7 [shape = 's32[2]{0}', space=sflag, size = 0x8, scoped, tag = 'scoped memory for _lambda_.1']
    #allocation8 [shape = 'u8[262144]{0}', space=vmem, size = 0x40000, scoped, tag = 'input window, operand 7']
    #allocation9 [shape = 'u8[262144]{0}', space=vmem, size = 0x40000, scoped, tag = 'input window, operand 9']
    #allocation10 [shape = 's32[2]{0}', space=sflag, size = 0x8, scoped, tag = 'scoped memory for _lambda_.1']
    #allocation11 [shape = 'u8[262144]{0}', space=vmem, size = 0x40000, scoped, tag = 'input window, operand 11']
    #allocation12 [shape = 'u8[4096]{0}', space=vmem, size = 0x1000, scoped, tag = 'input window, operand 12']
    #allocation13 [shape = 's32[2]{0}', space=sflag, size = 0x8, scoped, tag = 'scoped memory for _lambda_.1']
    #allocation14 [shape = 'u8[262144]{0}', space=vmem, size = 0x40000, scoped, tag = 'input window, operand 13']
    #allocation15 [shape = 'u8[1024]{0}', space=vmem, size = 0x400, scoped, tag = 'input window, operand 14']
    #allocation16 [shape = 's32[2]{0}', space=sflag, size = 0x8, scoped, tag = 'scoped memory for _lambda_.1']
    #allocation17 [shape = 'u8[1024]{0}', space=vmem, size = 0x400, scoped, tag = 'input window, operand 15']
    #allocation18 [shape = 'u8[1024]{0}', space=vmem, size = 0x400, scoped, tag = 'input window, operand 16']
    #allocation19 [shape = 's32[2]{0}', space=sflag, size = 0x8, scoped, tag = 'scoped memory for _lambda_.1']
    #allocation20 [shape = 'u8[131072]{0}', space=vmem, size = 0x20000, scoped, tag = 'input window, operand 17']
    #allocation21 [shape = 'u8[2048]{0}', space=vmem, size = 0x800, scoped, tag = 'input window, operand 18']
    #allocation22 [shape = 's32[2]{0}', space=sflag, size = 0x8, scoped, tag = 'scoped memory for _lambda_.1']
    #allocation23 [shape = 'u8[131072]{0}', space=vmem, size = 0x20000, scoped, tag = 'input window, operand 19']
    #allocation24 [shape = 'u8[1024]{0}', space=vmem, size = 0x400, scoped, tag = 'input window, operand 20']
    #allocation25 [shape = 's32[2]{0}', space=sflag, size = 0x8, scoped, tag = 'scoped memory for _lambda_.1']
    #allocation26 [shape = 'u8[8192]{0}', space=vmem, size = 0x2000, scoped, tag = 'output window, operand 0, single buffered']
    %26 = vsyncpa [#allocation4], 0
    %27 = vsyncpa [#allocation7], 0
    %s28 = scalar_lea.sflag [#allocation7], 1
    %29 = vsyncpa %s28, 0
    %30 = vsyncpa [#allocation10], 0
    %s31 = scalar_lea.sflag [#allocation10], 1
    %32 = vsyncpa %s31, 0
    %33 = vsyncpa [#allocation13], 0
    %s34 = scalar_lea.sflag [#allocation13], 1
    %35 = vsyncpa %s34, 0
    %36 = vsyncpa [#allocation16], 0
    %s37 = scalar_lea.sflag [#allocation16], 1
    %38 = vsyncpa %s37, 0
    %39 = vsyncpa [#allocation19], 0
    %s40 = scalar_lea.sflag [#allocation19], 1
    %41 = vsyncpa %s40, 0
    %42 = vsyncpa [#allocation22], 0
    %s43 = scalar_lea.sflag [#allocation22], 1
    %44 = vsyncpa %s43, 0
    %45 = vsyncpa [#allocation25], 0
    %s46 = scalar_lea.sflag [#allocation25], 1
    %47 = vsyncpa %s46, 0
    %48 = vsyncpa [#allocation5], 0
    loop: start=0, step=1, limit=4
    $region2: #{_lambda_.1} parent=1 // loop_pre_header
      _
    $region3: #{_lambda_.1} parent=1 // loop_header
      %s50 = sphi 0, %s54
      %p51 = scmp.ge.s32.totalorder %s50, 4
      %s58 = sphi 0, %s58
      %s60 = sphi 0, %s58
      %s61 = sphi 0, %s60
      %s75 = sphi 0, %s61
      %s79 = sphi 0, %s79
      %s81 = sphi 0, %s79
      %s82 = sphi 0, %s81
      %s96 = sphi 0, %s82
      %s100 = sphi 0, %s100
      %s102 = sphi 0, %s100
      %s103 = sphi 0, %s102
      %s117 = sphi 0, %s103
      %s121 = sphi 0, %s121
      %s123 = sphi 0, %s121
      %s124 = sphi 0, %s123
      %s138 = sphi 0, %s124
      %s142 = sphi 0, %s142
      %s144 = sphi 0, %s142
      %s145 = sphi 0, %s144
      %s159 = sphi 0, %s145
      %s165 = sphi 0, %s167
      %s168 = sphi 0, %s165
      %s169 = sphi 0, %s168
      %s185 = sphi 0, %s169
      %s191 = sphi 0, %s193
      %s194 = sphi 0, %s191
      %s195 = sphi 0, %s194
      %s211 = sphi 0, %s195
      %s217 = sphi 0, %s219
      %s220 = sphi 0, %s217
      %s221 = sphi 0, %s220
      %s237 = sphi 0, %s221
      %s243 = sphi 0, %s245
      %s246 = sphi 0, %s243
      %s247 = sphi 0, %s246
      %s263 = sphi 0, %s247
      %s269 = sphi 0, %s271
      %s272 = sphi 0, %s269
      %s273 = sphi 0, %s272
      %s289 = sphi 0, %s273
      %s295 = sphi 0, %s297
      %s298 = sphi 0, %s295
      %s299 = sphi 0, %s298
      %s315 = sphi 0, %s299
      %s321 = sphi 0, %s323
      %s324 = sphi 0, %s321
      %s325 = sphi 0, %s324
      %s341 = sphi 0, %s325
      %s347 = sphi 0, %s349
      %s350 = sphi 0, %s347
      %s351 = sphi 0, %s350
      %s367 = sphi 0, %s351
      %s373 = sphi 0, %s375
      %s376 = sphi 0, %s373
      %s377 = sphi 0, %s376
      %s393 = sphi 0, %s377
      %s399 = sphi 0, %s401
      %s402 = sphi 0, %s399
      %s403 = sphi 0, %s402
      %s419 = sphi 0, %s403
      %s425 = sphi 0, %s427
      %s428 = sphi 0, %s425
      %s429 = sphi 0, %s428
      %s445 = sphi 0, %s429
      %s451 = sphi 0, %s453
      %s454 = sphi 0, %s451
      %s455 = sphi 0, %s454
      %s471 = sphi 0, %s455
      %s477 = sphi 0, %s479
      %s480 = sphi 0, %s477
      %s481 = sphi 0, %s480
      %s497 = sphi 0, %s481
      %s503 = sphi 0, %s505
      %s506 = sphi 0, %s503
      %s507 = sphi 0, %s506
      %s523 = sphi 0, %s507
      %s529 = sphi 0, %s531
      %s532 = sphi 0, %s529
      %s533 = sphi 0, %s532
      %s549 = sphi 0, %s533
      %s555 = sphi 0, %s557
      %s558 = sphi 0, %s555
      %s559 = sphi 0, %s558
      %s575 = sphi 0, %s559
      %s579 = sphi 0, %s579
      %s581 = sphi 0, %s579
      %s582 = sphi 0, %s581
      %s596 = sphi 0, %s582
    $region4: #{_lambda_.1} parent=1 // loop_header_branch
      %53 = sbr.rel (%p51) target = $region8
    $region5: #{_lambda_.1} parent=1 // loop_body
      %s55 = ssub.s32 %s50, 1
      %s56 = ssub.s32 %s50, 2
      %s57 = sadd.s32 %s50, 1
      %s59 = sadd.s32 %s58, 1
      %p62 = scmp.eq.s32.totalorder %s50, 1
      %p63 = scmp.ne.s32.totalorder %s58, %s60
      %p64 = scmp.eq.s32.totalorder %s50, 0
      %p65 = por %p63, %p64
      %p66 = scmp.ne.s32.totalorder %s58, %s60
      %p67 = scmp.eq.s32.totalorder %s55, 1
      %p68 = por %p66, %p67
      %p69 = scmp.ne.s32.totalorder %s60, %s61
      %p70 = scmp.eq.s32.totalorder %s55, 0
      %p71 = por %p69, %p70
      %p72 = scmp.ne.s32.totalorder %s60, %s61
      %p73 = scmp.eq.s32.totalorder %s56, 1
      %p74 = por %p72, %p73
      %p76 = scmp.ne.s32.totalorder %s61, %s75
      %p77 = scmp.eq.s32.totalorder %s56, 0
      %p78 = por %p76, %p77
      %s80 = sadd.s32 %s79, 1
      %p83 = scmp.eq.s32.totalorder %s50, 1
      %p84 = scmp.ne.s32.totalorder %s79, %s81
      %p85 = scmp.eq.s32.totalorder %s50, 0
      %p86 = por %p84, %p85
      %p87 = scmp.ne.s32.totalorder %s79, %s81
      %p88 = scmp.eq.s32.totalorder %s55, 1
      %p89 = por %p87, %p88
      %p90 = scmp.ne.s32.totalorder %s81, %s82
      %p91 = scmp.eq.s32.totalorder %s55, 0
      %p92 = por %p90, %p91
      %p93 = scmp.ne.s32.totalorder %s81, %s82
      %p94 = scmp.eq.s32.totalorder %s56, 1
      %p95 = por %p93, %p94
      %p97 = scmp.ne.s32.totalorder %s82, %s96
      %p98 = scmp.eq.s32.totalorder %s56, 0
      %p99 = por %p97, %p98
      %s101 = sadd.s32 %s100, 1
      %p104 = scmp.eq.s32.totalorder %s50, 1
      %p105 = scmp.ne.s32.totalorder %s100, %s102
      %p106 = scmp.eq.s32.totalorder %s50, 0
      %p107 = por %p105, %p106
      %p108 = scmp.ne.s32.totalorder %s100, %s102
      %p109 = scmp.eq.s32.totalorder %s55, 1
      %p110 = por %p108, %p109
      %p111 = scmp.ne.s32.totalorder %s102, %s103
      %p112 = scmp.eq.s32.totalorder %s55, 0
      %p113 = por %p111, %p112
      %p114 = scmp.ne.s32.totalorder %s102, %s103
      %p115 = scmp.eq.s32.totalorder %s56, 1
      %p116 = por %p114, %p115
      %p118 = scmp.ne.s32.totalorder %s103, %s117
      %p119 = scmp.eq.s32.totalorder %s56, 0
      %p120 = por %p118, %p119
      %s122 = sadd.s32 %s121, 1
      %p125 = scmp.eq.s32.totalorder %s50, 1
      %p126 = scmp.ne.s32.totalorder %s121, %s123
      %p127 = scmp.eq.s32.totalorder %s50, 0
      %p128 = por %p126, %p127
      %p129 = scmp.ne.s32.totalorder %s121, %s123
      %p130 = scmp.eq.s32.totalorder %s55, 1
      %p131 = por %p129, %p130
      %p132 = scmp.ne.s32.totalorder %s123, %s124
      %p133 = scmp.eq.s32.totalorder %s55, 0
      %p134 = por %p132, %p133
      %p135 = scmp.ne.s32.totalorder %s123, %s124
      %p136 = scmp.eq.s32.totalorder %s56, 1
      %p137 = por %p135, %p136
      %p139 = scmp.ne.s32.totalorder %s124, %s138
      %p140 = scmp.eq.s32.totalorder %s56, 0
      %p141 = por %p139, %p140
      %s143 = sadd.s32 %s142, 1
      %p146 = scmp.eq.s32.totalorder %s50, 1
      %p147 = scmp.ne.s32.totalorder %s142, %s144
      %p148 = scmp.eq.s32.totalorder %s50, 0
      %p149 = por %p147, %p148
      %p150 = scmp.ne.s32.totalorder %s142, %s144
      %p151 = scmp.eq.s32.totalorder %s55, 1
      %p152 = por %p150, %p151
      %p153 = scmp.ne.s32.totalorder %s144, %s145
      %p154 = scmp.eq.s32.totalorder %s55, 0
      %p155 = por %p153, %p154
      %p156 = scmp.ne.s32.totalorder %s144, %s145
      %p157 = scmp.eq.s32.totalorder %s56, 1
      %p158 = por %p156, %p157
      %p160 = scmp.ne.s32.totalorder %s145, %s159
      %p161 = scmp.eq.s32.totalorder %s56, 0
      %p162 = por %p160, %p161
      %s163 = ssub.s32 %s50, %s57
      %p164 = scmp.eq.s32.totalorder %s163, 0
      %s166 = sadd.s32 %s165, 1
      %s167 = scalar_select %p164, %s165, %s166
      %p170 = pneg %p164
      %p171 = scmp.eq.s32.totalorder %s50, 1
      %p172 = por %p170, %p171
      %p173 = scmp.ne.s32.totalorder %s165, %s168
      %p174 = scmp.eq.s32.totalorder %s50, 0
      %p175 = por %p173, %p174
      %p176 = scmp.ne.s32.totalorder %s165, %s168
      %p177 = scmp.eq.s32.totalorder %s55, 1
      %p178 = por %p176, %p177
      %p179 = scmp.ne.s32.totalorder %s168, %s169
      %p180 = scmp.eq.s32.totalorder %s55, 0
      %p181 = por %p179, %p180
      %p182 = scmp.ne.s32.totalorder %s168, %s169
      %p183 = scmp.eq.s32.totalorder %s56, 1
      %p184 = por %p182, %p183
      %p186 = scmp.ne.s32.totalorder %s169, %s185
      %p187 = scmp.eq.s32.totalorder %s56, 0
      %p188 = por %p186, %p187
      %s189 = ssub.s32 %s50, %s57
      %p190 = scmp.eq.s32.totalorder %s189, 0
      %s192 = sadd.s32 %s191, 1
      %s193 = scalar_select %p190, %s191, %s192
      %p196 = pneg %p190
      %p197 = scmp.eq.s32.totalorder %s50, 1
      %p198 = por %p196, %p197
      %p199 = scmp.ne.s32.totalorder %s191, %s194
      %p200 = scmp.eq.s32.totalorder %s50, 0
      %p201 = por %p199, %p200
      %p202 = scmp.ne.s32.totalorder %s191, %s194
      %p203 = scmp.eq.s32.totalorder %s55, 1
      %p204 = por %p202, %p203
      %p205 = scmp.ne.s32.totalorder %s194, %s195
      %p206 = scmp.eq.s32.totalorder %s55, 0
      %p207 = por %p205, %p206
      %p208 = scmp.ne.s32.totalorder %s194, %s195
      %p209 = scmp.eq.s32.totalorder %s56, 1
      %p210 = por %p208, %p209
      %p212 = scmp.ne.s32.totalorder %s195, %s211
      %p213 = scmp.eq.s32.totalorder %s56, 0
      %p214 = por %p212, %p213
      %s215 = ssub.s32 %s50, %s57
      %p216 = scmp.eq.s32.totalorder %s215, 0
      %s218 = sadd.s32 %s217, 1
      %s219 = scalar_select %p216, %s217, %s218
      %p222 = pneg %p216
      %p223 = scmp.eq.s32.totalorder %s50, 1
      %p224 = por %p222, %p223
      %p225 = scmp.ne.s32.totalorder %s217, %s220
      %p226 = scmp.eq.s32.totalorder %s50, 0
      %p227 = por %p225, %p226
      %p228 = scmp.ne.s32.totalorder %s217, %s220
      %p229 = scmp.eq.s32.totalorder %s55, 1
      %p230 = por %p228, %p229
      %p231 = scmp.ne.s32.totalorder %s220, %s221
      %p232 = scmp.eq.s32.totalorder %s55, 0
      %p233 = por %p231, %p232
      %p234 = scmp.ne.s32.totalorder %s220, %s221
      %p235 = scmp.eq.s32.totalorder %s56, 1
      %p236 = por %p234, %p235
      %p238 = scmp.ne.s32.totalorder %s221, %s237
      %p239 = scmp.eq.s32.totalorder %s56, 0
      %p240 = por %p238, %p239
      %s241 = ssub.s32 %s50, %s57
      %p242 = scmp.eq.s32.totalorder %s241, 0
      %s244 = sadd.s32 %s243, 1
      %s245 = scalar_select %p242, %s243, %s244
      %p248 = pneg %p242
      %p249 = scmp.eq.s32.totalorder %s50, 1
      %p250 = por %p248, %p249
      %p251 = scmp.ne.s32.totalorder %s243, %s246
      %p252 = scmp.eq.s32.totalorder %s50, 0
      %p253 = por %p251, %p252
      %p254 = scmp.ne.s32.totalorder %s243, %s246
      %p255 = scmp.eq.s32.totalorder %s55, 1
      %p256 = por %p254, %p255
      %p257 = scmp.ne.s32.totalorder %s246, %s247
      %p258 = scmp.eq.s32.totalorder %s55, 0
      %p259 = por %p257, %p258
      %p260 = scmp.ne.s32.totalorder %s246, %s247
      %p261 = scmp.eq.s32.totalorder %s56, 1
      %p262 = por %p260, %p261
      %p264 = scmp.ne.s32.totalorder %s247, %s263
      %p265 = scmp.eq.s32.totalorder %s56, 0
      %p266 = por %p264, %p265
      %s267 = ssub.s32 %s50, %s57
      %p268 = scmp.eq.s32.totalorder %s267, 0
      %s270 = sadd.s32 %s269, 1
      %s271 = scalar_select %p268, %s269, %s270
      %p274 = pneg %p268
      %p275 = scmp.eq.s32.totalorder %s50, 1
      %p276 = por %p274, %p275
      %p277 = scmp.ne.s32.totalorder %s269, %s272
      %p278 = scmp.eq.s32.totalorder %s50, 0
      %p279 = por %p277, %p278
      %p280 = scmp.ne.s32.totalorder %s269, %s272
      %p281 = scmp.eq.s32.totalorder %s55, 1
      %p282 = por %p280, %p281
      %p283 = scmp.ne.s32.totalorder %s272, %s273
      %p284 = scmp.eq.s32.totalorder %s55, 0
      %p285 = por %p283, %p284
      %p286 = scmp.ne.s32.totalorder %s272, %s273
      %p287 = scmp.eq.s32.totalorder %s56, 1
      %p288 = por %p286, %p287
      %p290 = scmp.ne.s32.totalorder %s273, %s289
      %p291 = scmp.eq.s32.totalorder %s56, 0
      %p292 = por %p290, %p291
      %s293 = ssub.s32 %s50, %s57
      %p294 = scmp.eq.s32.totalorder %s293, 0
      %s296 = sadd.s32 %s295, 1
      %s297 = scalar_select %p294, %s295, %s296
      %p300 = pneg %p294
      %p301 = scmp.eq.s32.totalorder %s50, 1
      %p302 = por %p300, %p301
      %p303 = scmp.ne.s32.totalorder %s295, %s298
      %p304 = scmp.eq.s32.totalorder %s50, 0
      %p305 = por %p303, %p304
      %p306 = scmp.ne.s32.totalorder %s295, %s298
      %p307 = scmp.eq.s32.totalorder %s55, 1
      %p308 = por %p306, %p307
      %p309 = scmp.ne.s32.totalorder %s298, %s299
      %p310 = scmp.eq.s32.totalorder %s55, 0
      %p311 = por %p309, %p310
      %p312 = scmp.ne.s32.totalorder %s298, %s299
      %p313 = scmp.eq.s32.totalorder %s56, 1
      %p314 = por %p312, %p313
      %p316 = scmp.ne.s32.totalorder %s299, %s315
      %p317 = scmp.eq.s32.totalorder %s56, 0
      %p318 = por %p316, %p317
      %s319 = ssub.s32 %s50, %s57
      %p320 = scmp.eq.s32.totalorder %s319, 0
      %s322 = sadd.s32 %s321, 1
      %s323 = scalar_select %p320, %s321, %s322
      %p326 = pneg %p320
      %p327 = scmp.eq.s32.totalorder %s50, 1
      %p328 = por %p326, %p327
      %p329 = scmp.ne.s32.totalorder %s321, %s324
      %p330 = scmp.eq.s32.totalorder %s50, 0
      %p331 = por %p329, %p330
      %p332 = scmp.ne.s32.totalorder %s321, %s324
      %p333 = scmp.eq.s32.totalorder %s55, 1
      %p334 = por %p332, %p333
      %p335 = scmp.ne.s32.totalorder %s324, %s325
      %p336 = scmp.eq.s32.totalorder %s55, 0
      %p337 = por %p335, %p336
      %p338 = scmp.ne.s32.totalorder %s324, %s325
      %p339 = scmp.eq.s32.totalorder %s56, 1
      %p340 = por %p338, %p339
      %p342 = scmp.ne.s32.totalorder %s325, %s341
      %p343 = scmp.eq.s32.totalorder %s56, 0
      %p344 = por %p342, %p343
      %s345 = ssub.s32 %s50, %s57
      %p346 = scmp.eq.s32.totalorder %s345, 0
      %s348 = sadd.s32 %s347, 1
      %s349 = scalar_select %p346, %s347, %s348
      %p352 = pneg %p346
      %p353 = scmp.eq.s32.totalorder %s50, 1
      %p354 = por %p352, %p353
      %p355 = scmp.ne.s32.totalorder %s347, %s350
      %p356 = scmp.eq.s32.totalorder %s50, 0
      %p357 = por %p355, %p356
      %p358 = scmp.ne.s32.totalorder %s347, %s350
      %p359 = scmp.eq.s32.totalorder %s55, 1
      %p360 = por %p358, %p359
      %p361 = scmp.ne.s32.totalorder %s350, %s351
      %p362 = scmp.eq.s32.totalorder %s55, 0
      %p363 = por %p361, %p362
      %p364 = scmp.ne.s32.totalorder %s350, %s351
      %p365 = scmp.eq.s32.totalorder %s56, 1
      %p366 = por %p364, %p365
      %p368 = scmp.ne.s32.totalorder %s351, %s367
      %p369 = scmp.eq.s32.totalorder %s56, 0
      %p370 = por %p368, %p369
      %s371 = ssub.s32 %s50, %s57
      %p372 = scmp.eq.s32.totalorder %s371, 0
      %s374 = sadd.s32 %s373, 1
      %s375 = scalar_select %p372, %s373, %s374
      %p378 = pneg %p372
      %p379 = scmp.eq.s32.totalorder %s50, 1
      %p380 = por %p378, %p379
      %p381 = scmp.ne.s32.totalorder %s373, %s376
      %p382 = scmp.eq.s32.totalorder %s50, 0
      %p383 = por %p381, %p382
      %p384 = scmp.ne.s32.totalorder %s373, %s376
      %p385 = scmp.eq.s32.totalorder %s55, 1
      %p386 = por %p384, %p385
      %p387 = scmp.ne.s32.totalorder %s376, %s377
      %p388 = scmp.eq.s32.totalorder %s55, 0
      %p389 = por %p387, %p388
      %p390 = scmp.ne.s32.totalorder %s376, %s377
      %p391 = scmp.eq.s32.totalorder %s56, 1
      %p392 = por %p390, %p391
      %p394 = scmp.ne.s32.totalorder %s377, %s393
      %p395 = scmp.eq.s32.totalorder %s56, 0
      %p396 = por %p394, %p395
      %s397 = ssub.s32 %s50, %s57
      %p398 = scmp.eq.s32.totalorder %s397, 0
      %s400 = sadd.s32 %s399, 1
      %s401 = scalar_select %p398, %s399, %s400
      %p404 = pneg %p398
      %p405 = scmp.eq.s32.totalorder %s50, 1
      %p406 = por %p404, %p405
      %p407 = scmp.ne.s32.totalorder %s399, %s402
      %p408 = scmp.eq.s32.totalorder %s50, 0
      %p409 = por %p407, %p408
      %p410 = scmp.ne.s32.totalorder %s399, %s402
      %p411 = scmp.eq.s32.totalorder %s55, 1
      %p412 = por %p410, %p411
      %p413 = scmp.ne.s32.totalorder %s402, %s403
      %p414 = scmp.eq.s32.totalorder %s55, 0
      %p415 = por %p413, %p414
      %p416 = scmp.ne.s32.totalorder %s402, %s403
      %p417 = scmp.eq.s32.totalorder %s56, 1
      %p418 = por %p416, %p417
      %p420 = scmp.ne.s32.totalorder %s403, %s419
      %p421 = scmp.eq.s32.totalorder %s56, 0
      %p422 = por %p420, %p421
      %s423 = ssub.s32 %s50, %s57
      %p424 = scmp.eq.s32.totalorder %s423, 0
      %s426 = sadd.s32 %s425, 1
      %s427 = scalar_select %p424, %s425, %s426
      %p430 = pneg %p424
      %p431 = scmp.eq.s32.totalorder %s50, 1
      %p432 = por %p430, %p431
      %p433 = scmp.ne.s32.totalorder %s425, %s428
      %p434 = scmp.eq.s32.totalorder %s50, 0
      %p435 = por %p433, %p434
      %p436 = scmp.ne.s32.totalorder %s425, %s428
      %p437 = scmp.eq.s32.totalorder %s55, 1
      %p438 = por %p436, %p437
      %p439 = scmp.ne.s32.totalorder %s428, %s429
      %p440 = scmp.eq.s32.totalorder %s55, 0
      %p441 = por %p439, %p440
      %p442 = scmp.ne.s32.totalorder %s428, %s429
      %p443 = scmp.eq.s32.totalorder %s56, 1
      %p444 = por %p442, %p443
      %p446 = scmp.ne.s32.totalorder %s429, %s445
      %p447 = scmp.eq.s32.totalorder %s56, 0
      %p448 = por %p446, %p447
      %s449 = ssub.s32 %s50, %s57
      %p450 = scmp.eq.s32.totalorder %s449, 0
      %s452 = sadd.s32 %s451, 1
      %s453 = scalar_select %p450, %s451, %s452
      %p456 = pneg %p450
      %p457 = scmp.eq.s32.totalorder %s50, 1
      %p458 = por %p456, %p457
      %p459 = scmp.ne.s32.totalorder %s451, %s454
      %p460 = scmp.eq.s32.totalorder %s50, 0
      %p461 = por %p459, %p460
      %p462 = scmp.ne.s32.totalorder %s451, %s454
      %p463 = scmp.eq.s32.totalorder %s55, 1
      %p464 = por %p462, %p463
      %p465 = scmp.ne.s32.totalorder %s454, %s455
      %p466 = scmp.eq.s32.totalorder %s55, 0
      %p467 = por %p465, %p466
      %p468 = scmp.ne.s32.totalorder %s454, %s455
      %p469 = scmp.eq.s32.totalorder %s56, 1
      %p470 = por %p468, %p469
      %p472 = scmp.ne.s32.totalorder %s455, %s471
      %p473 = scmp.eq.s32.totalorder %s56, 0
      %p474 = por %p472, %p473
      %s475 = ssub.s32 %s50, %s57
      %p476 = scmp.eq.s32.totalorder %s475, 0
      %s478 = sadd.s32 %s477, 1
      %s479 = scalar_select %p476, %s477, %s478
      %p482 = pneg %p476
      %p483 = scmp.eq.s32.totalorder %s50, 1
      %p484 = por %p482, %p483
      %p485 = scmp.ne.s32.totalorder %s477, %s480
      %p486 = scmp.eq.s32.totalorder %s50, 0
      %p487 = por %p485, %p486
      %p488 = scmp.ne.s32.totalorder %s477, %s480
      %p489 = scmp.eq.s32.totalorder %s55, 1
      %p490 = por %p488, %p489
      %p491 = scmp.ne.s32.totalorder %s480, %s481
      %p492 = scmp.eq.s32.totalorder %s55, 0
      %p493 = por %p491, %p492
      %p494 = scmp.ne.s32.totalorder %s480, %s481
      %p495 = scmp.eq.s32.totalorder %s56, 1
      %p496 = por %p494, %p495
      %p498 = scmp.ne.s32.totalorder %s481, %s497
      %p499 = scmp.eq.s32.totalorder %s56, 0
      %p500 = por %p498, %p499
      %s501 = ssub.s32 %s50, %s57
      %p502 = scmp.eq.s32.totalorder %s501, 0
      %s504 = sadd.s32 %s503, 1
      %s505 = scalar_select %p502, %s503, %s504
      %p508 = pneg %p502
      %p509 = scmp.eq.s32.totalorder %s50, 1
      %p510 = por %p508, %p509
      %p511 = scmp.ne.s32.totalorder %s503, %s506
      %p512 = scmp.eq.s32.totalorder %s50, 0
      %p513 = por %p511, %p512
      %p514 = scmp.ne.s32.totalorder %s503, %s506
      %p515 = scmp.eq.s32.totalorder %s55, 1
      %p516 = por %p514, %p515
      %p517 = scmp.ne.s32.totalorder %s506, %s507
      %p518 = scmp.eq.s32.totalorder %s55, 0
      %p519 = por %p517, %p518
      %p520 = scmp.ne.s32.totalorder %s506, %s507
      %p521 = scmp.eq.s32.totalorder %s56, 1
      %p522 = por %p520, %p521
      %p524 = scmp.ne.s32.totalorder %s507, %s523
      %p525 = scmp.eq.s32.totalorder %s56, 0
      %p526 = por %p524, %p525
      %s527 = ssub.s32 %s50, %s57
      %p528 = scmp.eq.s32.totalorder %s527, 0
      %s530 = sadd.s32 %s529, 1
      %s531 = scalar_select %p528, %s529, %s530
      %p534 = pneg %p528
      %p535 = scmp.eq.s32.totalorder %s50, 1
      %p536 = por %p534, %p535
      %p537 = scmp.ne.s32.totalorder %s529, %s532
      %p538 = scmp.eq.s32.totalorder %s50, 0
      %p539 = por %p537, %p538
      %p540 = scmp.ne.s32.totalorder %s529, %s532
      %p541 = scmp.eq.s32.totalorder %s55, 1
      %p542 = por %p540, %p541
      %p543 = scmp.ne.s32.totalorder %s532, %s533
      %p544 = scmp.eq.s32.totalorder %s55, 0
      %p545 = por %p543, %p544
      %p546 = scmp.ne.s32.totalorder %s532, %s533
      %p547 = scmp.eq.s32.totalorder %s56, 1
      %p548 = por %p546, %p547
      %p550 = scmp.ne.s32.totalorder %s533, %s549
      %p551 = scmp.eq.s32.totalorder %s56, 0
      %p552 = por %p550, %p551
      %s553 = ssub.s32 %s50, %s57
      %p554 = scmp.eq.s32.totalorder %s553, 0
      %s556 = sadd.s32 %s555, 1
      %s557 = scalar_select %p554, %s555, %s556
      %p560 = pneg %p554
      %p561 = scmp.eq.s32.totalorder %s50, 1
      %p562 = por %p560, %p561
      %p563 = scmp.ne.s32.totalorder %s555, %s558
      %p564 = scmp.eq.s32.totalorder %s50, 0
      %p565 = por %p563, %p564
      %p566 = scmp.ne.s32.totalorder %s555, %s558
      %p567 = scmp.eq.s32.totalorder %s55, 1
      %p568 = por %p566, %p567
      %p569 = scmp.ne.s32.totalorder %s558, %s559
      %p570 = scmp.eq.s32.totalorder %s55, 0
      %p571 = por %p569, %p570
      %p572 = scmp.ne.s32.totalorder %s558, %s559
      %p573 = scmp.eq.s32.totalorder %s56, 1
      %p574 = por %p572, %p573
      %p576 = scmp.ne.s32.totalorder %s559, %s575
      %p577 = scmp.eq.s32.totalorder %s56, 0
      %p578 = por %p576, %p577
      %s580 = sadd.s32 %s579, 1
      %p583 = scmp.eq.s32.totalorder %s50, 1
      %p584 = scmp.ne.s32.totalorder %s579, %s581
      %p585 = scmp.eq.s32.totalorder %s50, 0
      %p586 = por %p584, %p585
      %p587 = scmp.ne.s32.totalorder %s579, %s581
      %p588 = scmp.eq.s32.totalorder %s55, 1
      %p589 = por %p587, %p588
      %p590 = scmp.ne.s32.totalorder %s581, %s582
      %p591 = scmp.eq.s32.totalorder %s55, 0
      %p592 = por %p590, %p591
      %p593 = scmp.ne.s32.totalorder %s581, %s582
      %p594 = scmp.eq.s32.totalorder %s56, 1
      %p595 = por %p593, %p594
      %p597 = scmp.ne.s32.totalorder %s582, %s596
      %p598 = scmp.eq.s32.totalorder %s56, 0
      %p599 = por %p597, %p598
      %p600 = scmp.le.s32.totalorder 1, %s50
      %p601 = scmp.lt.s32.totalorder %s50, 3
      %p602 = pnand %p600, %p601
      %p603 = pneg %p602
      // Predicated region
      $region9: #{_lambda_.1} parent=5 // pred_check
        _
      $region10: #{_lambda_.1} parent=5 // pred_check_branch
        %605 = sbr.rel (%p602) target = $region12
      $region11: #{_lambda_.1} parent=5 // pred_region
        %s606 = ssub.s32 %s50, 1
        // Predicated region
        $region13: #{_lambda_.1} parent=11 // pred_check
          %p607 = pneg %p71
        $region14: #{_lambda_.1} parent=11 // pred_check_branch
          %609 = sbr.rel (%p607) target = $region16
        $region15: #{_lambda_.1} parent=11 // pred_region
          _
        $region16: #{_lambda_.1} parent=11 // pred_fallthru
          _
        // Predicated region
        $region17: #{_lambda_.1} parent=11 // pred_check
          %p610 = pneg %p92
        $region18: #{_lambda_.1} parent=11 // pred_check_branch
          %612 = sbr.rel (%p610) target = $region20
        $region19: #{_lambda_.1} parent=11 // pred_region
          _
        $region20: #{_lambda_.1} parent=11 // pred_fallthru
          _
        // Predicated region
        $region21: #{_lambda_.1} parent=11 // pred_check
          %p613 = pneg %p113
        $region22: #{_lambda_.1} parent=11 // pred_check_branch
          %615 = sbr.rel (%p613) target = $region24
        $region23: #{_lambda_.1} parent=11 // pred_region
          _
        $region24: #{_lambda_.1} parent=11 // pred_fallthru
          _
        // Predicated region
        $region25: #{_lambda_.1} parent=11 // pred_check
          %p616 = pneg %p134
        $region26: #{_lambda_.1} parent=11 // pred_check_branch
          %618 = sbr.rel (%p616) target = $region28
        $region27: #{_lambda_.1} parent=11 // pred_region
          %620 = vsyncadd [#allocation4], 0
          %s622 = sshll.u32 %s3, 4
          %s623 = int_to_ptr.hbm [resolvable:$true] %s622
          %s624 = sshll.u32 [#allocation3], 4
          %s625 = int_to_ptr.vmem [resolvable:$true] %s624
          %627 = dma.hbm_to_vmem [thread:$0]  %s623, 16, %s625, [#allocation4]
        $region28: #{_lambda_.1} parent=11 // pred_fallthru
          _
        // Predicated region
        $region29: #{_lambda_.1} parent=11 // pred_check
          %p628 = pneg %p155
        $region30: #{_lambda_.1} parent=11 // pred_check_branch
          %630 = sbr.rel (%p628) target = $region32
        $region31: #{_lambda_.1} parent=11 // pred_region
          _
        $region32: #{_lambda_.1} parent=11 // pred_fallthru
          _
      $region12: #{_lambda_.1} parent=5 // pred_fallthru
        _
      %p631 = scmp.lt.s32.totalorder %s50, 2
      // Predicated region
      $region33: #{_lambda_.1} parent=5 // pred_check
        %p632 = pneg %p631
      $region34: #{_lambda_.1} parent=5 // pred_check_branch
        %634 = sbr.rel (%p632) target = $region36
      $region35: #{_lambda_.1} parent=5 // pred_region
        // Predicated region
        $region37: #{_lambda_.1} parent=35 // pred_check
          %p635 = pneg %p175
        $region38: #{_lambda_.1} parent=35 // pred_check_branch
          %637 = sbr.rel (%p635) target = $region40
        $region39: #{_lambda_.1} parent=35 // pred_region
          %p638 = scmp.lt.s32.totalorder %s50, 1
          %s639 = scalar_select %p638, %s50, 1
          %s640 = scalar_lea.vmem %s5, %s639
        $region40: #{_lambda_.1} parent=35 // pred_fallthru
          _
        // Predicated region
        $region41: #{_lambda_.1} parent=35 // pred_check
          %p641 = pneg %p201
        $region42: #{_lambda_.1} parent=35 // pred_check_branch
          %643 = sbr.rel (%p641) target = $region44
        $region43: #{_lambda_.1} parent=35 // pred_region
          %s644 = sand.u32 %s50, 1
          %s645 = scalar_lea.sflag [#allocation7], %s644
          %s646 = sand.u32 %s191, 1
          %s647 = scalar_lea.vmem [#allocation6], %s646
          %649 = vsyncadd %s645, 0
          %s650 = scalar_lea.hbm %s6, %s50
          %s652 = sshll.u32 %s650, 4
          %s653 = int_to_ptr.hbm [resolvable:$true] %s652
          %s654 = sshll.u32 %s647, 4
          %s655 = int_to_ptr.vmem [resolvable:$true] %s654
          %657 = dma.hbm_to_vmem [thread:$0]  %s653, 16, %s655, %s645
        $region44: #{_lambda_.1} parent=35 // pred_fallthru
          _
        // Predicated region
        $region45: #{_lambda_.1} parent=35 // pred_check
          %p658 = pneg %p227
        $region46: #{_lambda_.1} parent=35 // pred_check_branch
          %660 = sbr.rel (%p658) target = $region48
        $region47: #{_lambda_.1} parent=35 // pred_region
          %s661 = sand.u32 %s50, 1
          %s662 = scalar_lea.sflag [#allocation7], %s661
          %s663 = sand.u32 %s217, 1
          %s664 = smul.addr %s663, 256
          %s665 = scalar_lea.vmem [#allocation8], %s664
          %667 = vsyncadd %s662, 0
          %s668 = smul.addr %s50, 64
          %s669 = smul.addr %s668, 4
          %s670 = scalar_lea.hbm %s7, %s669
          %s671 = sshll.u32 %s670, 4
          %s672 = int_to_ptr.hbm [resolvable:$true] %s671
          %s673 = sshll.u32 %s665, 4
          %s674 = int_to_ptr.vmem [resolvable:$true] %s673
          %679 = dma.hbm_to_vmem [thread:$0]  %s672, 4096, %s674, %s662, 256, 256, 16
        $region48: #{_lambda_.1} parent=35 // pred_fallthru
          _
        // Predicated region
        $region49: #{_lambda_.1} parent=35 // pred_check
          %p680 = pneg %p253
        $region50: #{_lambda_.1} parent=35 // pred_check_branch
          %682 = sbr.rel (%p680) target = $region52
        $region51: #{_lambda_.1} parent=35 // pred_region
          %p683 = scmp.lt.s32.totalorder %s50, 1
          %s684 = scalar_select %p683, %s50, 1
          %s685 = smul.addr %s684, 4
          %s686 = scalar_lea.vmem %s8, %s685
        $region52: #{_lambda_.1} parent=35 // pred_fallthru
          _
        // Predicated region
        $region53: #{_lambda_.1} parent=35 // pred_check
          %p687 = pneg %p279
        $region54: #{_lambda_.1} parent=35 // pred_check_branch
          %689 = sbr.rel (%p687) target = $region56
        $region55: #{_lambda_.1} parent=35 // pred_region
          %s690 = sand.u32 %s50, 1
          %s691 = scalar_lea.sflag [#allocation10], %s690
          %s692 = sand.u32 %s269, 1
          %s693 = smul.addr %s692, 256
          %s694 = scalar_lea.vmem [#allocation9], %s693
          %696 = vsyncadd %s691, 0
          %s697 = smul.addr %s50, 64
          %s698 = smul.addr %s697, 4
          %s699 = scalar_lea.hbm %s9, %s698
          %s700 = sshll.u32 %s699, 4
          %s701 = int_to_ptr.hbm [resolvable:$true] %s700
          %s702 = sshll.u32 %s694, 4
          %s703 = int_to_ptr.vmem [resolvable:$true] %s702
          %708 = dma.hbm_to_vmem [thread:$0]  %s701, 4096, %s703, %s691, 256, 256, 16
        $region56: #{_lambda_.1} parent=35 // pred_fallthru
          _
        // Predicated region
        $region57: #{_lambda_.1} parent=35 // pred_check
          %p709 = pneg %p305
        $region58: #{_lambda_.1} parent=35 // pred_check_branch
          %711 = sbr.rel (%p709) target = $region60
        $region59: #{_lambda_.1} parent=35 // pred_region
          %p712 = scmp.lt.s32.totalorder %s50, 1
          %s713 = scalar_select %p712, %s50, 1
          %s714 = smul.addr %s713, 4
          %s715 = scalar_lea.vmem %s10, %s714
        $region60: #{_lambda_.1} parent=35 // pred_fallthru
          _
        // Predicated region
        $region61: #{_lambda_.1} parent=35 // pred_check
          %p716 = pneg %p331
        $region62: #{_lambda_.1} parent=35 // pred_check_branch
          %718 = sbr.rel (%p716) target = $region64
        $region63: #{_lambda_.1} parent=35 // pred_region
          %s719 = sand.u32 %s50, 1
          %s720 = scalar_lea.sflag [#allocation10], %s719
          %s721 = sand.u32 %s321, 1
          %s722 = smul.addr %s721, 256
          %s723 = scalar_lea.vmem [#allocation11], %s722
          %725 = vsyncadd %s720, 0
          %s726 = smul.addr %s50, 64
          %s727 = smul.addr %s726, 4
          %s728 = scalar_lea.hbm %s11, %s727
          %s729 = sshll.u32 %s728, 4
          %s730 = int_to_ptr.hbm [resolvable:$true] %s729
          %s731 = sshll.u32 %s723, 4
          %s732 = int_to_ptr.vmem [resolvable:$true] %s731
          %737 = dma.hbm_to_vmem [thread:$0]  %s730, 4096, %s732, %s720, 256, 256, 16
        $region64: #{_lambda_.1} parent=35 // pred_fallthru
          _
        // Predicated region
        $region65: #{_lambda_.1} parent=35 // pred_check
          %p738 = pneg %p357
        $region66: #{_lambda_.1} parent=35 // pred_check_branch
          %740 = sbr.rel (%p738) target = $region68
        $region67: #{_lambda_.1} parent=35 // pred_region
          %s741 = sand.u32 %s50, 1
          %s742 = scalar_lea.sflag [#allocation13], %s741
          %s743 = sand.u32 %s347, 1
          %s744 = smul.addr %s743, 4
          %s745 = scalar_lea.vmem [#allocation12], %s744
          %747 = vsyncadd %s742, 0
          %s748 = smul.addr %s50, 4
          %s749 = scalar_lea.hbm %s12, %s748
          %s751 = sshll.u32 %s749, 4
          %s752 = int_to_ptr.hbm [resolvable:$true] %s751
          %s753 = sshll.u32 %s745, 4
          %s754 = int_to_ptr.vmem [resolvable:$true] %s753
          %756 = dma.hbm_to_vmem [thread:$0]  %s752, 64, %s754, %s742
        $region68: #{_lambda_.1} parent=35 // pred_fallthru
          _
        // Predicated region
        $region69: #{_lambda_.1} parent=35 // pred_check
          %p757 = pneg %p383
        $region70: #{_lambda_.1} parent=35 // pred_check_branch
          %759 = sbr.rel (%p757) target = $region72
        $region71: #{_lambda_.1} parent=35 // pred_region
          %s760 = sand.u32 %s50, 1
          %s761 = scalar_lea.sflag [#allocation13], %s760
          %s762 = sand.u32 %s373, 1
          %s763 = smul.addr %s762, 256
          %s764 = scalar_lea.vmem [#allocation14], %s763
          %766 = vsyncadd %s761, 0
          %s767 = smul.addr %s50, 64
          %s768 = smul.addr %s767, 4
          %s769 = scalar_lea.hbm %s13, %s768
          %s770 = sshll.u32 %s769, 4
          %s771 = int_to_ptr.hbm [resolvable:$true] %s770
          %s772 = sshll.u32 %s764, 4
          %s773 = int_to_ptr.vmem [resolvable:$true] %s772
          %778 = dma.hbm_to_vmem [thread:$0]  %s771, 4096, %s773, %s761, 64, 64, 4
        $region72: #{_lambda_.1} parent=35 // pred_fallthru
          _
        // Predicated region
        $region73: #{_lambda_.1} parent=35 // pred_check
          %p779 = pneg %p409
        $region74: #{_lambda_.1} parent=35 // pred_check_branch
          %781 = sbr.rel (%p779) target = $region76
        $region75: #{_lambda_.1} parent=35 // pred_region
          %s782 = sand.u32 %s50, 1
          %s783 = scalar_lea.sflag [#allocation16], %s782
          %s784 = sand.u32 %s399, 1
          %s785 = scalar_lea.vmem [#allocation15], %s784
          %787 = vsyncadd %s783, 0
          %s788 = scalar_lea.hbm %s14, %s50
          %s790 = sshll.u32 %s788, 4
          %s791 = int_to_ptr.hbm [resolvable:$true] %s790
          %s792 = sshll.u32 %s785, 4
          %s793 = int_to_ptr.vmem [resolvable:$true] %s792
          %795 = dma.hbm_to_vmem [thread:$0]  %s791, 16, %s793, %s783
        $region76: #{_lambda_.1} parent=35 // pred_fallthru
          _
        // Predicated region
        $region77: #{_lambda_.1} parent=35 // pred_check
          %p796 = pneg %p435
        $region78: #{_lambda_.1} parent=35 // pred_check_branch
          %798 = sbr.rel (%p796) target = $region80
        $region79: #{_lambda_.1} parent=35 // pred_region
          %s799 = sand.u32 %s50, 1
          %s800 = scalar_lea.sflag [#allocation16], %s799
          %s801 = sand.u32 %s425, 1
          %s802 = scalar_lea.vmem [#allocation17], %s801
          %804 = vsyncadd %s800, 0
          %s805 = scalar_lea.hbm %s15, %s50
          %s807 = sshll.u32 %s805, 4
          %s808 = int_to_ptr.hbm [resolvable:$true] %s807
          %s809 = sshll.u32 %s802, 4
          %s810 = int_to_ptr.vmem [resolvable:$true] %s809
          %812 = dma.hbm_to_vmem [thread:$0]  %s808, 16, %s810, %s800
        $region80: #{_lambda_.1} parent=35 // pred_fallthru
          _
        // Predicated region
        $region81: #{_lambda_.1} parent=35 // pred_check
          %p813 = pneg %p461
        $region82: #{_lambda_.1} parent=35 // pred_check_branch
          %815 = sbr.rel (%p813) target = $region84
        $region83: #{_lambda_.1} parent=35 // pred_region
          %s816 = sand.u32 %s50, 1
          %s817 = scalar_lea.sflag [#allocation19], %s816
          %s818 = sand.u32 %s451, 1
          %s819 = scalar_lea.vmem [#allocation18], %s818
          %821 = vsyncadd %s817, 0
          %s822 = scalar_lea.hbm %s16, %s50
          %s824 = sshll.u32 %s822, 4
          %s825 = int_to_ptr.hbm [resolvable:$true] %s824
          %s826 = sshll.u32 %s819, 4
          %s827 = int_to_ptr.vmem [resolvable:$true] %s826
          %829 = dma.hbm_to_vmem [thread:$0]  %s825, 16, %s827, %s817
        $region84: #{_lambda_.1} parent=35 // pred_fallthru
          _
        // Predicated region
        $region85: #{_lambda_.1} parent=35 // pred_check
          %p830 = pneg %p487
        $region86: #{_lambda_.1} parent=35 // pred_check_branch
          %832 = sbr.rel (%p830) target = $region88
        $region87: #{_lambda_.1} parent=35 // pred_region
          %s833 = sand.u32 %s50, 1
          %s834 = scalar_lea.sflag [#allocation19], %s833
          %s835 = sand.u32 %s477, 1
          %s836 = smul.addr %s835, 128
          %s837 = scalar_lea.vmem [#allocation20], %s836
          %839 = vsyncadd %s834, 0
          %s840 = smul.addr %s50, 32
          %s841 = smul.addr %s840, 4
          %s842 = scalar_lea.hbm %s17, %s841
          %s843 = sshll.u32 %s842, 4
          %s844 = int_to_ptr.hbm [resolvable:$true] %s843
          %s845 = sshll.u32 %s837, 4
          %s846 = int_to_ptr.vmem [resolvable:$true] %s845
          %851 = dma.hbm_to_vmem [thread:$0]  %s844, 2048, %s846, %s834, 128, 128, 8
        $region88: #{_lambda_.1} parent=35 // pred_fallthru
          _
        // Predicated region
        $region89: #{_lambda_.1} parent=35 // pred_check
          %p852 = pneg %p513
        $region90: #{_lambda_.1} parent=35 // pred_check_branch
          %854 = sbr.rel (%p852) target = $region92
        $region91: #{_lambda_.1} parent=35 // pred_region
          %s855 = sand.u32 %s50, 1
          %s856 = scalar_lea.sflag [#allocation22], %s855
          %s857 = sand.u32 %s503, 1
          %s858 = smul.addr %s857, 2
          %s859 = scalar_lea.vmem [#allocation21], %s858
          %861 = vsyncadd %s856, 0
          %s862 = smul.addr %s50, 2
          %s863 = scalar_lea.hbm %s18, %s862
          %s865 = sshll.u32 %s863, 4
          %s866 = int_to_ptr.hbm [resolvable:$true] %s865
          %s867 = sshll.u32 %s859, 4
          %s868 = int_to_ptr.vmem [resolvable:$true] %s867
          %870 = dma.hbm_to_vmem [thread:$0]  %s866, 32, %s868, %s856
        $region92: #{_lambda_.1} parent=35 // pred_fallthru
          _
        // Predicated region
        $region93: #{_lambda_.1} parent=35 // pred_check
          %p871 = pneg %p539
        $region94: #{_lambda_.1} parent=35 // pred_check_branch
          %873 = sbr.rel (%p871) target = $region96
        $region95: #{_lambda_.1} parent=35 // pred_region
          %s874 = sand.u32 %s50, 1
          %s875 = scalar_lea.sflag [#allocation22], %s874
          %s876 = sand.u32 %s529, 1
          %s877 = smul.addr %s876, 128
          %s878 = scalar_lea.vmem [#allocation23], %s877
          %880 = vsyncadd %s875, 0
          %s881 = smul.addr %s50, 32
          %s882 = smul.addr %s881, 4
          %s883 = scalar_lea.hbm %s19, %s882
          %s884 = sshll.u32 %s883, 4
          %s885 = int_to_ptr.hbm [resolvable:$true] %s884
          %s886 = sshll.u32 %s878, 4
          %s887 = int_to_ptr.vmem [resolvable:$true] %s886
          %892 = dma.hbm_to_vmem [thread:$0]  %s885, 2048, %s887, %s875, 64, 64, 4
        $region96: #{_lambda_.1} parent=35 // pred_fallthru
          _
        // Predicated region
        $region97: #{_lambda_.1} parent=35 // pred_check
          %p893 = pneg %p565
        $region98: #{_lambda_.1} parent=35 // pred_check_branch
          %895 = sbr.rel (%p893) target = $region100
        $region99: #{_lambda_.1} parent=35 // pred_region
          %s896 = sand.u32 %s555, 1
          %s897 = scalar_lea.sflag [#allocation25], %s896
          %s898 = sand.u32 %s555, 1
          %s899 = scalar_lea.vmem [#allocation24], %s898
          %901 = vsyncadd %s897, 0
          %s902 = scalar_lea.hbm %s20, %s50
          %s904 = sshll.u32 %s902, 4
          %s905 = int_to_ptr.hbm [resolvable:$true] %s904
          %s906 = sshll.u32 %s899, 4
          %s907 = int_to_ptr.vmem [resolvable:$true] %s906
          %909 = dma.hbm_to_vmem [thread:$0]  %s905, 16, %s907, %s897
        $region100: #{_lambda_.1} parent=35 // pred_fallthru
          _
      $region36: #{_lambda_.1} parent=5 // pred_fallthru
        _
      %p910 = scmp.le.s32.totalorder 1, %s50
      %p911 = scmp.lt.s32.totalorder %s50, 3
      %p912 = pnand %p910, %p911
      %p913 = pneg %p912
      // Predicated region
      $region101: #{_lambda_.1} parent=5 // pred_check
        _
      $region102: #{_lambda_.1} parent=5 // pred_check_branch
        %915 = sbr.rel (%p912) target = $region104
      $region103: #{_lambda_.1} parent=5 // pred_region
        %s916 = ssub.s32 %s50, 1
        // Predicated region
        $region105: #{_lambda_.1} parent=103 // pred_check
          %p917 = pneg %p134
        $region106: #{_lambda_.1} parent=103 // pred_check_branch
          %919 = sbr.rel (%p917) target = $region108
        $region107: #{_lambda_.1} parent=103 // pred_region
          %921 = dma.done [#allocation4], 16
        $region108: #{_lambda_.1} parent=103 // pred_fallthru
          _
        %s922 = sand.u32 %s55, 1
        %s923 = scalar_lea.sflag [#allocation7], %s922
        %s924 = sand.u32 %s194, 1
        %s925 = scalar_lea.vmem [#allocation6], %s924
        // Predicated region
        $region109: #{_lambda_.1} parent=103 // pred_check
          %p926 = pneg %p207
        $region110: #{_lambda_.1} parent=103 // pred_check_branch
          %928 = sbr.rel (%p926) target = $region112
        $region111: #{_lambda_.1} parent=103 // pred_region
          %930 = dma.done %s923, 16
        $region112: #{_lambda_.1} parent=103 // pred_fallthru
          _
        %s931 = sand.u32 %s55, 1
        %s932 = scalar_lea.sflag [#allocation7], %s931
        %s933 = sand.u32 %s220, 1
        %s934 = smul.addr %s933, 256
        %s935 = scalar_lea.vmem [#allocation8], %s934
        // Predicated region
        $region113: #{_lambda_.1} parent=103 // pred_check
          %p936 = pneg %p233
        $region114: #{_lambda_.1} parent=103 // pred_check_branch
          %938 = sbr.rel (%p936) target = $region116
        $region115: #{_lambda_.1} parent=103 // pred_region
          %940 = dma.done %s932, 4096
        $region116: #{_lambda_.1} parent=103 // pred_fallthru
          _
        %s941 = sand.u32 %s55, 1
        %s942 = scalar_lea.sflag [#allocation10], %s941
        %s943 = sand.u32 %s272, 1
        %s944 = smul.addr %s943, 256
        %s945 = scalar_lea.vmem [#allocation9], %s944
        // Predicated region
        $region117: #{_lambda_.1} parent=103 // pred_check
          %p946 = pneg %p285
        $region118: #{_lambda_.1} parent=103 // pred_check_branch
          %948 = sbr.rel (%p946) target = $region120
        $region119: #{_lambda_.1} parent=103 // pred_region
          %950 = dma.done %s942, 4096
        $region120: #{_lambda_.1} parent=103 // pred_fallthru
          _
        %s951 = sand.u32 %s55, 1
        %s952 = scalar_lea.sflag [#allocation10], %s951
        %s953 = sand.u32 %s324, 1
        %s954 = smul.addr %s953, 256
        %s955 = scalar_lea.vmem [#allocation11], %s954
        // Predicated region
        $region121: #{_lambda_.1} parent=103 // pred_check
          %p956 = pneg %p337
        $region122: #{_lambda_.1} parent=103 // pred_check_branch
          %958 = sbr.rel (%p956) target = $region124
        $region123: #{_lambda_.1} parent=103 // pred_region
          %960 = dma.done %s952, 4096
        $region124: #{_lambda_.1} parent=103 // pred_fallthru
          _
        %s961 = sand.u32 %s55, 1
        %s962 = scalar_lea.sflag [#allocation13], %s961
        %s963 = sand.u32 %s350, 1
        %s964 = smul.addr %s963, 4
        %s965 = scalar_lea.vmem [#allocation12], %s964
        // Predicated region
        $region125: #{_lambda_.1} parent=103 // pred_check
          %p966 = pneg %p363
        $region126: #{_lambda_.1} parent=103 // pred_check_branch
          %968 = sbr.rel (%p966) target = $region128
        $region127: #{_lambda_.1} parent=103 // pred_region
          %970 = dma.done %s962, 64
        $region128: #{_lambda_.1} parent=103 // pred_fallthru
          _
        %s971 = sand.u32 %s55, 1
        %s972 = scalar_lea.sflag [#allocation13], %s971
        %s973 = sand.u32 %s376, 1
        %s974 = smul.addr %s973, 256
        %s975 = scalar_lea.vmem [#allocation14], %s974
        // Predicated region
        $region129: #{_lambda_.1} parent=103 // pred_check
          %p976 = pneg %p389
        $region130: #{_lambda_.1} parent=103 // pred_check_branch
          %978 = sbr.rel (%p976) target = $region132
        $region131: #{_lambda_.1} parent=103 // pred_region
          %980 = dma.done %s972, 4096
        $region132: #{_lambda_.1} parent=103 // pred_fallthru
          _
        %s981 = sand.u32 %s55, 1
        %s982 = scalar_lea.sflag [#allocation16], %s981
        %s983 = sand.u32 %s402, 1
        %s984 = scalar_lea.vmem [#allocation15], %s983
        // Predicated region
        $region133: #{_lambda_.1} parent=103 // pred_check
          %p985 = pneg %p415
        $region134: #{_lambda_.1} parent=103 // pred_check_branch
          %987 = sbr.rel (%p985) target = $region136
        $region135: #{_lambda_.1} parent=103 // pred_region
          %989 = dma.done %s982, 16
        $region136: #{_lambda_.1} parent=103 // pred_fallthru
          _
        %s990 = sand.u32 %s55, 1
        %s991 = scalar_lea.sflag [#allocation16], %s990
        %s992 = sand.u32 %s428, 1
        %s993 = scalar_lea.vmem [#allocation17], %s992
        // Predicated region
        $region137: #{_lambda_.1} parent=103 // pred_check
          %p994 = pneg %p441
        $region138: #{_lambda_.1} parent=103 // pred_check_branch
          %996 = sbr.rel (%p994) target = $region140
        $region139: #{_lambda_.1} parent=103 // pred_region
          %998 = dma.done %s991, 16
        $region140: #{_lambda_.1} parent=103 // pred_fallthru
          _
        %s999 = sand.u32 %s55, 1
        %s1000 = scalar_lea.sflag [#allocation19], %s999
        %s1001 = sand.u32 %s454, 1
        %s1002 = scalar_lea.vmem [#allocation18], %s1001
        // Predicated region
        $region141: #{_lambda_.1} parent=103 // pred_check
          %p1003 = pneg %p467
        $region142: #{_lambda_.1} parent=103 // pred_check_branch
          %1005 = sbr.rel (%p1003) target = $region144
        $region143: #{_lambda_.1} parent=103 // pred_region
          %1007 = dma.done %s1000, 16
        $region144: #{_lambda_.1} parent=103 // pred_fallthru
          _
        %s1008 = sand.u32 %s55, 1
        %s1009 = scalar_lea.sflag [#allocation19], %s1008
        %s1010 = sand.u32 %s480, 1
        %s1011 = smul.addr %s1010, 128
        %s1012 = scalar_lea.vmem [#allocation20], %s1011
        // Predicated region
        $region145: #{_lambda_.1} parent=103 // pred_check
          %p1013 = pneg %p493
        $region146: #{_lambda_.1} parent=103 // pred_check_branch
          %1015 = sbr.rel (%p1013) target = $region148
        $region147: #{_lambda_.1} parent=103 // pred_region
          %1017 = dma.done %s1009, 2048
        $region148: #{_lambda_.1} parent=103 // pred_fallthru
          _
        %s1018 = sand.u32 %s55, 1
        %s1019 = scalar_lea.sflag [#allocation22], %s1018
        %s1020 = sand.u32 %s506, 1
        %s1021 = smul.addr %s1020, 2
        %s1022 = scalar_lea.vmem [#allocation21], %s1021
        // Predicated region
        $region149: #{_lambda_.1} parent=103 // pred_check
          %p1023 = pneg %p519
        $region150: #{_lambda_.1} parent=103 // pred_check_branch
          %1025 = sbr.rel (%p1023) target = $region152
        $region151: #{_lambda_.1} parent=103 // pred_region
          %1027 = dma.done %s1019, 32
        $region152: #{_lambda_.1} parent=103 // pred_fallthru
          _
        %s1028 = sand.u32 %s55, 1
        %s1029 = scalar_lea.sflag [#allocation22], %s1028
        %s1030 = sand.u32 %s532, 1
        %s1031 = smul.addr %s1030, 128
        %s1032 = scalar_lea.vmem [#allocation23], %s1031
        // Predicated region
        $region153: #{_lambda_.1} parent=103 // pred_check
          %p1033 = pneg %p545
        $region154: #{_lambda_.1} parent=103 // pred_check_branch
          %1035 = sbr.rel (%p1033) target = $region156
        $region155: #{_lambda_.1} parent=103 // pred_region
          %1037 = dma.done %s1029, 2048
        $region156: #{_lambda_.1} parent=103 // pred_fallthru
          _
        %s1038 = sand.u32 %s558, 1
        %s1039 = scalar_lea.sflag [#allocation25], %s1038
        %s1040 = sand.u32 %s558, 1
        %s1041 = scalar_lea.vmem [#allocation24], %s1040
        // Predicated region
        $region157: #{_lambda_.1} parent=103 // pred_check
          %p1042 = pneg %p571
        $region158: #{_lambda_.1} parent=103 // pred_check_branch
          %1044 = sbr.rel (%p1042) target = $region160
        $region159: #{_lambda_.1} parent=103 // pred_region
          %1046 = dma.done %s1039, 16
        $region160: #{_lambda_.1} parent=103 // pred_fallthru
          _
        %p1047 = pneg %p71
        %p1048 = pneg %p68
        %p1049 = pneg %p92
        %p1050 = pneg %p89
        %p1051 = pneg %p113
        %p1052 = pneg %p110
        %p1053 = pneg %p134
        %p1054 = pneg %p131
        %p1055 = pneg %p155
        %p1056 = pneg %p152
        %p1057 = scmp.lt.s32.totalorder %s55, 1
        %s1058 = scalar_select %p1057, %s55, 1
        %s1059 = scalar_lea.vmem %s5, %s1058
        %p1060 = pneg %p181
        %p1061 = pneg %p178
        %s1062 = sand.u32 %s55, 1
        %s1063 = scalar_lea.sflag [#allocation7], %s1062
        %s1064 = sand.u32 %s194, 1
        %s1065 = scalar_lea.vmem [#allocation6], %s1064
        %p1066 = pneg %p207
        %p1067 = pneg %p204
        %s1068 = sand.u32 %s55, 1
        %s1069 = scalar_lea.sflag [#allocation7], %s1068
        %s1070 = sand.u32 %s220, 1
        %s1071 = smul.addr %s1070, 256
        %s1072 = scalar_lea.vmem [#allocation8], %s1071
        %p1073 = pneg %p233
        %p1074 = pneg %p230
        %p1075 = scmp.lt.s32.totalorder %s55, 1
        %s1076 = scalar_select %p1075, %s55, 1
        %s1077 = smul.addr %s1076, 4
        %s1078 = scalar_lea.vmem %s8, %s1077
        %p1079 = pneg %p259
        %p1080 = pneg %p256
        %s1081 = sand.u32 %s55, 1
        %s1082 = scalar_lea.sflag [#allocation10], %s1081
        %s1083 = sand.u32 %s272, 1
        %s1084 = smul.addr %s1083, 256
        %s1085 = scalar_lea.vmem [#allocation9], %s1084
        %p1086 = pneg %p285
        %p1087 = pneg %p282
        %p1088 = scmp.lt.s32.totalorder %s55, 1
        %s1089 = scalar_select %p1088, %s55, 1
        %s1090 = smul.addr %s1089, 4
        %s1091 = scalar_lea.vmem %s10, %s1090
        %p1092 = pneg %p311
        %p1093 = pneg %p308
        %s1094 = sand.u32 %s55, 1
        %s1095 = scalar_lea.sflag [#allocation10], %s1094
        %s1096 = sand.u32 %s324, 1
        %s1097 = smul.addr %s1096, 256
        %s1098 = scalar_lea.vmem [#allocation11], %s1097
        %p1099 = pneg %p337
        %p1100 = pneg %p334
        %s1101 = sand.u32 %s55, 1
        %s1102 = scalar_lea.sflag [#allocation13], %s1101
        %s1103 = sand.u32 %s350, 1
        %s1104 = smul.addr %s1103, 4
        %s1105 = scalar_lea.vmem [#allocation12], %s1104
        %p1106 = pneg %p363
        %p1107 = pneg %p360
        %s1108 = sand.u32 %s55, 1
        %s1109 = scalar_lea.sflag [#allocation13], %s1108
        %s1110 = sand.u32 %s376, 1
        %s1111 = smul.addr %s1110, 256
        %s1112 = scalar_lea.vmem [#allocation14], %s1111
        %p1113 = pneg %p389
        %p1114 = pneg %p386
        %s1115 = sand.u32 %s55, 1
        %s1116 = scalar_lea.sflag [#allocation16], %s1115
        %s1117 = sand.u32 %s402, 1
        %s1118 = scalar_lea.vmem [#allocation15], %s1117
        %p1119 = pneg %p415
        %p1120 = pneg %p412
        %s1121 = sand.u32 %s55, 1
        %s1122 = scalar_lea.sflag [#allocation16], %s1121
        %s1123 = sand.u32 %s428, 1
        %s1124 = scalar_lea.vmem [#allocation17], %s1123
        %p1125 = pneg %p441
        %p1126 = pneg %p438
        %s1127 = sand.u32 %s55, 1
        %s1128 = scalar_lea.sflag [#allocation19], %s1127
        %s1129 = sand.u32 %s454, 1
        %s1130 = scalar_lea.vmem [#allocation18], %s1129
        %p1131 = pneg %p467
        %p1132 = pneg %p464
        %s1133 = sand.u32 %s55, 1
        %s1134 = scalar_lea.sflag [#allocation19], %s1133
        %s1135 = sand.u32 %s480, 1
        %s1136 = smul.addr %s1135, 128
        %s1137 = scalar_lea.vmem [#allocation20], %s1136
        %p1138 = pneg %p493
        %p1139 = pneg %p490
        %s1140 = sand.u32 %s55, 1
        %s1141 = scalar_lea.sflag [#allocation22], %s1140
        %s1142 = sand.u32 %s506, 1
        %s1143 = smul.addr %s1142, 2
        %s1144 = scalar_lea.vmem [#allocation21], %s1143
        %p1145 = pneg %p519
        %p1146 = pneg %p516
        %s1147 = sand.u32 %s55, 1
        %s1148 = scalar_lea.sflag [#allocation22], %s1147
        %s1149 = sand.u32 %s532, 1
        %s1150 = smul.addr %s1149, 128
        %s1151 = scalar_lea.vmem [#allocation23], %s1150
        %p1152 = pneg %p545
        %p1153 = pneg %p542
        %s1154 = sand.u32 %s558, 1
        %s1155 = scalar_lea.sflag [#allocation25], %s1154
        %s1156 = sand.u32 %s558, 1
        %s1157 = scalar_lea.vmem [#allocation24], %s1156
        %p1158 = pneg %p571
        %p1159 = pneg %p568
        %p1160 = pneg %p592
        %p1161 = pneg %p589
        %p1162 = scmp.lt.s32.totalorder %s55, 1
        %s1163 = scalar_select %p1162, %s55, 1
        %s1164 = scalar_lea.vmem %s5, %s1163
        %p1165 = scmp.lt.s32.totalorder %s55, 1
        %s1166 = scalar_select %p1165, %s55, 1
        %s1167 = smul.addr %s1166, 4
        %s1168 = scalar_lea.vmem %s8, %s1167
        %p1169 = scmp.lt.s32.totalorder %s55, 1
        %s1170 = scalar_select %p1169, %s55, 1
        %s1171 = smul.addr %s1170, 4
        %s1172 = scalar_lea.vmem %s10, %s1171
        %p1173 = scmp.eq.s32.totalorder %s55, 0
        // Predicated region
        $region161: #{_lambda_.1} parent=103 // pred_check
          %p1174 = pneg %p1173
        $region162: #{_lambda_.1} parent=103 // pred_check_branch
          %1176 = sbr.rel (%p1174) target = $region164
        $region163: #{_lambda_.1} parent=103 // pred_region
          %v1177 = vld [vmem:[%s0] sm:$0xff]
          %v1178 = vld [vmem:[%s0 + $0x8] sm:$0xff]
          %v1179 = vmul.f32 %v1177, 11.313708
          %v1180 = vmul.f32 %v1178, 11.313708
          %v1181 = vld [vmem:[%s1] sm:$0xff]
          %v1182 = vld [vmem:[%s1 + $0x8] sm:$0xff]
          %v1183 = vadd.f32 %v1179, %v1181
          %v1184 = vadd.f32 %v1180, %v1182
          %1185 = vst [vmem:[#allocation26] sm:$0xff] %v1183
          %1186 = vst [vmem:[#allocation26 + $0x8] sm:$0xff] %v1184
        $region164: #{_lambda_.1} parent=103 // pred_fallthru
          _
        %v1187 = vld [vmem:[#allocation26] sm:$0xff]
        %v1188 = vld [vmem:[#allocation26 + $0x8] sm:$0xff]
        %v1189 = vld [vmem:[%s1164] sm:$0x1]
        %v1190 = vld [vmem:[%s925] sm:$0x1]
        %1191 = vadd.xlane.f32.xlu0 %v1187
        %v1192 = vpop.xlane.xlu0 %1191
        %1193 = vadd.xlane.f32.xlu0 %v1188
        %v1194 = vpop.xlane.xlu0 %1193
        %v1195 = vrcp.pop 128.0
        %v1196 = vmul.f32 128.0, %v1195
        %v1197 = vsub.f32 1.0, %v1196
        %v1198 = vmul.f32 %v1195, %v1197
        %v1199 = vadd.f32 %v1195, %v1198
        %vm1200 = vweird.f32 %v1195
        %v1201 = vsel %vm1200, %v1195, %v1199
        %v1202 = vmul.f32 %v1192, %v1201
        %v1203 = vmul.f32 %v1194, %v1201
        %v1204 = vsub.f32 %v1187, %v1202
        %v1205 = vsub.f32 %v1188, %v1203
        %v1206 = vmul.f32 %v1204, %v1204
        %v1207 = vmul.f32 %v1205, %v1205
        %1208 = vadd.xlane.f32.xlu0 %v1206
        %v1209 = vpop.xlane.xlu0 %1208
        %1210 = vadd.xlane.f32.xlu0 %v1207
        %v1211 = vpop.xlane.xlu0 %1210
        %v1212 = vmul.f32 %v1209, 0.007874016
        %v1213 = vmul.f32 %v1211, 0.007874016
        %v1214 = vrsqrt.pop %v1212
        %v1215 = vmul.f32 %v1214, %v1212
        %v1216 = vmul.f32 %v1215, %v1214
        %v1217 = vmul.f32 0.5, %v1216
        %v1218 = vsub.f32 1.5, %v1217
        %v1219 = vmul.f32 %v1214, %v1218
        %v1220 = vmul.f32 %v1212, %v1219
        %vm1221 = vcmp.eq.f32.partialorder %v1212, inf
        %v1222 = vsel %vm1221, %v1212, %v1220
        %vm1223 = vcmp.eq.f32.partialorder %v1212, 0.0
        %v1224 = vand.u32 %v1212, 2147483648
        %v1225 = vsel %vm1223, %v1224, %v1222
        %v1226 = vrsqrt.pop %v1213
        %v1227 = vmul.f32 %v1226, %v1213
        %v1228 = vmul.f32 %v1227, %v1226
        %v1229 = vmul.f32 0.5, %v1228
        %v1230 = vsub.f32 1.5, %v1229
        %v1231 = vmul.f32 %v1226, %v1230
        %v1232 = vmul.f32 %v1213, %v1231
        %vm1233 = vcmp.eq.f32.partialorder %v1213, inf
        %v1234 = vsel %vm1233, %v1213, %v1232
        %vm1235 = vcmp.eq.f32.partialorder %v1213, 0.0
        %v1236 = vand.u32 %v1213, 2147483648
        %v1237 = vsel %vm1235, %v1236, %v1234
        %v1238 = vadd.f32 %v1225, 1e-06
        %v1239 = vadd.f32 %v1237, 1e-06
        %v1240 = vrcp.pop %v1238
        %v1241 = vmul.f32 %v1238, %v1240
        %v1242 = vsub.f32 1.0, %v1241
        %v1243 = vmul.f32 %v1240, %v1242
        %v1244 = vadd.f32 %v1240, %v1243
        %vm1245 = vweird.f32 %v1238
        %vm1246 = vweird.f32 %v1240
        %vm1247 = vmor %vm1245, %vm1246
        %v1248 = vsel %vm1247, %v1240, %v1244
        %v1249 = vand.u32 2147483647, %v1238
        %vm1250 = vcmp.eq.f32.partialorder %v1249, 8.507059e+37
        %v1251 = vand.u32 %v1238, 2147483648
        %v1252 = vor.u32 1.1754944e-38, %v1251
        %v1253 = vsel %vm1250, %v1252, %v1248
        %v1254 = vmul.f32 1.0, %v1253
        %v1255 = vrcp.pop %v1239
        %v1256 = vmul.f32 %v1239, %v1255
        %v1257 = vsub.f32 1.0, %v1256
        %v1258 = vmul.f32 %v1255, %v1257
        %v1259 = vadd.f32 %v1255, %v1258
        %vm1260 = vweird.f32 %v1239
        %vm1261 = vweird.f32 %v1255
        %vm1262 = vmor %vm1260, %vm1261
        %v1263 = vsel %vm1262, %v1255, %v1259
        %v1264 = vand.u32 2147483647, %v1239
        %vm1265 = vcmp.eq.f32.partialorder %v1264, 8.507059e+37
        %v1266 = vand.u32 %v1239, 2147483648
        %v1267 = vor.u32 1.1754944e-38, %v1266
        %v1268 = vsel %vm1265, %v1267, %v1263
        %v1269 = vmul.f32 1.0, %v1268
        %v1270 = vmul.f32 %v1204, %v1254
        %v1271 = vmul.f32 %v1205, %v1269
        %v1273 = vperm.slane %v1189, 0
        %v1275 = vmul.f32 %v1273, %v1270
        %v1276 = vmul.f32 %v1273, %v1271
        %v1278 = vperm.slane %v1190, 0
        %v1280 = vadd.f32 %v1275, %v1278
        %v1281 = vadd.f32 %v1276, %v1278
        %v1282 = vpack.c.bf16 %v1281, %v1280
        %v1283 = vld [vmem:[%s935] sm:$0xff]
        %v1284 = vld [vmem:[%s935 + $0x8] sm:$0xff]
        %v1285 = vld [vmem:[%s935 + $0x10] sm:$0xff]
        %v1286 = vld [vmem:[%s935 + $0x18] sm:$0xff]
        %v1287 = vld [vmem:[%s935 + $0x20] sm:$0xff]
        %v1288 = vld [vmem:[%s935 + $0x28] sm:$0xff]
        %v1289 = vld [vmem:[%s935 + $0x30] sm:$0xff]
        %v1290 = vld [vmem:[%s935 + $0x38] sm:$0xff]
        %v1291 = vld [vmem:[%s935 + $0x40] sm:$0xff]
        %v1292 = vld [vmem:[%s935 + $0x48] sm:$0xff]
        %v1293 = vld [vmem:[%s935 + $0x50] sm:$0xff]
        %v1294 = vld [vmem:[%s935 + $0x58] sm:$0xff]
        %v1295 = vld [vmem:[%s935 + $0x60] sm:$0xff]
        %v1296 = vld [vmem:[%s935 + $0x68] sm:$0xff]
        %v1297 = vld [vmem:[%s935 + $0x70] sm:$0xff]
        %v1298 = vld [vmem:[%s935 + $0x78] sm:$0xff]
        %v1299 = vld [vmem:[%s935 + $0x80] sm:$0xff]
        %v1300 = vld [vmem:[%s935 + $0x88] sm:$0xff]
        %v1301 = vld [vmem:[%s935 + $0x90] sm:$0xff]
        %v1302 = vld [vmem:[%s935 + $0x98] sm:$0xff]
        %v1303 = vld [vmem:[%s935 + $0xa0] sm:$0xff]
        %v1304 = vld [vmem:[%s935 + $0xa8] sm:$0xff]
        %v1305 = vld [vmem:[%s935 + $0xb0] sm:$0xff]
        %v1306 = vld [vmem:[%s935 + $0xb8] sm:$0xff]
        %v1307 = vld [vmem:[%s935 + $0xc0] sm:$0xff]
        %v1308 = vld [vmem:[%s935 + $0xc8] sm:$0xff]
        %v1309 = vld [vmem:[%s935 + $0xd0] sm:$0xff]
        %v1310 = vld [vmem:[%s935 + $0xd8] sm:$0xff]
        %v1311 = vld [vmem:[%s935 + $0xe0] sm:$0xff]
        %v1312 = vld [vmem:[%s935 + $0xe8] sm:$0xff]
        %v1313 = vld [vmem:[%s935 + $0xf0] sm:$0xff]
        %v1314 = vld [vmem:[%s935 + $0xf8] sm:$0xff]
        %v1315 = vld [vmem:[%s1168] sm:$0xf]
        %v1317 = vperm.slane %v1315, 0
        %v1318 = vperm.slane %v1315, 1
        %v1319 = vperm.slane %v1315, 2
        %v1320 = vperm.slane %v1315, 3
        %v1357 = vunpack.c.l.b16 %v1283
        %v1358 = vunpack.c.h.b16 %v1283
        %v1359 = vunpack.c.l.b16 %v1284
        %v1360 = vunpack.c.h.b16 %v1284
        %v1361 = vunpack.c.l.b16 %v1285
        %v1362 = vunpack.c.h.b16 %v1285
        %v1363 = vunpack.c.l.b16 %v1286
        %v1364 = vunpack.c.h.b16 %v1286
        %v1365 = vunpack.c.l.b16 %v1287
        %v1366 = vunpack.c.h.b16 %v1287
        %v1367 = vunpack.c.l.b16 %v1288
        %v1368 = vunpack.c.h.b16 %v1288
        %v1369 = vunpack.c.l.b16 %v1289
        %v1370 = vunpack.c.h.b16 %v1289
        %v1371 = vunpack.c.l.b16 %v1290
        %v1372 = vunpack.c.h.b16 %v1290
        %v1373 = vunpack.c.l.b16 %v1291
        %v1374 = vunpack.c.h.b16 %v1291
        %v1375 = vunpack.c.l.b16 %v1292
        %v1376 = vunpack.c.h.b16 %v1292
        %v1377 = vunpack.c.l.b16 %v1293
        %v1378 = vunpack.c.h.b16 %v1293
        %v1379 = vunpack.c.l.b16 %v1294
        %v1380 = vunpack.c.h.b16 %v1294
        %v1381 = vunpack.c.l.b16 %v1295
        %v1382 = vunpack.c.h.b16 %v1295
        %v1383 = vunpack.c.l.b16 %v1296
        %v1384 = vunpack.c.h.b16 %v1296
        %v1385 = vunpack.c.l.b16 %v1297
        %v1386 = vunpack.c.h.b16 %v1297
        %v1387 = vunpack.c.l.b16 %v1298
        %v1388 = vunpack.c.h.b16 %v1298
        %v1389 = vunpack.c.l.b16 %v1299
        %v1390 = vunpack.c.h.b16 %v1299
        %v1391 = vunpack.c.l.b16 %v1300
        %v1392 = vunpack.c.h.b16 %v1300
        %v1393 = vunpack.c.l.b16 %v1301
        %v1394 = vunpack.c.h.b16 %v1301
        %v1395 = vunpack.c.l.b16 %v1302
        %v1396 = vunpack.c.h.b16 %v1302
        %v1397 = vunpack.c.l.b16 %v1303
        %v1398 = vunpack.c.h.b16 %v1303
        %v1399 = vunpack.c.l.b16 %v1304
        %v1400 = vunpack.c.h.b16 %v1304
        %v1401 = vunpack.c.l.b16 %v1305
        %v1402 = vunpack.c.h.b16 %v1305
        %v1403 = vunpack.c.l.b16 %v1306
        %v1404 = vunpack.c.h.b16 %v1306
        %v1405 = vunpack.c.l.b16 %v1307
        %v1406 = vunpack.c.h.b16 %v1307
        %v1407 = vunpack.c.l.b16 %v1308
        %v1408 = vunpack.c.h.b16 %v1308
        %v1409 = vunpack.c.l.b16 %v1309
        %v1410 = vunpack.c.h.b16 %v1309
        %v1411 = vunpack.c.l.b16 %v1310
        %v1412 = vunpack.c.h.b16 %v1310
        %v1413 = vunpack.c.l.b16 %v1311
        %v1414 = vunpack.c.h.b16 %v1311
        %v1415 = vunpack.c.l.b16 %v1312
        %v1416 = vunpack.c.h.b16 %v1312
        %v1417 = vunpack.c.l.b16 %v1313
        %v1418 = vunpack.c.h.b16 %v1313
        %v1419 = vunpack.c.l.b16 %v1314
        %v1420 = vunpack.c.h.b16 %v1314
        %v1421 = vpack.c.b16 %v1361, %v1357
        %v1422 = vpack.c.b16 %v1362, %v1358
        %v1423 = vpack.c.b16 %v1363, %v1359
        %v1424 = vpack.c.b16 %v1364, %v1360
        %v1425 = vpack.c.b16 %v1369, %v1365
        %v1426 = vpack.c.b16 %v1370, %v1366
        %v1427 = vpack.c.b16 %v1371, %v1367
        %v1428 = vpack.c.b16 %v1372, %v1368
        %v1429 = vpack.c.b16 %v1377, %v1373
        %v1430 = vpack.c.b16 %v1378, %v1374
        %v1431 = vpack.c.b16 %v1379, %v1375
        %v1432 = vpack.c.b16 %v1380, %v1376
        %v1433 = vpack.c.b16 %v1385, %v1381
        %v1434 = vpack.c.b16 %v1386, %v1382
        %v1435 = vpack.c.b16 %v1387, %v1383
        %v1436 = vpack.c.b16 %v1388, %v1384
        %v1437 = vpack.c.b16 %v1393, %v1389
        %v1438 = vpack.c.b16 %v1394, %v1390
        %v1439 = vpack.c.b16 %v1395, %v1391
        %v1440 = vpack.c.b16 %v1396, %v1392
        %v1441 = vpack.c.b16 %v1401, %v1397
        %v1442 = vpack.c.b16 %v1402, %v1398
        %v1443 = vpack.c.b16 %v1403, %v1399
        %v1444 = vpack.c.b16 %v1404, %v1400
        %v1445 = vpack.c.b16 %v1409, %v1405
        %v1446 = vpack.c.b16 %v1410, %v1406
        %v1447 = vpack.c.b16 %v1411, %v1407
        %v1448 = vpack.c.b16 %v1412, %v1408
        %v1449 = vpack.c.b16 %v1417, %v1413
        %v1450 = vpack.c.b16 %v1418, %v1414
        %v1451 = vpack.c.b16 %v1419, %v1415
        %v1452 = vpack.c.b16 %v1420, %v1416
        %1485 = vmatpush.bf16.msra.mxu0 %v1449
        %1486 = vmatpush.bf16.msra.mxu0 %v1445
        %1487 = vmatpush.bf16.msra.mxu0 %v1441
        %1488 = vmatpush.bf16.msra.mxu0 %v1437
        %1489 = vmatpush.bf16.msra.mxu0 %v1433
        %1490 = vmatpush.bf16.msra.mxu0 %v1429
        %1491 = vmatpush.bf16.msra.mxu0 %v1425
        %1492 = vmatpush.bf16.msra.mxu0 %v1421
        %1493 = vmatmul.bf16.gmra.mxu0 %v1282
        %v1494 = vpop.f32.mrf.mxu0
        %v1495 = vadd.f32 %v1317, %v1494
        %v1496 = vpop.f32.mrf.mxu0
        %v1497 = vadd.f32 %v1317, %v1496
        %1498 = vdwg.mxu0
        %1499 = vmatpush.bf16.msra.mxu0 %v1450
        %1500 = vmatpush.bf16.msra.mxu0 %v1446
        %1501 = vmatpush.bf16.msra.mxu0 %v1442
        %1502 = vmatpush.bf16.msra.mxu0 %v1438
        %1503 = vmatpush.bf16.msra.mxu0 %v1434
        %1504 = vmatpush.bf16.msra.mxu0 %v1430
        %1505 = vmatpush.bf16.msra.mxu0 %v1426
        %1506 = vmatpush.bf16.msra.mxu0 %v1422
        %1507 = vmatmul.bf16.gmra.mxu0 %v1282
        %v1508 = vpop.f32.mrf.mxu0
        %v1509 = vadd.f32 %v1318, %v1508
        %v1510 = vpop.f32.mrf.mxu0
        %v1511 = vadd.f32 %v1318, %v1510
        %1512 = vdwg.mxu0
        %1513 = vmatpush.bf16.msra.mxu0 %v1451
        %1514 = vmatpush.bf16.msra.mxu0 %v1447
        %1515 = vmatpush.bf16.msra.mxu0 %v1443
        %1516 = vmatpush.bf16.msra.mxu0 %v1439
        %1517 = vmatpush.bf16.msra.mxu0 %v1435
        %1518 = vmatpush.bf16.msra.mxu0 %v1431
        %1519 = vmatpush.bf16.msra.mxu0 %v1427
        %1520 = vmatpush.bf16.msra.mxu0 %v1423
        %1521 = vmatmul.bf16.gmra.mxu0 %v1282
        %v1522 = vpop.f32.mrf.mxu0
        %v1523 = vadd.f32 %v1319, %v1522
        %v1524 = vpop.f32.mrf.mxu0
        %v1525 = vadd.f32 %v1319, %v1524
        %1526 = vdwg.mxu0
        %1527 = vmatpush.bf16.msra.mxu0 %v1452
        %1528 = vmatpush.bf16.msra.mxu0 %v1448
        %1529 = vmatpush.bf16.msra.mxu0 %v1444
        %1530 = vmatpush.bf16.msra.mxu0 %v1440
        %1531 = vmatpush.bf16.msra.mxu0 %v1436
        %1532 = vmatpush.bf16.msra.mxu0 %v1432
        %1533 = vmatpush.bf16.msra.mxu0 %v1428
        %1534 = vmatpush.bf16.msra.mxu0 %v1424
        %1535 = vmatmul.bf16.gmra.mxu0 %v1282
        %v1536 = vpop.f32.mrf.mxu0
        %v1537 = vadd.f32 %v1320, %v1536
        %v1538 = vpop.f32.mrf.mxu0
        %v1539 = vadd.f32 %v1320, %v1538
        %1540 = vdwg.mxu0
        %v1541 = vld [vmem:[%s945] sm:$0xff]
        %v1542 = vld [vmem:[%s945 + $0x8] sm:$0xff]
        %v1543 = vld [vmem:[%s945 + $0x10] sm:$0xff]
        %v1544 = vld [vmem:[%s945 + $0x18] sm:$0xff]
        %v1545 = vld [vmem:[%s945 + $0x20] sm:$0xff]
        %v1546 = vld [vmem:[%s945 + $0x28] sm:$0xff]
        %v1547 = vld [vmem:[%s945 + $0x30] sm:$0xff]
        %v1548 = vld [vmem:[%s945 + $0x38] sm:$0xff]
        %v1549 = vld [vmem:[%s945 + $0x40] sm:$0xff]
        %v1550 = vld [vmem:[%s945 + $0x48] sm:$0xff]
        %v1551 = vld [vmem:[%s945 + $0x50] sm:$0xff]
        %v1552 = vld [vmem:[%s945 + $0x58] sm:$0xff]
        %v1553 = vld [vmem:[%s945 + $0x60] sm:$0xff]
        %v1554 = vld [vmem:[%s945 + $0x68] sm:$0xff]
        %v1555 = vld [vmem:[%s945 + $0x70] sm:$0xff]
        %v1556 = vld [vmem:[%s945 + $0x78] sm:$0xff]
        %v1557 = vld [vmem:[%s945 + $0x80] sm:$0xff]
        %v1558 = vld [vmem:[%s945 + $0x88] sm:$0xff]
        %v1559 = vld [vmem:[%s945 + $0x90] sm:$0xff]
        %v1560 = vld [vmem:[%s945 + $0x98] sm:$0xff]
        %v1561 = vld [vmem:[%s945 + $0xa0] sm:$0xff]
        %v1562 = vld [vmem:[%s945 + $0xa8] sm:$0xff]
        %v1563 = vld [vmem:[%s945 + $0xb0] sm:$0xff]
        %v1564 = vld [vmem:[%s945 + $0xb8] sm:$0xff]
        %v1565 = vld [vmem:[%s945 + $0xc0] sm:$0xff]
        %v1566 = vld [vmem:[%s945 + $0xc8] sm:$0xff]
        %v1567 = vld [vmem:[%s945 + $0xd0] sm:$0xff]
        %v1568 = vld [vmem:[%s945 + $0xd8] sm:$0xff]
        %v1569 = vld [vmem:[%s945 + $0xe0] sm:$0xff]
        %v1570 = vld [vmem:[%s945 + $0xe8] sm:$0xff]
        %v1571 = vld [vmem:[%s945 + $0xf0] sm:$0xff]
        %v1572 = vld [vmem:[%s945 + $0xf8] sm:$0xff]
        %v1573 = vld [vmem:[%s1172] sm:$0xf]
        %v1575 = vperm.slane %v1573, 0
        %v1576 = vperm.slane %v1573, 1
        %v1577 = vperm.slane %v1573, 2
        %v1578 = vperm.slane %v1573, 3
        %v1615 = vunpack.c.l.b16 %v1541
        %v1616 = vunpack.c.h.b16 %v1541
        %v1617 = vunpack.c.l.b16 %v1542
        %v1618 = vunpack.c.h.b16 %v1542
        %v1619 = vunpack.c.l.b16 %v1543
        %v1620 = vunpack.c.h.b16 %v1543
        %v1621 = vunpack.c.l.b16 %v1544
        %v1622 = vunpack.c.h.b16 %v1544
        %v1623 = vunpack.c.l.b16 %v1545
        %v1624 = vunpack.c.h.b16 %v1545
        %v1625 = vunpack.c.l.b16 %v1546
        %v1626 = vunpack.c.h.b16 %v1546
        %v1627 = vunpack.c.l.b16 %v1547
        %v1628 = vunpack.c.h.b16 %v1547
        %v1629 = vunpack.c.l.b16 %v1548
        %v1630 = vunpack.c.h.b16 %v1548
        %v1631 = vunpack.c.l.b16 %v1549
        %v1632 = vunpack.c.h.b16 %v1549
        %v1633 = vunpack.c.l.b16 %v1550
        %v1634 = vunpack.c.h.b16 %v1550
        %v1635 = vunpack.c.l.b16 %v1551
        %v1636 = vunpack.c.h.b16 %v1551
        %v1637 = vunpack.c.l.b16 %v1552
        %v1638 = vunpack.c.h.b16 %v1552
        %v1639 = vunpack.c.l.b16 %v1553
        %v1640 = vunpack.c.h.b16 %v1553
        %v1641 = vunpack.c.l.b16 %v1554
        %v1642 = vunpack.c.h.b16 %v1554
        %v1643 = vunpack.c.l.b16 %v1555
        %v1644 = vunpack.c.h.b16 %v1555
        %v1645 = vunpack.c.l.b16 %v1556
        %v1646 = vunpack.c.h.b16 %v1556
        %v1647 = vunpack.c.l.b16 %v1557
        %v1648 = vunpack.c.h.b16 %v1557
        %v1649 = vunpack.c.l.b16 %v1558
        %v1650 = vunpack.c.h.b16 %v1558
        %v1651 = vunpack.c.l.b16 %v1559
        %v1652 = vunpack.c.h.b16 %v1559
        %v1653 = vunpack.c.l.b16 %v1560
        %v1654 = vunpack.c.h.b16 %v1560
        %v1655 = vunpack.c.l.b16 %v1561
        %v1656 = vunpack.c.h.b16 %v1561
        %v1657 = vunpack.c.l.b16 %v1562
        %v1658 = vunpack.c.h.b16 %v1562
        %v1659 = vunpack.c.l.b16 %v1563
        %v1660 = vunpack.c.h.b16 %v1563
        %v1661 = vunpack.c.l.b16 %v1564
        %v1662 = vunpack.c.h.b16 %v1564
        %v1663 = vunpack.c.l.b16 %v1565
        %v1664 = vunpack.c.h.b16 %v1565
        %v1665 = vunpack.c.l.b16 %v1566
        %v1666 = vunpack.c.h.b16 %v1566
        %v1667 = vunpack.c.l.b16 %v1567
        %v1668 = vunpack.c.h.b16 %v1567
        %v1669 = vunpack.c.l.b16 %v1568
        %v1670 = vunpack.c.h.b16 %v1568
        %v1671 = vunpack.c.l.b16 %v1569
        %v1672 = vunpack.c.h.b16 %v1569
        %v1673 = vunpack.c.l.b16 %v1570
        %v1674 = vunpack.c.h.b16 %v1570
        %v1675 = vunpack.c.l.b16 %v1571
        %v1676 = vunpack.c.h.b16 %v1571
        %v1677 = vunpack.c.l.b16 %v1572
        %v1678 = vunpack.c.h.b16 %v1572
        %v1679 = vpack.c.b16 %v1619, %v1615
        %v1680 = vpack.c.b16 %v1620, %v1616
        %v1681 = vpack.c.b16 %v1621, %v1617
        %v1682 = vpack.c.b16 %v1622, %v1618
        %v1683 = vpack.c.b16 %v1627, %v1623
        %v1684 = vpack.c.b16 %v1628, %v1624
        %v1685 = vpack.c.b16 %v1629, %v1625
        %v1686 = vpack.c.b16 %v1630, %v1626
        %v1687 = vpack.c.b16 %v1635, %v1631
        %v1688 = vpack.c.b16 %v1636, %v1632
        %v1689 = vpack.c.b16 %v1637, %v1633
        %v1690 = vpack.c.b16 %v1638, %v1634
        %v1691 = vpack.c.b16 %v1643, %v1639
        %v1692 = vpack.c.b16 %v1644, %v1640
        %v1693 = vpack.c.b16 %v1645, %v1641
        %v1694 = vpack.c.b16 %v1646, %v1642
        %v1695 = vpack.c.b16 %v1651, %v1647
        %v1696 = vpack.c.b16 %v1652, %v1648
        %v1697 = vpack.c.b16 %v1653, %v1649
        %v1698 = vpack.c.b16 %v1654, %v1650
        %v1699 = vpack.c.b16 %v1659, %v1655
        %v1700 = vpack.c.b16 %v1660, %v1656
        %v1701 = vpack.c.b16 %v1661, %v1657
        %v1702 = vpack.c.b16 %v1662, %v1658
        %v1703 = vpack.c.b16 %v1667, %v1663
        %v1704 = vpack.c.b16 %v1668, %v1664
        %v1705 = vpack.c.b16 %v1669, %v1665
        %v1706 = vpack.c.b16 %v1670, %v1666
        %v1707 = vpack.c.b16 %v1675, %v1671
        %v1708 = vpack.c.b16 %v1676, %v1672
        %v1709 = vpack.c.b16 %v1677, %v1673
        %v1710 = vpack.c.b16 %v1678, %v1674
        %1743 = vmatpush.bf16.msra.mxu0 %v1707
        %1744 = vmatpush.bf16.msra.mxu0 %v1703
        %1745 = vmatpush.bf16.msra.mxu0 %v1699
        %1746 = vmatpush.bf16.msra.mxu0 %v1695
        %1747 = vmatpush.bf16.msra.mxu0 %v1691
        %1748 = vmatpush.bf16.msra.mxu0 %v1687
        %1749 = vmatpush.bf16.msra.mxu0 %v1683
        %1750 = vmatpush.bf16.msra.mxu0 %v1679
        %1751 = vmatmul.bf16.gmra.mxu0 %v1282
        %v1752 = vpop.f32.mrf.mxu0
        %v1753 = vadd.f32 %v1575, %v1752
        %v1754 = vpop.f32.mrf.mxu0
        %v1755 = vadd.f32 %v1575, %v1754
        %1756 = vdwg.mxu0
        %1757 = vmatpush.bf16.msra.mxu0 %v1708
        %1758 = vmatpush.bf16.msra.mxu0 %v1704
        %1759 = vmatpush.bf16.msra.mxu0 %v1700
        %1760 = vmatpush.bf16.msra.mxu0 %v1696
        %1761 = vmatpush.bf16.msra.mxu0 %v1692
        %1762 = vmatpush.bf16.msra.mxu0 %v1688
        %1763 = vmatpush.bf16.msra.mxu0 %v1684
        %1764 = vmatpush.bf16.msra.mxu0 %v1680
        %1765 = vmatmul.bf16.gmra.mxu0 %v1282
        %v1766 = vpop.f32.mrf.mxu0
        %v1767 = vadd.f32 %v1576, %v1766
        %v1768 = vpop.f32.mrf.mxu0
        %v1769 = vadd.f32 %v1576, %v1768
        %1770 = vdwg.mxu0
        %1771 = vmatpush.bf16.msra.mxu0 %v1709
        %1772 = vmatpush.bf16.msra.mxu0 %v1705
        %1773 = vmatpush.bf16.msra.mxu0 %v1701
        %1774 = vmatpush.bf16.msra.mxu0 %v1697
        %1775 = vmatpush.bf16.msra.mxu0 %v1693
        %1776 = vmatpush.bf16.msra.mxu0 %v1689
        %1777 = vmatpush.bf16.msra.mxu0 %v1685
        %1778 = vmatpush.bf16.msra.mxu0 %v1681
        %1779 = vmatmul.bf16.gmra.mxu0 %v1282
        %v1780 = vpop.f32.mrf.mxu0
        %v1781 = vadd.f32 %v1577, %v1780
        %v1782 = vpop.f32.mrf.mxu0
        %v1783 = vadd.f32 %v1577, %v1782
        %1784 = vdwg.mxu0
        %1785 = vmatpush.bf16.msra.mxu0 %v1710
        %1786 = vmatpush.bf16.msra.mxu0 %v1706
        %1787 = vmatpush.bf16.msra.mxu0 %v1702
        %1788 = vmatpush.bf16.msra.mxu0 %v1698
        %1789 = vmatpush.bf16.msra.mxu0 %v1694
        %1790 = vmatpush.bf16.msra.mxu0 %v1690
        %1791 = vmatpush.bf16.msra.mxu0 %v1686
        %1792 = vmatpush.bf16.msra.mxu0 %v1682
        %1793 = vmatmul.bf16.gmra.mxu0 %v1282
        %v1794 = vpop.f32.mrf.mxu0
        %v1795 = vadd.f32 %v1578, %v1794
        %v1796 = vpop.f32.mrf.mxu0
        %v1797 = vadd.f32 %v1578, %v1796
        %1798 = vdwg.mxu0
        %v1799 = vld [vmem:[%s955] sm:$0xff]
        %v1800 = vld [vmem:[%s955 + $0x8] sm:$0xff]
        %v1801 = vld [vmem:[%s955 + $0x10] sm:$0xff]
        %v1802 = vld [vmem:[%s955 + $0x18] sm:$0xff]
        %v1803 = vld [vmem:[%s955 + $0x20] sm:$0xff]
        %v1804 = vld [vmem:[%s955 + $0x28] sm:$0xff]
        %v1805 = vld [vmem:[%s955 + $0x30] sm:$0xff]
        %v1806 = vld [vmem:[%s955 + $0x38] sm:$0xff]
        %v1807 = vld [vmem:[%s955 + $0x40] sm:$0xff]
        %v1808 = vld [vmem:[%s955 + $0x48] sm:$0xff]
        %v1809 = vld [vmem:[%s955 + $0x50] sm:$0xff]
        %v1810 = vld [vmem:[%s955 + $0x58] sm:$0xff]
        %v1811 = vld [vmem:[%s955 + $0x60] sm:$0xff]
        %v1812 = vld [vmem:[%s955 + $0x68] sm:$0xff]
        %v1813 = vld [vmem:[%s955 + $0x70] sm:$0xff]
        %v1814 = vld [vmem:[%s955 + $0x78] sm:$0xff]
        %v1815 = vld [vmem:[%s955 + $0x80] sm:$0xff]
        %v1816 = vld [vmem:[%s955 + $0x88] sm:$0xff]
        %v1817 = vld [vmem:[%s955 + $0x90] sm:$0xff]
        %v1818 = vld [vmem:[%s955 + $0x98] sm:$0xff]
        %v1819 = vld [vmem:[%s955 + $0xa0] sm:$0xff]
        %v1820 = vld [vmem:[%s955 + $0xa8] sm:$0xff]
        %v1821 = vld [vmem:[%s955 + $0xb0] sm:$0xff]
        %v1822 = vld [vmem:[%s955 + $0xb8] sm:$0xff]
        %v1823 = vld [vmem:[%s955 + $0xc0] sm:$0xff]
        %v1824 = vld [vmem:[%s955 + $0xc8] sm:$0xff]
        %v1825 = vld [vmem:[%s955 + $0xd0] sm:$0xff]
        %v1826 = vld [vmem:[%s955 + $0xd8] sm:$0xff]
        %v1827 = vld [vmem:[%s955 + $0xe0] sm:$0xff]
        %v1828 = vld [vmem:[%s955 + $0xe8] sm:$0xff]
        %v1829 = vld [vmem:[%s955 + $0xf0] sm:$0xff]
        %v1830 = vld [vmem:[%s955 + $0xf8] sm:$0xff]
        %v1831 = vld [vmem:[%s965] sm:$0xf]
        %v1833 = vperm.slane %v1831, 0
        %v1834 = vperm.slane %v1831, 1
        %v1835 = vperm.slane %v1831, 2
        %v1836 = vperm.slane %v1831, 3
        %v1873 = vunpack.c.l.b16 %v1799
        %v1874 = vunpack.c.h.b16 %v1799
        %v1875 = vunpack.c.l.b16 %v1800
        %v1876 = vunpack.c.h.b16 %v1800
        %v1877 = vunpack.c.l.b16 %v1801
        %v1878 = vunpack.c.h.b16 %v1801
        %v1879 = vunpack.c.l.b16 %v1802
        %v1880 = vunpack.c.h.b16 %v1802
        %v1881 = vunpack.c.l.b16 %v1803
        %v1882 = vunpack.c.h.b16 %v1803
        %v1883 = vunpack.c.l.b16 %v1804
        %v1884 = vunpack.c.h.b16 %v1804
        %v1885 = vunpack.c.l.b16 %v1805
        %v1886 = vunpack.c.h.b16 %v1805
        %v1887 = vunpack.c.l.b16 %v1806
        %v1888 = vunpack.c.h.b16 %v1806
        %v1889 = vunpack.c.l.b16 %v1807
        %v1890 = vunpack.c.h.b16 %v1807
        %v1891 = vunpack.c.l.b16 %v1808
        %v1892 = vunpack.c.h.b16 %v1808
        %v1893 = vunpack.c.l.b16 %v1809
        %v1894 = vunpack.c.h.b16 %v1809
        %v1895 = vunpack.c.l.b16 %v1810
        %v1896 = vunpack.c.h.b16 %v1810
        %v1897 = vunpack.c.l.b16 %v1811
        %v1898 = vunpack.c.h.b16 %v1811
        %v1899 = vunpack.c.l.b16 %v1812
        %v1900 = vunpack.c.h.b16 %v1812
        %v1901 = vunpack.c.l.b16 %v1813
        %v1902 = vunpack.c.h.b16 %v1813
        %v1903 = vunpack.c.l.b16 %v1814
        %v1904 = vunpack.c.h.b16 %v1814
        %v1905 = vunpack.c.l.b16 %v1815
        %v1906 = vunpack.c.h.b16 %v1815
        %v1907 = vunpack.c.l.b16 %v1816
        %v1908 = vunpack.c.h.b16 %v1816
        %v1909 = vunpack.c.l.b16 %v1817
        %v1910 = vunpack.c.h.b16 %v1817
        %v1911 = vunpack.c.l.b16 %v1818
        %v1912 = vunpack.c.h.b16 %v1818
        %v1913 = vunpack.c.l.b16 %v1819
        %v1914 = vunpack.c.h.b16 %v1819
        %v1915 = vunpack.c.l.b16 %v1820
        %v1916 = vunpack.c.h.b16 %v1820
        %v1917 = vunpack.c.l.b16 %v1821
        %v1918 = vunpack.c.h.b16 %v1821
        %v1919 = vunpack.c.l.b16 %v1822
        %v1920 = vunpack.c.h.b16 %v1822
        %v1921 = vunpack.c.l.b16 %v1823
        %v1922 = vunpack.c.h.b16 %v1823
        %v1923 = vunpack.c.l.b16 %v1824
        %v1924 = vunpack.c.h.b16 %v1824
        %v1925 = vunpack.c.l.b16 %v1825
        %v1926 = vunpack.c.h.b16 %v1825
        %v1927 = vunpack.c.l.b16 %v1826
        %v1928 = vunpack.c.h.b16 %v1826
        %v1929 = vunpack.c.l.b16 %v1827
        %v1930 = vunpack.c.h.b16 %v1827
        %v1931 = vunpack.c.l.b16 %v1828
        %v1932 = vunpack.c.h.b16 %v1828
        %v1933 = vunpack.c.l.b16 %v1829
        %v1934 = vunpack.c.h.b16 %v1829
        %v1935 = vunpack.c.l.b16 %v1830
        %v1936 = vunpack.c.h.b16 %v1830
        %v1937 = vpack.c.b16 %v1877, %v1873
        %v1938 = vpack.c.b16 %v1878, %v1874
        %v1939 = vpack.c.b16 %v1879, %v1875
        %v1940 = vpack.c.b16 %v1880, %v1876
        %v1941 = vpack.c.b16 %v1885, %v1881
        %v1942 = vpack.c.b16 %v1886, %v1882
        %v1943 = vpack.c.b16 %v1887, %v1883
        %v1944 = vpack.c.b16 %v1888, %v1884
        %v1945 = vpack.c.b16 %v1893, %v1889
        %v1946 = vpack.c.b16 %v1894, %v1890
        %v1947 = vpack.c.b16 %v1895, %v1891
        %v1948 = vpack.c.b16 %v1896, %v1892
        %v1949 = vpack.c.b16 %v1901, %v1897
        %v1950 = vpack.c.b16 %v1902, %v1898
        %v1951 = vpack.c.b16 %v1903, %v1899
        %v1952 = vpack.c.b16 %v1904, %v1900
        %v1953 = vpack.c.b16 %v1909, %v1905
        %v1954 = vpack.c.b16 %v1910, %v1906
        %v1955 = vpack.c.b16 %v1911, %v1907
        %v1956 = vpack.c.b16 %v1912, %v1908
        %v1957 = vpack.c.b16 %v1917, %v1913
        %v1958 = vpack.c.b16 %v1918, %v1914
        %v1959 = vpack.c.b16 %v1919, %v1915
        %v1960 = vpack.c.b16 %v1920, %v1916
        %v1961 = vpack.c.b16 %v1925, %v1921
        %v1962 = vpack.c.b16 %v1926, %v1922
        %v1963 = vpack.c.b16 %v1927, %v1923
        %v1964 = vpack.c.b16 %v1928, %v1924
        %v1965 = vpack.c.b16 %v1933, %v1929
        %v1966 = vpack.c.b16 %v1934, %v1930
        %v1967 = vpack.c.b16 %v1935, %v1931
        %v1968 = vpack.c.b16 %v1936, %v1932
        %2001 = vmatpush.bf16.msra.mxu0 %v1965
        %2002 = vmatpush.bf16.msra.mxu0 %v1961
        %2003 = vmatpush.bf16.msra.mxu0 %v1957
        %2004 = vmatpush.bf16.msra.mxu0 %v1953
        %2005 = vmatpush.bf16.msra.mxu0 %v1949
        %2006 = vmatpush.bf16.msra.mxu0 %v1945
        %2007 = vmatpush.bf16.msra.mxu0 %v1941
        %2008 = vmatpush.bf16.msra.mxu0 %v1937
        %2009 = vmatmul.bf16.gmra.mxu0 %v1282
        %v2010 = vpop.f32.mrf.mxu0
        %v2011 = vadd.f32 %v1833, %v2010
        %v2012 = vpop.f32.mrf.mxu0
        %v2013 = vadd.f32 %v1833, %v2012
        %2014 = vdwg.mxu0
        %2015 = vmatpush.bf16.msra.mxu0 %v1966
        %2016 = vmatpush.bf16.msra.mxu0 %v1962
        %2017 = vmatpush.bf16.msra.mxu0 %v1958
        %2018 = vmatpush.bf16.msra.mxu0 %v1954
        %2019 = vmatpush.bf16.msra.mxu0 %v1950
        %2020 = vmatpush.bf16.msra.mxu0 %v1946
        %2021 = vmatpush.bf16.msra.mxu0 %v1942
        %2022 = vmatpush.bf16.msra.mxu0 %v1938
        %2023 = vmatmul.bf16.gmra.mxu0 %v1282
        %v2024 = vpop.f32.mrf.mxu0
        %v2025 = vadd.f32 %v1834, %v2024
        %v2026 = vpop.f32.mrf.mxu0
        %v2027 = vadd.f32 %v1834, %v2026
        %2028 = vdwg.mxu0
        %2029 = vmatpush.bf16.msra.mxu0 %v1967
        %2030 = vmatpush.bf16.msra.mxu0 %v1963
        %2031 = vmatpush.bf16.msra.mxu0 %v1959
        %2032 = vmatpush.bf16.msra.mxu0 %v1955
        %2033 = vmatpush.bf16.msra.mxu0 %v1951
        %2034 = vmatpush.bf16.msra.mxu0 %v1947
        %2035 = vmatpush.bf16.msra.mxu0 %v1943
        %2036 = vmatpush.bf16.msra.mxu0 %v1939
        %2037 = vmatmul.bf16.gmra.mxu0 %v1282
        %v2038 = vpop.f32.mrf.mxu0
        %v2039 = vadd.f32 %v1835, %v2038
        %v2040 = vpop.f32.mrf.mxu0
        %v2041 = vadd.f32 %v1835, %v2040
        %2042 = vdwg.mxu0
        %2043 = vmatpush.bf16.msra.mxu0 %v1968
        %2044 = vmatpush.bf16.msra.mxu0 %v1964
        %2045 = vmatpush.bf16.msra.mxu0 %v1960
        %2046 = vmatpush.bf16.msra.mxu0 %v1956
        %2047 = vmatpush.bf16.msra.mxu0 %v1952
        %2048 = vmatpush.bf16.msra.mxu0 %v1948
        %2049 = vmatpush.bf16.msra.mxu0 %v1944
        %2050 = vmatpush.bf16.msra.mxu0 %v1940
        %2051 = vmatmul.bf16.gmra.mxu0 %v1282
        %v2052 = vpop.f32.mrf.mxu0
        %v2053 = vadd.f32 %v1836, %v2052
        %v2054 = vpop.f32.mrf.mxu0
        %v2055 = vadd.f32 %v1836, %v2054
        %2056 = vdwg.mxu0
        %v2057 = vld [vmem:[%s2] sm:$0x3]
        %2058 = vmatpush.xpose.msra.mxu0 0.0
        %2059 = vmatpush.xpose.msra.mxu0 0.0
        %2060 = vmatpush.xpose.msra.mxu0 0.0
        %2061 = vmatpush.xpose.msra.mxu0 0.0
        %2062 = vmatpush.xpose.msra.mxu0 0.0
        %2063 = vmatpush.xpose.msra.mxu0 0.0
        %2064 = vmatpush.xpose.msra.mxu0 0.0
        %2065 = vmatpush.xpose.msra.mxu0 0.0
        %2066 = vmatpush.xpose.msra.mxu0 0.0
        %2067 = vmatpush.xpose.msra.mxu0 0.0
        %2068 = vmatpush.xpose.msra.mxu0 0.0
        %2069 = vmatpush.xpose.msra.mxu0 0.0
        %2070 = vmatpush.xpose.msra.mxu0 0.0
        %2071 = vmatpush.xpose.msra.mxu0 0.0
        %2072 = vmatpush.xpose.msra.mxu0 0.0
        %2073 = vmatpush.xpose.msra.mxu0 %v1753
        %2074 = vmatmul.f32.gmra.mxu0 %v1495
        %v2075 = vpop.f32.mrf.mxu0
        %v2076 = vadd.f32 0.0, %v2075
        %2077 = vdwg.mxu0
        %2078 = vmatpush.xpose.msra.mxu0 0.0
        %2079 = vmatpush.xpose.msra.mxu0 0.0
        %2080 = vmatpush.xpose.msra.mxu0 0.0
        %2081 = vmatpush.xpose.msra.mxu0 0.0
        %2082 = vmatpush.xpose.msra.mxu0 0.0
        %2083 = vmatpush.xpose.msra.mxu0 0.0
        %2084 = vmatpush.xpose.msra.mxu0 0.0
        %2085 = vmatpush.xpose.msra.mxu0 0.0
        %2086 = vmatpush.xpose.msra.mxu0 0.0
        %2087 = vmatpush.xpose.msra.mxu0 0.0
        %2088 = vmatpush.xpose.msra.mxu0 0.0
        %2089 = vmatpush.xpose.msra.mxu0 0.0
        %2090 = vmatpush.xpose.msra.mxu0 0.0
        %2091 = vmatpush.xpose.msra.mxu0 0.0
        %2092 = vmatpush.xpose.msra.mxu0 0.0
        %2093 = vmatpush.xpose.msra.mxu0 %v1767
        %2094 = vmatmul.f32.gmra.mxu0 %v1509
        %v2095 = vpop.f32.mrf.mxu0
        %v2096 = vadd.f32 %v2076, %v2095
        %2097 = vdwg.mxu0
        %v2098 = vmul.f32 %v2096, 0.0625
        %v2099 = vperm.slane %v2057, 0
        %v2100 = vadd.f32 %v2098, %v2099
        %vm2101 = vcmask 64512
        %v2102 = vsel %vm2101, %v2100, -inf
        %2103 = vmax.xlane.f32.xlu0 %v2102
        %v2104 = vpop.xlane.xlu0 %2103
        %v2105 = vsub.f32 %v2100, %v2104
        %v2106 = vmul.f32 %v2105, 1.442695
        %v2107 = vpow.pop %v2106
        %v2108 = vsel %vm2101, %v2107, 0.0
        %2109 = vadd.xlane.f32.xlu0 %v2108
        %v2110 = vpop.xlane.xlu0 %2109
        %v2111 = vrcp.pop %v2110
        %v2112 = vmul.f32 %v2107, %v2111
        %v2114 = vsel %vm2101, %v2112, 0
        %2116 = vmatpush.msra.mxu0 0.0
        %2117 = vmatpush.msra.mxu0 0.0
        %2118 = vmatpush.msra.mxu0 0.0
        %2119 = vmatpush.msra.mxu0 0.0
        %2120 = vmatpush.msra.mxu0 0.0
        %2121 = vmatpush.msra.mxu0 0.0
        %2122 = vmatpush.msra.mxu0 0.0
        %2123 = vmatpush.msra.mxu0 0.0
        %2124 = vmatpush.msra.mxu0 0.0
        %2125 = vmatpush.msra.mxu0 0.0
        %2126 = vmatpush.msra.mxu0 0.0
        %2127 = vmatpush.msra.mxu0 0.0
        %2128 = vmatpush.msra.mxu0 0.0
        %2129 = vmatpush.msra.mxu0 0.0
        %2130 = vmatpush.msra.mxu0 0.0
        %2131 = vmatpush.msra.mxu0 %v2011
        %2132 = vmatmul.f32.gmra.mxu0 %v2114
        %v2133 = vpop.f32.mrf.mxu0
        %v2134 = vadd.f32 0.0, %v2133
        %2135 = vdwg.mxu0
        %2136 = vmatpush.msra.mxu0 0.0
        %2137 = vmatpush.msra.mxu0 0.0
        %2138 = vmatpush.msra.mxu0 0.0
        %2139 = vmatpush.msra.mxu0 0.0
        %2140 = vmatpush.msra.mxu0 0.0
        %2141 = vmatpush.msra.mxu0 0.0
        %2142 = vmatpush.msra.mxu0 0.0
        %2143 = vmatpush.msra.mxu0 0.0
        %2144 = vmatpush.msra.mxu0 0.0
        %2145 = vmatpush.msra.mxu0 0.0
        %2146 = vmatpush.msra.mxu0 0.0
        %2147 = vmatpush.msra.mxu0 0.0
        %2148 = vmatpush.msra.mxu0 0.0
        %2149 = vmatpush.msra.mxu0 0.0
        %2150 = vmatpush.msra.mxu0 0.0
        %2151 = vmatpush.msra.mxu0 %v2025
        %2152 = vmatmul.f32.gmra.mxu0 %v2114
        %v2153 = vpop.f32.mrf.mxu0
        %v2154 = vadd.f32 0.0, %v2153
        %2155 = vdwg.mxu0
        %2156 = vst [vmem:[#allocation2] sm:$0xff] %v2134
        %2157 = vst [vmem:[#allocation2 + $0x8] sm:$0xff] %v2154
        %2158 = vmatpush.xpose.msra.mxu0 0.0
        %2159 = vmatpush.xpose.msra.mxu0 0.0
        %2160 = vmatpush.xpose.msra.mxu0 0.0
        %2161 = vmatpush.xpose.msra.mxu0 0.0
        %2162 = vmatpush.xpose.msra.mxu0 0.0
        %2163 = vmatpush.xpose.msra.mxu0 0.0
        %2164 = vmatpush.xpose.msra.mxu0 0.0
        %2165 = vmatpush.xpose.msra.mxu0 0.0
        %2166 = vmatpush.xpose.msra.mxu0 0.0
        %2167 = vmatpush.xpose.msra.mxu0 0.0
        %2168 = vmatpush.xpose.msra.mxu0 0.0
        %2169 = vmatpush.xpose.msra.mxu0 0.0
        %2170 = vmatpush.xpose.msra.mxu0 0.0
        %2171 = vmatpush.xpose.msra.mxu0 0.0
        %2172 = vmatpush.xpose.msra.mxu0 0.0
        %2173 = vmatpush.xpose.msra.mxu0 %v1781
        %2174 = vmatmul.f32.gmra.mxu0 %v1523
        %v2175 = vpop.f32.mrf.mxu0
        %v2176 = vadd.f32 0.0, %v2175
        %2177 = vdwg.mxu0
        %2178 = vmatpush.xpose.msra.mxu0 0.0
        %2179 = vmatpush.xpose.msra.mxu0 0.0
        %2180 = vmatpush.xpose.msra.mxu0 0.0
        %2181 = vmatpush.xpose.msra.mxu0 0.0
        %2182 = vmatpush.xpose.msra.mxu0 0.0
        %2183 = vmatpush.xpose.msra.mxu0 0.0
        %2184 = vmatpush.xpose.msra.mxu0 0.0
        %2185 = vmatpush.xpose.msra.mxu0 0.0
        %2186 = vmatpush.xpose.msra.mxu0 0.0
        %2187 = vmatpush.xpose.msra.mxu0 0.0
        %2188 = vmatpush.xpose.msra.mxu0 0.0
        %2189 = vmatpush.xpose.msra.mxu0 0.0
        %2190 = vmatpush.xpose.msra.mxu0 0.0
        %2191 = vmatpush.xpose.msra.mxu0 0.0
        %2192 = vmatpush.xpose.msra.mxu0 0.0
        %2193 = vmatpush.xpose.msra.mxu0 %v1795
        %2194 = vmatmul.f32.gmra.mxu0 %v1537
        %v2195 = vpop.f32.mrf.mxu0
        %v2196 = vadd.f32 %v2176, %v2195
        %2197 = vdwg.mxu0
        %v2198 = vmul.f32 %v2196, 0.0625
        %v2199 = vadd.f32 %v2198, %v2099
        %v2200 = vsel %vm2101, %v2199, -inf
        %2201 = vmax.xlane.f32.xlu0 %v2200
        %v2202 = vpop.xlane.xlu0 %2201
        %v2203 = vsub.f32 %v2199, %v2202
        %v2204 = vmul.f32 %v2203, 1.442695
        %v2205 = vpow.pop %v2204
        %v2206 = vsel %vm2101, %v2205, 0.0
        %2207 = vadd.xlane.f32.xlu0 %v2206
        %v2208 = vpop.xlane.xlu0 %2207
        %v2209 = vrcp.pop %v2208
        %v2210 = vmul.f32 %v2205, %v2209
        %v2212 = vsel %vm2101, %v2210, 0
        %2214 = vmatpush.msra.mxu0 0.0
        %2215 = vmatpush.msra.mxu0 0.0
        %2216 = vmatpush.msra.mxu0 0.0
        %2217 = vmatpush.msra.mxu0 0.0
        %2218 = vmatpush.msra.mxu0 0.0
        %2219 = vmatpush.msra.mxu0 0.0
        %2220 = vmatpush.msra.mxu0 0.0
        %2221 = vmatpush.msra.mxu0 0.0
        %2222 = vmatpush.msra.mxu0 0.0
        %2223 = vmatpush.msra.mxu0 0.0
        %2224 = vmatpush.msra.mxu0 0.0
        %2225 = vmatpush.msra.mxu0 0.0
        %2226 = vmatpush.msra.mxu0 0.0
        %2227 = vmatpush.msra.mxu0 0.0
        %2228 = vmatpush.msra.mxu0 0.0
        %2229 = vmatpush.msra.mxu0 %v2039
        %2230 = vmatmul.f32.gmra.mxu0 %v2212
        %v2231 = vpop.f32.mrf.mxu0
        %v2232 = vadd.f32 0.0, %v2231
        %2233 = vdwg.mxu0
        %2234 = vmatpush.msra.mxu0 0.0
        %2235 = vmatpush.msra.mxu0 0.0
        %2236 = vmatpush.msra.mxu0 0.0
        %2237 = vmatpush.msra.mxu0 0.0
        %2238 = vmatpush.msra.mxu0 0.0
        %2239 = vmatpush.msra.mxu0 0.0
        %2240 = vmatpush.msra.mxu0 0.0
        %2241 = vmatpush.msra.mxu0 0.0
        %2242 = vmatpush.msra.mxu0 0.0
        %2243 = vmatpush.msra.mxu0 0.0
        %2244 = vmatpush.msra.mxu0 0.0
        %2245 = vmatpush.msra.mxu0 0.0
        %2246 = vmatpush.msra.mxu0 0.0
        %2247 = vmatpush.msra.mxu0 0.0
        %2248 = vmatpush.msra.mxu0 0.0
        %2249 = vmatpush.msra.mxu0 %v2053
        %2250 = vmatmul.f32.gmra.mxu0 %v2212
        %v2251 = vpop.f32.mrf.mxu0
        %v2252 = vadd.f32 0.0, %v2251
        %2253 = vdwg.mxu0
        %2254 = vst [vmem:[#allocation2 + $0x10] sm:$0xff] %v2232
        %2255 = vst [vmem:[#allocation2 + $0x18] sm:$0xff] %v2252
        %2256 = vmatpush.xpose.msra.mxu0 0.0
        %2257 = vmatpush.xpose.msra.mxu0 0.0
        %2258 = vmatpush.xpose.msra.mxu0 0.0
        %2259 = vmatpush.xpose.msra.mxu0 0.0
        %2260 = vmatpush.xpose.msra.mxu0 0.0
        %2261 = vmatpush.xpose.msra.mxu0 0.0
        %2262 = vmatpush.xpose.msra.mxu0 0.0
        %2263 = vmatpush.xpose.msra.mxu0 0.0
        %2264 = vmatpush.xpose.msra.mxu0 0.0
        %2265 = vmatpush.xpose.msra.mxu0 0.0
        %2266 = vmatpush.xpose.msra.mxu0 0.0
        %2267 = vmatpush.xpose.msra.mxu0 0.0
        %2268 = vmatpush.xpose.msra.mxu0 0.0
        %2269 = vmatpush.xpose.msra.mxu0 0.0
        %2270 = vmatpush.xpose.msra.mxu0 0.0
        %2271 = vmatpush.xpose.msra.mxu0 %v1755
        %2272 = vmatmul.f32.gmra.mxu0 %v1497
        %v2273 = vpop.f32.mrf.mxu0
        %v2274 = vadd.f32 0.0, %v2273
        %2275 = vdwg.mxu0
        %2276 = vmatpush.xpose.msra.mxu0 0.0
        %2277 = vmatpush.xpose.msra.mxu0 0.0
        %2278 = vmatpush.xpose.msra.mxu0 0.0
        %2279 = vmatpush.xpose.msra.mxu0 0.0
        %2280 = vmatpush.xpose.msra.mxu0 0.0
        %2281 = vmatpush.xpose.msra.mxu0 0.0
        %2282 = vmatpush.xpose.msra.mxu0 0.0
        %2283 = vmatpush.xpose.msra.mxu0 0.0
        %2284 = vmatpush.xpose.msra.mxu0 0.0
        %2285 = vmatpush.xpose.msra.mxu0 0.0
        %2286 = vmatpush.xpose.msra.mxu0 0.0
        %2287 = vmatpush.xpose.msra.mxu0 0.0
        %2288 = vmatpush.xpose.msra.mxu0 0.0
        %2289 = vmatpush.xpose.msra.mxu0 0.0
        %2290 = vmatpush.xpose.msra.mxu0 0.0
        %2291 = vmatpush.xpose.msra.mxu0 %v1769
        %2292 = vmatmul.f32.gmra.mxu0 %v1511
        %v2293 = vpop.f32.mrf.mxu0
        %v2294 = vadd.f32 %v2274, %v2293
        %2295 = vdwg.mxu0
        %v2296 = vmul.f32 %v2294, 0.0625
        %v2297 = vperm.slane %v2057, 1
        %v2298 = vadd.f32 %v2296, %v2297
        %v2299 = vsel %vm2101, %v2298, -inf
        %2300 = vmax.xlane.f32.xlu0 %v2299
        %v2301 = vpop.xlane.xlu0 %2300
        %v2302 = vsub.f32 %v2298, %v2301
        %v2303 = vmul.f32 %v2302, 1.442695
        %v2304 = vpow.pop %v2303
        %v2305 = vsel %vm2101, %v2304, 0.0
        %2306 = vadd.xlane.f32.xlu0 %v2305
        %v2307 = vpop.xlane.xlu0 %2306
        %v2308 = vrcp.pop %v2307
        %v2309 = vmul.f32 %v2304, %v2308
        %v2311 = vsel %vm2101, %v2309, 0
        %2313 = vmatpush.msra.mxu0 0.0
        %2314 = vmatpush.msra.mxu0 0.0
        %2315 = vmatpush.msra.mxu0 0.0
        %2316 = vmatpush.msra.mxu0 0.0
        %2317 = vmatpush.msra.mxu0 0.0
        %2318 = vmatpush.msra.mxu0 0.0
        %2319 = vmatpush.msra.mxu0 0.0
        %2320 = vmatpush.msra.mxu0 0.0
        %2321 = vmatpush.msra.mxu0 0.0
        %2322 = vmatpush.msra.mxu0 0.0
        %2323 = vmatpush.msra.mxu0 0.0
        %2324 = vmatpush.msra.mxu0 0.0
        %2325 = vmatpush.msra.mxu0 0.0
        %2326 = vmatpush.msra.mxu0 0.0
        %2327 = vmatpush.msra.mxu0 0.0
        %2328 = vmatpush.msra.mxu0 %v2013
        %2329 = vmatmul.f32.gmra.mxu0 %v2311
        %v2330 = vpop.f32.mrf.mxu0
        %v2331 = vadd.f32 0.0, %v2330
        %2332 = vdwg.mxu0
        %2333 = vmatpush.msra.mxu0 0.0
        %2334 = vmatpush.msra.mxu0 0.0
        %2335 = vmatpush.msra.mxu0 0.0
        %2336 = vmatpush.msra.mxu0 0.0
        %2337 = vmatpush.msra.mxu0 0.0
        %2338 = vmatpush.msra.mxu0 0.0
        %2339 = vmatpush.msra.mxu0 0.0
        %2340 = vmatpush.msra.mxu0 0.0
        %2341 = vmatpush.msra.mxu0 0.0
        %2342 = vmatpush.msra.mxu0 0.0
        %2343 = vmatpush.msra.mxu0 0.0
        %2344 = vmatpush.msra.mxu0 0.0
        %2345 = vmatpush.msra.mxu0 0.0
        %2346 = vmatpush.msra.mxu0 0.0
        %2347 = vmatpush.msra.mxu0 0.0
        %2348 = vmatpush.msra.mxu0 %v2027
        %2349 = vmatmul.f32.gmra.mxu0 %v2311
        %v2350 = vpop.f32.mrf.mxu0
        %v2351 = vadd.f32 0.0, %v2350
        %2352 = vdwg.mxu0
        %2353 = vst [vmem:[#allocation2 + $0x20] sm:$0xff] %v2331
        %2354 = vst [vmem:[#allocation2 + $0x28] sm:$0xff] %v2351
        %2355 = vmatpush.xpose.msra.mxu0 0.0
        %2356 = vmatpush.xpose.msra.mxu0 0.0
        %2357 = vmatpush.xpose.msra.mxu0 0.0
        %2358 = vmatpush.xpose.msra.mxu0 0.0
        %2359 = vmatpush.xpose.msra.mxu0 0.0
        %2360 = vmatpush.xpose.msra.mxu0 0.0
        %2361 = vmatpush.xpose.msra.mxu0 0.0
        %2362 = vmatpush.xpose.msra.mxu0 0.0
        %2363 = vmatpush.xpose.msra.mxu0 0.0
        %2364 = vmatpush.xpose.msra.mxu0 0.0
        %2365 = vmatpush.xpose.msra.mxu0 0.0
        %2366 = vmatpush.xpose.msra.mxu0 0.0
        %2367 = vmatpush.xpose.msra.mxu0 0.0
        %2368 = vmatpush.xpose.msra.mxu0 0.0
        %2369 = vmatpush.xpose.msra.mxu0 0.0
        %2370 = vmatpush.xpose.msra.mxu0 %v1783
        %2371 = vmatmul.f32.gmra.mxu0 %v1525
        %v2372 = vpop.f32.mrf.mxu0
        %v2373 = vadd.f32 0.0, %v2372
        %2374 = vdwg.mxu0
        %2375 = vmatpush.xpose.msra.mxu0 0.0
        %2376 = vmatpush.xpose.msra.mxu0 0.0
        %2377 = vmatpush.xpose.msra.mxu0 0.0
        %2378 = vmatpush.xpose.msra.mxu0 0.0
        %2379 = vmatpush.xpose.msra.mxu0 0.0
        %2380 = vmatpush.xpose.msra.mxu0 0.0
        %2381 = vmatpush.xpose.msra.mxu0 0.0
        %2382 = vmatpush.xpose.msra.mxu0 0.0
        %2383 = vmatpush.xpose.msra.mxu0 0.0
        %2384 = vmatpush.xpose.msra.mxu0 0.0
        %2385 = vmatpush.xpose.msra.mxu0 0.0
        %2386 = vmatpush.xpose.msra.mxu0 0.0
        %2387 = vmatpush.xpose.msra.mxu0 0.0
        %2388 = vmatpush.xpose.msra.mxu0 0.0
        %2389 = vmatpush.xpose.msra.mxu0 0.0
        %2390 = vmatpush.xpose.msra.mxu0 %v1797
        %2391 = vmatmul.f32.gmra.mxu0 %v1539
        %v2392 = vpop.f32.mrf.mxu0
        %v2393 = vadd.f32 %v2373, %v2392
        %2394 = vdwg.mxu0
        %v2395 = vmul.f32 %v2393, 0.0625
        %v2396 = vadd.f32 %v2395, %v2297
        %v2397 = vsel %vm2101, %v2396, -inf
        %2398 = vmax.xlane.f32.xlu0 %v2397
        %v2399 = vpop.xlane.xlu0 %2398
        %v2400 = vsub.f32 %v2396, %v2399
        %v2401 = vmul.f32 %v2400, 1.442695
        %v2402 = vpow.pop %v2401
        %v2403 = vsel %vm2101, %v2402, 0.0
        %2404 = vadd.xlane.f32.xlu0 %v2403
        %v2405 = vpop.xlane.xlu0 %2404
        %v2406 = vrcp.pop %v2405
        %v2407 = vmul.f32 %v2402, %v2406
        %v2409 = vsel %vm2101, %v2407, 0
        %2411 = vmatpush.msra.mxu0 0.0
        %2412 = vmatpush.msra.mxu0 0.0
        %2413 = vmatpush.msra.mxu0 0.0
        %2414 = vmatpush.msra.mxu0 0.0
        %2415 = vmatpush.msra.mxu0 0.0
        %2416 = vmatpush.msra.mxu0 0.0
        %2417 = vmatpush.msra.mxu0 0.0
        %2418 = vmatpush.msra.mxu0 0.0
        %2419 = vmatpush.msra.mxu0 0.0
        %2420 = vmatpush.msra.mxu0 0.0
        %2421 = vmatpush.msra.mxu0 0.0
        %2422 = vmatpush.msra.mxu0 0.0
        %2423 = vmatpush.msra.mxu0 0.0
        %2424 = vmatpush.msra.mxu0 0.0
        %2425 = vmatpush.msra.mxu0 0.0
        %2426 = vmatpush.msra.mxu0 %v2041
        %2427 = vmatmul.f32.gmra.mxu0 %v2409
        %v2428 = vpop.f32.mrf.mxu0
        %v2429 = vadd.f32 0.0, %v2428
        %2430 = vdwg.mxu0
        %2431 = vmatpush.msra.mxu0 0.0
        %2432 = vmatpush.msra.mxu0 0.0
        %2433 = vmatpush.msra.mxu0 0.0
        %2434 = vmatpush.msra.mxu0 0.0
        %2435 = vmatpush.msra.mxu0 0.0
        %2436 = vmatpush.msra.mxu0 0.0
        %2437 = vmatpush.msra.mxu0 0.0
        %2438 = vmatpush.msra.mxu0 0.0
        %2439 = vmatpush.msra.mxu0 0.0
        %2440 = vmatpush.msra.mxu0 0.0
        %2441 = vmatpush.msra.mxu0 0.0
        %2442 = vmatpush.msra.mxu0 0.0
        %2443 = vmatpush.msra.mxu0 0.0
        %2444 = vmatpush.msra.mxu0 0.0
        %2445 = vmatpush.msra.mxu0 0.0
        %2446 = vmatpush.msra.mxu0 %v2055
        %2447 = vmatmul.f32.gmra.mxu0 %v2409
        %v2448 = vpop.f32.mrf.mxu0
        %v2449 = vadd.f32 0.0, %v2448
        %2450 = vdwg.mxu0
        %2451 = vst [vmem:[#allocation2 + $0x30] sm:$0xff] %v2429
        %2452 = vst [vmem:[#allocation2 + $0x38] sm:$0xff] %v2449
        %v2453 = vld [vmem:[#allocation2] sm:$0xff]
        %v2454 = vld [vmem:[#allocation2 + $0x8] sm:$0xff]
        %v2455 = vld [vmem:[#allocation2 + $0x10] sm:$0xff]
        %v2456 = vld [vmem:[#allocation2 + $0x18] sm:$0xff]
        %v2457 = vld [vmem:[#allocation2 + $0x20] sm:$0xff]
        %v2458 = vld [vmem:[#allocation2 + $0x28] sm:$0xff]
        %v2459 = vld [vmem:[#allocation2 + $0x30] sm:$0xff]
        %v2460 = vld [vmem:[#allocation2 + $0x38] sm:$0xff]
        %v2461 = vpack.c.bf16 %v2457, %v2453
        %v2462 = vpack.c.bf16 %v2458, %v2454
        %v2463 = vpack.c.bf16 %v2459, %v2455
        %v2464 = vpack.c.bf16 %v2460, %v2456
        %v2465 = vld [vmem:[%s975] sm:$0xf]
        %v2466 = vld [vmem:[%s975 + $0x4] sm:$0xf]
        %v2467 = vld [vmem:[%s975 + $0x8] sm:$0xf]
        %v2468 = vld [vmem:[%s975 + $0xc] sm:$0xf]
        %v2469 = vld [vmem:[%s975 + $0x10] sm:$0xf]
        %v2470 = vld [vmem:[%s975 + $0x14] sm:$0xf]
        %v2471 = vld [vmem:[%s975 + $0x18] sm:$0xf]
        %v2472 = vld [vmem:[%s975 + $0x1c] sm:$0xf]
        %v2473 = vld [vmem:[%s975 + $0x20] sm:$0xf]
        %v2474 = vld [vmem:[%s975 + $0x24] sm:$0xf]
        %v2475 = vld [vmem:[%s975 + $0x28] sm:$0xf]
        %v2476 = vld [vmem:[%s975 + $0x2c] sm:$0xf]
        %v2477 = vld [vmem:[%s975 + $0x30] sm:$0xf]
        %v2478 = vld [vmem:[%s975 + $0x34] sm:$0xf]
        %v2479 = vld [vmem:[%s975 + $0x38] sm:$0xf]
        %v2480 = vld [vmem:[%s975 + $0x3c] sm:$0xf]
        %v2481 = vld [vmem:[%s975 + $0x40] sm:$0xf]
        %v2482 = vld [vmem:[%s975 + $0x44] sm:$0xf]
        %v2483 = vld [vmem:[%s975 + $0x48] sm:$0xf]
        %v2484 = vld [vmem:[%s975 + $0x4c] sm:$0xf]
        %v2485 = vld [vmem:[%s975 + $0x50] sm:$0xf]
        %v2486 = vld [vmem:[%s975 + $0x54] sm:$0xf]
        %v2487 = vld [vmem:[%s975 + $0x58] sm:$0xf]
        %v2488 = vld [vmem:[%s975 + $0x5c] sm:$0xf]
        %v2489 = vld [vmem:[%s975 + $0x60] sm:$0xf]
        %v2490 = vld [vmem:[%s975 + $0x64] sm:$0xf]
        %v2491 = vld [vmem:[%s975 + $0x68] sm:$0xf]
        %v2492 = vld [vmem:[%s975 + $0x6c] sm:$0xf]
        %v2493 = vld [vmem:[%s975 + $0x70] sm:$0xf]
        %v2494 = vld [vmem:[%s975 + $0x74] sm:$0xf]
        %v2495 = vld [vmem:[%s975 + $0x78] sm:$0xf]
        %v2496 = vld [vmem:[%s975 + $0x7c] sm:$0xf]
        %v2497 = vld [vmem:[%s975 + $0x80] sm:$0xf]
        %v2498 = vld [vmem:[%s975 + $0x84] sm:$0xf]
        %v2499 = vld [vmem:[%s975 + $0x88] sm:$0xf]
        %v2500 = vld [vmem:[%s975 + $0x8c] sm:$0xf]
        %v2501 = vld [vmem:[%s975 + $0x90] sm:$0xf]
        %v2502 = vld [vmem:[%s975 + $0x94] sm:$0xf]
        %v2503 = vld [vmem:[%s975 + $0x98] sm:$0xf]
        %v2504 = vld [vmem:[%s975 + $0x9c] sm:$0xf]
        %v2505 = vld [vmem:[%s975 + $0xa0] sm:$0xf]
        %v2506 = vld [vmem:[%s975 + $0xa4] sm:$0xf]
        %v2507 = vld [vmem:[%s975 + $0xa8] sm:$0xf]
        %v2508 = vld [vmem:[%s975 + $0xac] sm:$0xf]
        %v2509 = vld [vmem:[%s975 + $0xb0] sm:$0xf]
        %v2510 = vld [vmem:[%s975 + $0xb4] sm:$0xf]
        %v2511 = vld [vmem:[%s975 + $0xb8] sm:$0xf]
        %v2512 = vld [vmem:[%s975 + $0xbc] sm:$0xf]
        %v2513 = vld [vmem:[%s975 + $0xc0] sm:$0xf]
        %v2514 = vld [vmem:[%s975 + $0xc4] sm:$0xf]
        %v2515 = vld [vmem:[%s975 + $0xc8] sm:$0xf]
        %v2516 = vld [vmem:[%s975 + $0xcc] sm:$0xf]
        %v2517 = vld [vmem:[%s975 + $0xd0] sm:$0xf]
        %v2518 = vld [vmem:[%s975 + $0xd4] sm:$0xf]
        %v2519 = vld [vmem:[%s975 + $0xd8] sm:$0xf]
        %v2520 = vld [vmem:[%s975 + $0xdc] sm:$0xf]
        %v2521 = vld [vmem:[%s975 + $0xe0] sm:$0xf]
        %v2522 = vld [vmem:[%s975 + $0xe4] sm:$0xf]
        %v2523 = vld [vmem:[%s975 + $0xe8] sm:$0xf]
        %v2524 = vld [vmem:[%s975 + $0xec] sm:$0xf]
        %v2525 = vld [vmem:[%s975 + $0xf0] sm:$0xf]
        %v2526 = vld [vmem:[%s975 + $0xf4] sm:$0xf]
        %v2527 = vld [vmem:[%s975 + $0xf8] sm:$0xf]
        %v2528 = vld [vmem:[%s975 + $0xfc] sm:$0xf]
        %v2529 = vld [vmem:[%s984] sm:$0x1]
        %v2531 = vperm.slane %v2529, 0
        %v2597 = vunpack.c.l.b16 %v2465
        %v2598 = vunpack.c.l.b16 %v2466
        %v2599 = vunpack.c.l.b16 %v2467
        %v2600 = vunpack.c.l.b16 %v2468
        %v2601 = vunpack.c.l.b16 %v2469
        %v2602 = vunpack.c.l.b16 %v2470
        %v2603 = vunpack.c.l.b16 %v2471
        %v2604 = vunpack.c.l.b16 %v2472
        %v2605 = vunpack.c.l.b16 %v2473
        %v2606 = vunpack.c.l.b16 %v2474
        %v2607 = vunpack.c.l.b16 %v2475
        %v2608 = vunpack.c.l.b16 %v2476
        %v2609 = vunpack.c.l.b16 %v2477
        %v2610 = vunpack.c.l.b16 %v2478
        %v2611 = vunpack.c.l.b16 %v2479
        %v2612 = vunpack.c.l.b16 %v2480
        %v2613 = vunpack.c.l.b16 %v2481
        %v2614 = vunpack.c.l.b16 %v2482
        %v2615 = vunpack.c.l.b16 %v2483
        %v2616 = vunpack.c.l.b16 %v2484
        %v2617 = vunpack.c.l.b16 %v2485
        %v2618 = vunpack.c.l.b16 %v2486
        %v2619 = vunpack.c.l.b16 %v2487
        %v2620 = vunpack.c.l.b16 %v2488
        %v2621 = vunpack.c.l.b16 %v2489
        %v2622 = vunpack.c.l.b16 %v2490
        %v2623 = vunpack.c.l.b16 %v2491
        %v2624 = vunpack.c.l.b16 %v2492
        %v2625 = vunpack.c.l.b16 %v2493
        %v2626 = vunpack.c.l.b16 %v2494
        %v2627 = vunpack.c.l.b16 %v2495
        %v2628 = vunpack.c.l.b16 %v2496
        %v2629 = vunpack.c.l.b16 %v2497
        %v2630 = vunpack.c.l.b16 %v2498
        %v2631 = vunpack.c.l.b16 %v2499
        %v2632 = vunpack.c.l.b16 %v2500
        %v2633 = vunpack.c.l.b16 %v2501
        %v2634 = vunpack.c.l.b16 %v2502
        %v2635 = vunpack.c.l.b16 %v2503
        %v2636 = vunpack.c.l.b16 %v2504
        %v2637 = vunpack.c.l.b16 %v2505
        %v2638 = vunpack.c.l.b16 %v2506
        %v2639 = vunpack.c.l.b16 %v2507
        %v2640 = vunpack.c.l.b16 %v2508
        %v2641 = vunpack.c.l.b16 %v2509
        %v2642 = vunpack.c.l.b16 %v2510
        %v2643 = vunpack.c.l.b16 %v2511
        %v2644 = vunpack.c.l.b16 %v2512
        %v2645 = vunpack.c.l.b16 %v2513
        %v2646 = vunpack.c.l.b16 %v2514
        %v2647 = vunpack.c.l.b16 %v2515
        %v2648 = vunpack.c.l.b16 %v2516
        %v2649 = vunpack.c.l.b16 %v2517
        %v2650 = vunpack.c.l.b16 %v2518
        %v2651 = vunpack.c.l.b16 %v2519
        %v2652 = vunpack.c.l.b16 %v2520
        %v2653 = vunpack.c.l.b16 %v2521
        %v2654 = vunpack.c.l.b16 %v2522
        %v2655 = vunpack.c.l.b16 %v2523
        %v2656 = vunpack.c.l.b16 %v2524
        %v2657 = vunpack.c.l.b16 %v2525
        %v2658 = vunpack.c.l.b16 %v2526
        %v2659 = vunpack.c.l.b16 %v2527
        %v2660 = vunpack.c.l.b16 %v2528
        %v2661 = vpack.c.b16 %v2598, %v2597
        %v2662 = vpack.c.b16 %v2600, %v2599
        %v2663 = vpack.c.b16 %v2602, %v2601
        %v2664 = vpack.c.b16 %v2604, %v2603
        %v2665 = vpack.c.b16 %v2606, %v2605
        %v2666 = vpack.c.b16 %v2608, %v2607
        %v2667 = vpack.c.b16 %v2610, %v2609
        %v2668 = vpack.c.b16 %v2612, %v2611
        %v2669 = vpack.c.b16 %v2614, %v2613
        %v2670 = vpack.c.b16 %v2616, %v2615
        %v2671 = vpack.c.b16 %v2618, %v2617
        %v2672 = vpack.c.b16 %v2620, %v2619
        %v2673 = vpack.c.b16 %v2622, %v2621
        %v2674 = vpack.c.b16 %v2624, %v2623
        %v2675 = vpack.c.b16 %v2626, %v2625
        %v2676 = vpack.c.b16 %v2628, %v2627
        %v2677 = vpack.c.b16 %v2630, %v2629
        %v2678 = vpack.c.b16 %v2632, %v2631
        %v2679 = vpack.c.b16 %v2634, %v2633
        %v2680 = vpack.c.b16 %v2636, %v2635
        %v2681 = vpack.c.b16 %v2638, %v2637
        %v2682 = vpack.c.b16 %v2640, %v2639
        %v2683 = vpack.c.b16 %v2642, %v2641
        %v2684 = vpack.c.b16 %v2644, %v2643
        %v2685 = vpack.c.b16 %v2646, %v2645
        %v2686 = vpack.c.b16 %v2648, %v2647
        %v2687 = vpack.c.b16 %v2650, %v2649
        %v2688 = vpack.c.b16 %v2652, %v2651
        %v2689 = vpack.c.b16 %v2654, %v2653
        %v2690 = vpack.c.b16 %v2656, %v2655
        %v2691 = vpack.c.b16 %v2658, %v2657
        %v2692 = vpack.c.b16 %v2660, %v2659
        %2725 = vmatpush.bf16.msra.mxu0 %v2668
        %2726 = vmatpush.bf16.msra.mxu0 %v2667
        %2727 = vmatpush.bf16.msra.mxu0 %v2666
        %2728 = vmatpush.bf16.msra.mxu0 %v2665
        %2729 = vmatpush.bf16.msra.mxu0 %v2664
        %2730 = vmatpush.bf16.msra.mxu0 %v2663
        %2731 = vmatpush.bf16.msra.mxu0 %v2662
        %2732 = vmatpush.bf16.msra.mxu0 %v2661
        %2733 = vmatmul.bf16.gmra.mxu0 %v2461
        %v2734 = vpop.f32.mrf.mxu0
        %v2735 = vadd.f32 %v2531, %v2734
        %v2736 = vpop.f32.mrf.mxu0
        %v2737 = vadd.f32 %v2531, %v2736
        %2738 = vdwg.mxu0
        %2739 = vmatpush.bf16.msra.mxu0 %v2676
        %2740 = vmatpush.bf16.msra.mxu0 %v2675
        %2741 = vmatpush.bf16.msra.mxu0 %v2674
        %2742 = vmatpush.bf16.msra.mxu0 %v2673
        %2743 = vmatpush.bf16.msra.mxu0 %v2672
        %2744 = vmatpush.bf16.msra.mxu0 %v2671
        %2745 = vmatpush.bf16.msra.mxu0 %v2670
        %2746 = vmatpush.bf16.msra.mxu0 %v2669
        %2747 = vmatmul.bf16.gmra.mxu0 %v2462
        %v2748 = vpop.f32.mrf.mxu0
        %v2749 = vadd.f32 %v2735, %v2748
        %v2750 = vpop.f32.mrf.mxu0
        %v2751 = vadd.f32 %v2737, %v2750
        %2752 = vdwg.mxu0
        %2753 = vmatpush.bf16.msra.mxu0 %v2684
        %2754 = vmatpush.bf16.msra.mxu0 %v2683
        %2755 = vmatpush.bf16.msra.mxu0 %v2682
        %2756 = vmatpush.bf16.msra.mxu0 %v2681
        %2757 = vmatpush.bf16.msra.mxu0 %v2680
        %2758 = vmatpush.bf16.msra.mxu0 %v2679
        %2759 = vmatpush.bf16.msra.mxu0 %v2678
        %2760 = vmatpush.bf16.msra.mxu0 %v2677
        %2761 = vmatmul.bf16.gmra.mxu0 %v2463
        %v2762 = vpop.f32.mrf.mxu0
        %v2763 = vadd.f32 %v2749, %v2762
        %v2764 = vpop.f32.mrf.mxu0
        %v2765 = vadd.f32 %v2751, %v2764
        %2766 = vdwg.mxu0
        %2767 = vmatpush.bf16.msra.mxu0 %v2692
        %2768 = vmatpush.bf16.msra.mxu0 %v2691
        %2769 = vmatpush.bf16.msra.mxu0 %v2690
        %2770 = vmatpush.bf16.msra.mxu0 %v2689
        %2771 = vmatpush.bf16.msra.mxu0 %v2688
        %2772 = vmatpush.bf16.msra.mxu0 %v2687
        %2773 = vmatpush.bf16.msra.mxu0 %v2686
        %2774 = vmatpush.bf16.msra.mxu0 %v2685
        %2775 = vmatmul.bf16.gmra.mxu0 %v2464
        %v2776 = vpop.f32.mrf.mxu0
        %v2777 = vadd.f32 %v2763, %v2776
        %v2778 = vpop.f32.mrf.mxu0
        %v2779 = vadd.f32 %v2765, %v2778
        %2780 = vdwg.mxu0
        %v2781 = vadd.f32 %v1187, %v2777
        %v2782 = vadd.f32 %v1188, %v2779
        %v2783 = vld [vmem:[%s993] sm:$0x1]
        %v2784 = vld [vmem:[%s1002] sm:$0x1]
        %2785 = vadd.xlane.f32.xlu0 %v2781
        %v2786 = vpop.xlane.xlu0 %2785
        %2787 = vadd.xlane.f32.xlu0 %v2782
        %v2788 = vpop.xlane.xlu0 %2787
        %v2789 = vmul.f32 %v2786, %v1201
        %v2790 = vmul.f32 %v2788, %v1201
        %v2791 = vsub.f32 %v2781, %v2789
        %v2792 = vsub.f32 %v2782, %v2790
        %v2793 = vmul.f32 %v2791, %v2791
        %v2794 = vmul.f32 %v2792, %v2792
        %2795 = vadd.xlane.f32.xlu0 %v2793
        %v2796 = vpop.xlane.xlu0 %2795
        %2797 = vadd.xlane.f32.xlu0 %v2794
        %v2798 = vpop.xlane.xlu0 %2797
        %v2799 = vmul.f32 %v2796, 0.007874016
        %v2800 = vmul.f32 %v2798, 0.007874016
        %v2801 = vrsqrt.pop %v2799
        %v2802 = vmul.f32 %v2801, %v2799
        %v2803 = vmul.f32 %v2802, %v2801
        %v2804 = vmul.f32 0.5, %v2803
        %v2805 = vsub.f32 1.5, %v2804
        %v2806 = vmul.f32 %v2801, %v2805
        %v2807 = vmul.f32 %v2799, %v2806
        %vm2808 = vcmp.eq.f32.partialorder %v2799, inf
        %v2809 = vsel %vm2808, %v2799, %v2807
        %vm2810 = vcmp.eq.f32.partialorder %v2799, 0.0
        %v2811 = vand.u32 %v2799, 2147483648
        %v2812 = vsel %vm2810, %v2811, %v2809
        %v2813 = vrsqrt.pop %v2800
        %v2814 = vmul.f32 %v2813, %v2800
        %v2815 = vmul.f32 %v2814, %v2813
        %v2816 = vmul.f32 0.5, %v2815
        %v2817 = vsub.f32 1.5, %v2816
        %v2818 = vmul.f32 %v2813, %v2817
        %v2819 = vmul.f32 %v2800, %v2818
        %vm2820 = vcmp.eq.f32.partialorder %v2800, inf
        %v2821 = vsel %vm2820, %v2800, %v2819
        %vm2822 = vcmp.eq.f32.partialorder %v2800, 0.0
        %v2823 = vand.u32 %v2800, 2147483648
        %v2824 = vsel %vm2822, %v2823, %v2821
        %v2825 = vadd.f32 %v2812, 1e-06
        %v2826 = vadd.f32 %v2824, 1e-06
        %v2827 = vrcp.pop %v2825
        %v2828 = vmul.f32 %v2825, %v2827
        %v2829 = vsub.f32 1.0, %v2828
        %v2830 = vmul.f32 %v2827, %v2829
        %v2831 = vadd.f32 %v2827, %v2830
        %vm2832 = vweird.f32 %v2825
        %vm2833 = vweird.f32 %v2827
        %vm2834 = vmor %vm2832, %vm2833
        %v2835 = vsel %vm2834, %v2827, %v2831
        %v2836 = vand.u32 2147483647, %v2825
        %vm2837 = vcmp.eq.f32.partialorder %v2836, 8.507059e+37
        %v2838 = vand.u32 %v2825, 2147483648
        %v2839 = vor.u32 1.1754944e-38, %v2838
        %v2840 = vsel %vm2837, %v2839, %v2835
        %v2841 = vmul.f32 1.0, %v2840
        %v2842 = vrcp.pop %v2826
        %v2843 = vmul.f32 %v2826, %v2842
        %v2844 = vsub.f32 1.0, %v2843
        %v2845 = vmul.f32 %v2842, %v2844
        %v2846 = vadd.f32 %v2842, %v2845
        %vm2847 = vweird.f32 %v2826
        %vm2848 = vweird.f32 %v2842
        %vm2849 = vmor %vm2847, %vm2848
        %v2850 = vsel %vm2849, %v2842, %v2846
        %v2851 = vand.u32 2147483647, %v2826
        %vm2852 = vcmp.eq.f32.partialorder %v2851, 8.507059e+37
        %v2853 = vand.u32 %v2826, 2147483648
        %v2854 = vor.u32 1.1754944e-38, %v2853
        %v2855 = vsel %vm2852, %v2854, %v2850
        %v2856 = vmul.f32 1.0, %v2855
        %v2857 = vmul.f32 %v2791, %v2841
        %v2858 = vmul.f32 %v2792, %v2856
        %v2860 = vperm.slane %v2783, 0
        %v2862 = vmul.f32 %v2860, %v2857
        %v2863 = vmul.f32 %v2860, %v2858
        %v2865 = vperm.slane %v2784, 0
        %v2867 = vadd.f32 %v2862, %v2865
        %v2868 = vadd.f32 %v2863, %v2865
        %v2869 = vpack.c.bf16 %v2868, %v2867
        %v2870 = vld [vmem:[%s1012] sm:$0xff]
        %v2871 = vld [vmem:[%s1012 + $0x8] sm:$0xff]
        %v2872 = vld [vmem:[%s1012 + $0x10] sm:$0xff]
        %v2873 = vld [vmem:[%s1012 + $0x18] sm:$0xff]
        %v2874 = vld [vmem:[%s1012 + $0x20] sm:$0xff]
        %v2875 = vld [vmem:[%s1012 + $0x28] sm:$0xff]
        %v2876 = vld [vmem:[%s1012 + $0x30] sm:$0xff]
        %v2877 = vld [vmem:[%s1012 + $0x38] sm:$0xff]
        %v2878 = vld [vmem:[%s1012 + $0x40] sm:$0xff]
        %v2879 = vld [vmem:[%s1012 + $0x48] sm:$0xff]
        %v2880 = vld [vmem:[%s1012 + $0x50] sm:$0xff]
        %v2881 = vld [vmem:[%s1012 + $0x58] sm:$0xff]
        %v2882 = vld [vmem:[%s1012 + $0x60] sm:$0xff]
        %v2883 = vld [vmem:[%s1012 + $0x68] sm:$0xff]
        %v2884 = vld [vmem:[%s1012 + $0x70] sm:$0xff]
        %v2885 = vld [vmem:[%s1012 + $0x78] sm:$0xff]
        %v2886 = vld [vmem:[%s1022] sm:$0x3]
        %v2888 = vperm.slane %v2886, 0
        %v2889 = vperm.slane %v2886, 1
        %v2908 = vunpack.c.l.b16 %v2870
        %v2909 = vunpack.c.h.b16 %v2870
        %v2910 = vunpack.c.l.b16 %v2871
        %v2911 = vunpack.c.h.b16 %v2871
        %v2912 = vunpack.c.l.b16 %v2872
        %v2913 = vunpack.c.h.b16 %v2872
        %v2914 = vunpack.c.l.b16 %v2873
        %v2915 = vunpack.c.h.b16 %v2873
        %v2916 = vunpack.c.l.b16 %v2874
        %v2917 = vunpack.c.h.b16 %v2874
        %v2918 = vunpack.c.l.b16 %v2875
        %v2919 = vunpack.c.h.b16 %v2875
        %v2920 = vunpack.c.l.b16 %v2876
        %v2921 = vunpack.c.h.b16 %v2876
        %v2922 = vunpack.c.l.b16 %v2877
        %v2923 = vunpack.c.h.b16 %v2877
        %v2924 = vunpack.c.l.b16 %v2878
        %v2925 = vunpack.c.h.b16 %v2878
        %v2926 = vunpack.c.l.b16 %v2879
        %v2927 = vunpack.c.h.b16 %v2879
        %v2928 = vunpack.c.l.b16 %v2880
        %v2929 = vunpack.c.h.b16 %v2880
        %v2930 = vunpack.c.l.b16 %v2881
        %v2931 = vunpack.c.h.b16 %v2881
        %v2932 = vunpack.c.l.b16 %v2882
        %v2933 = vunpack.c.h.b16 %v2882
        %v2934 = vunpack.c.l.b16 %v2883
        %v2935 = vunpack.c.h.b16 %v2883
        %v2936 = vunpack.c.l.b16 %v2884
        %v2937 = vunpack.c.h.b16 %v2884
        %v2938 = vunpack.c.l.b16 %v2885
        %v2939 = vunpack.c.h.b16 %v2885
        %v2940 = vpack.c.b16 %v2910, %v2908
        %v2941 = vpack.c.b16 %v2911, %v2909
        %v2942 = vpack.c.b16 %v2914, %v2912
        %v2943 = vpack.c.b16 %v2915, %v2913
        %v2944 = vpack.c.b16 %v2918, %v2916
        %v2945 = vpack.c.b16 %v2919, %v2917
        %v2946 = vpack.c.b16 %v2922, %v2920
        %v2947 = vpack.c.b16 %v2923, %v2921
        %v2948 = vpack.c.b16 %v2926, %v2924
        %v2949 = vpack.c.b16 %v2927, %v2925
        %v2950 = vpack.c.b16 %v2930, %v2928
        %v2951 = vpack.c.b16 %v2931, %v2929
        %v2952 = vpack.c.b16 %v2934, %v2932
        %v2953 = vpack.c.b16 %v2935, %v2933
        %v2954 = vpack.c.b16 %v2938, %v2936
        %v2955 = vpack.c.b16 %v2939, %v2937
        %2972 = vmatpush.bf16.msra.mxu0 %v2954
        %2973 = vmatpush.bf16.msra.mxu0 %v2952
        %2974 = vmatpush.bf16.msra.mxu0 %v2950
        %2975 = vmatpush.bf16.msra.mxu0 %v2948
        %2976 = vmatpush.bf16.msra.mxu0 %v2946
        %2977 = vmatpush.bf16.msra.mxu0 %v2944
        %2978 = vmatpush.bf16.msra.mxu0 %v2942
        %2979 = vmatpush.bf16.msra.mxu0 %v2940
        %2980 = vmatmul.bf16.gmra.mxu0 %v2869
        %v2981 = vpop.f32.mrf.mxu0
        %v2982 = vadd.f32 %v2888, %v2981
        %v2983 = vpop.f32.mrf.mxu0
        %v2984 = vadd.f32 %v2888, %v2983
        %2985 = vdwg.mxu0
        %2986 = vmatpush.bf16.msra.mxu0 %v2955
        %2987 = vmatpush.bf16.msra.mxu0 %v2953
        %2988 = vmatpush.bf16.msra.mxu0 %v2951
        %2989 = vmatpush.bf16.msra.mxu0 %v2949
        %2990 = vmatpush.bf16.msra.mxu0 %v2947
        %2991 = vmatpush.bf16.msra.mxu0 %v2945
        %2992 = vmatpush.bf16.msra.mxu0 %v2943
        %2993 = vmatpush.bf16.msra.mxu0 %v2941
        %2994 = vmatmul.bf16.gmra.mxu0 %v2869
        %v2995 = vpop.f32.mrf.mxu0
        %v2996 = vadd.f32 %v2889, %v2995
        %v2997 = vpop.f32.mrf.mxu0
        %v2998 = vadd.f32 %v2889, %v2997
        %2999 = vdwg.mxu0
        %v3000 = vmax.f32 %v2982, 0.0
        %v3001 = vmax.f32 %v2996, 0.0
        %v3002 = vmax.f32 %v2984, 0.0
        %v3003 = vmax.f32 %v2998, 0.0
        %v3004 = vpack.c.bf16 %v3002, %v3000
        %v3005 = vpack.c.bf16 %v3003, %v3001
        %v3006 = vld [vmem:[%s1032] sm:$0xf]
        %v3007 = vld [vmem:[%s1032 + $0x4] sm:$0xf]
        %v3008 = vld [vmem:[%s1032 + $0x8] sm:$0xf]
        %v3009 = vld [vmem:[%s1032 + $0xc] sm:$0xf]
        %v3010 = vld [vmem:[%s1032 + $0x10] sm:$0xf]
        %v3011 = vld [vmem:[%s1032 + $0x14] sm:$0xf]
        %v3012 = vld [vmem:[%s1032 + $0x18] sm:$0xf]
        %v3013 = vld [vmem:[%s1032 + $0x1c] sm:$0xf]
        %v3014 = vld [vmem:[%s1032 + $0x20] sm:$0xf]
        %v3015 = vld [vmem:[%s1032 + $0x24] sm:$0xf]
        %v3016 = vld [vmem:[%s1032 + $0x28] sm:$0xf]
        %v3017 = vld [vmem:[%s1032 + $0x2c] sm:$0xf]
        %v3018 = vld [vmem:[%s1032 + $0x30] sm:$0xf]
        %v3019 = vld [vmem:[%s1032 + $0x34] sm:$0xf]
        %v3020 = vld [vmem:[%s1032 + $0x38] sm:$0xf]
        %v3021 = vld [vmem:[%s1032 + $0x3c] sm:$0xf]
        %v3022 = vld [vmem:[%s1032 + $0x40] sm:$0xf]
        %v3023 = vld [vmem:[%s1032 + $0x44] sm:$0xf]
        %v3024 = vld [vmem:[%s1032 + $0x48] sm:$0xf]
        %v3025 = vld [vmem:[%s1032 + $0x4c] sm:$0xf]
        %v3026 = vld [vmem:[%s1032 + $0x50] sm:$0xf]
        %v3027 = vld [vmem:[%s1032 + $0x54] sm:$0xf]
        %v3028 = vld [vmem:[%s1032 + $0x58] sm:$0xf]
        %v3029 = vld [vmem:[%s1032 + $0x5c] sm:$0xf]
        %v3030 = vld [vmem:[%s1032 + $0x60] sm:$0xf]
        %v3031 = vld [vmem:[%s1032 + $0x64] sm:$0xf]
        %v3032 = vld [vmem:[%s1032 + $0x68] sm:$0xf]
        %v3033 = vld [vmem:[%s1032 + $0x6c] sm:$0xf]
        %v3034 = vld [vmem:[%s1032 + $0x70] sm:$0xf]
        %v3035 = vld [vmem:[%s1032 + $0x74] sm:$0xf]
        %v3036 = vld [vmem:[%s1032 + $0x78] sm:$0xf]
        %v3037 = vld [vmem:[%s1032 + $0x7c] sm:$0xf]
        %v3038 = vld [vmem:[%s1041] sm:$0x1]
        %v3040 = vperm.slane %v3038, 0
        %v3074 = vunpack.c.l.b16 %v3006
        %v3075 = vunpack.c.l.b16 %v3007
        %v3076 = vunpack.c.l.b16 %v3008
        %v3077 = vunpack.c.l.b16 %v3009
        %v3078 = vunpack.c.l.b16 %v3010
        %v3079 = vunpack.c.l.b16 %v3011
        %v3080 = vunpack.c.l.b16 %v3012
        %v3081 = vunpack.c.l.b16 %v3013
        %v3082 = vunpack.c.l.b16 %v3014
        %v3083 = vunpack.c.l.b16 %v3015
        %v3084 = vunpack.c.l.b16 %v3016
        %v3085 = vunpack.c.l.b16 %v3017
        %v3086 = vunpack.c.l.b16 %v3018
        %v3087 = vunpack.c.l.b16 %v3019
        %v3088 = vunpack.c.l.b16 %v3020
        %v3089 = vunpack.c.l.b16 %v3021
        %v3090 = vunpack.c.l.b16 %v3022
        %v3091 = vunpack.c.l.b16 %v3023
        %v3092 = vunpack.c.l.b16 %v3024
        %v3093 = vunpack.c.l.b16 %v3025
        %v3094 = vunpack.c.l.b16 %v3026
        %v3095 = vunpack.c.l.b16 %v3027
        %v3096 = vunpack.c.l.b16 %v3028
        %v3097 = vunpack.c.l.b16 %v3029
        %v3098 = vunpack.c.l.b16 %v3030
        %v3099 = vunpack.c.l.b16 %v3031
        %v3100 = vunpack.c.l.b16 %v3032
        %v3101 = vunpack.c.l.b16 %v3033
        %v3102 = vunpack.c.l.b16 %v3034
        %v3103 = vunpack.c.l.b16 %v3035
        %v3104 = vunpack.c.l.b16 %v3036
        %v3105 = vunpack.c.l.b16 %v3037
        %v3106 = vpack.c.b16 %v3075, %v3074
        %v3107 = vpack.c.b16 %v3077, %v3076
        %v3108 = vpack.c.b16 %v3079, %v3078
        %v3109 = vpack.c.b16 %v3081, %v3080
        %v3110 = vpack.c.b16 %v3083, %v3082
        %v3111 = vpack.c.b16 %v3085, %v3084
        %v3112 = vpack.c.b16 %v3087, %v3086
        %v3113 = vpack.c.b16 %v3089, %v3088
        %v3114 = vpack.c.b16 %v3091, %v3090
        %v3115 = vpack.c.b16 %v3093, %v3092
        %v3116 = vpack.c.b16 %v3095, %v3094
        %v3117 = vpack.c.b16 %v3097, %v3096
        %v3118 = vpack.c.b16 %v3099, %v3098
        %v3119 = vpack.c.b16 %v3101, %v3100
        %v3120 = vpack.c.b16 %v3103, %v3102
        %v3121 = vpack.c.b16 %v3105, %v3104
        %3138 = vmatpush.bf16.msra.mxu0 %v3113
        %3139 = vmatpush.bf16.msra.mxu0 %v3112
        %3140 = vmatpush.bf16.msra.mxu0 %v3111
        %3141 = vmatpush.bf16.msra.mxu0 %v3110
        %3142 = vmatpush.bf16.msra.mxu0 %v3109
        %3143 = vmatpush.bf16.msra.mxu0 %v3108
        %3144 = vmatpush.bf16.msra.mxu0 %v3107
        %3145 = vmatpush.bf16.msra.mxu0 %v3106
        %3146 = vmatmul.bf16.gmra.mxu0 %v3004
        %v3147 = vpop.f32.mrf.mxu0
        %v3148 = vadd.f32 %v3040, %v3147
        %v3149 = vpop.f32.mrf.mxu0
        %v3150 = vadd.f32 %v3040, %v3149
        %3151 = vdwg.mxu0
        %3152 = vmatpush.bf16.msra.mxu0 %v3121
        %3153 = vmatpush.bf16.msra.mxu0 %v3120
        %3154 = vmatpush.bf16.msra.mxu0 %v3119
        %3155 = vmatpush.bf16.msra.mxu0 %v3118
        %3156 = vmatpush.bf16.msra.mxu0 %v3117
        %3157 = vmatpush.bf16.msra.mxu0 %v3116
        %3158 = vmatpush.bf16.msra.mxu0 %v3115
        %3159 = vmatpush.bf16.msra.mxu0 %v3114
        %3160 = vmatmul.bf16.gmra.mxu0 %v3005
        %v3161 = vpop.f32.mrf.mxu0
        %v3162 = vadd.f32 %v3148, %v3161
        %v3163 = vpop.f32.mrf.mxu0
        %v3164 = vadd.f32 %v3150, %v3163
        %3165 = vdwg.mxu0
        %v3166 = vadd.f32 %v2781, %v3162
        %v3167 = vadd.f32 %v2782, %v3164
        %3168 = vst [vmem:[#allocation26] sm:$0xff] %v3166
        %3169 = vst [vmem:[#allocation26 + $0x8] sm:$0xff] %v3167
        %p3170 = scmp.eq.s32.totalorder %s55, 1
        // Predicated region
        $region165: #{_lambda_.1} parent=103 // pred_check
          %p3171 = pneg %p3170
        $region166: #{_lambda_.1} parent=103 // pred_check_branch
          %3173 = sbr.rel (%p3171) target = $region168
        $region167: #{_lambda_.1} parent=103 // pred_region
          %v3174 = vld [vmem:[#allocation26] sm:$0xff]
          %v3175 = vld [vmem:[#allocation26 + $0x8] sm:$0xff]
          %v3176 = vld [vmem:[#allocation3] sm:$0x1]
          %v3177 = vld [vmem:[%s4] sm:$0x1]
          %3178 = vadd.xlane.f32.xlu0 %v3174
          %v3179 = vpop.xlane.xlu0 %3178
          %3180 = vadd.xlane.f32.xlu0 %v3175
          %v3181 = vpop.xlane.xlu0 %3180
          %v3182 = vmul.f32 %v3179, %v1201
          %v3183 = vmul.f32 %v3181, %v1201
          %v3184 = vsub.f32 %v3174, %v3182
          %v3185 = vsub.f32 %v3175, %v3183
          %v3186 = vmul.f32 %v3184, %v3184
          %v3187 = vmul.f32 %v3185, %v3185
          %3188 = vadd.xlane.f32.xlu0 %v3186
          %v3189 = vpop.xlane.xlu0 %3188
          %3190 = vadd.xlane.f32.xlu0 %v3187
          %v3191 = vpop.xlane.xlu0 %3190
          %v3192 = vmul.f32 %v3189, 0.007874016
          %v3193 = vmul.f32 %v3191, 0.007874016
          %v3194 = vrsqrt.pop %v3192
          %v3195 = vmul.f32 %v3194, %v3192
          %v3196 = vmul.f32 %v3195, %v3194
          %v3197 = vmul.f32 0.5, %v3196
          %v3198 = vsub.f32 1.5, %v3197
          %v3199 = vmul.f32 %v3194, %v3198
          %v3200 = vmul.f32 %v3192, %v3199
          %vm3201 = vcmp.eq.f32.partialorder %v3192, inf
          %v3202 = vsel %vm3201, %v3192, %v3200
          %vm3203 = vcmp.eq.f32.partialorder %v3192, 0.0
          %v3204 = vand.u32 %v3192, 2147483648
          %v3205 = vsel %vm3203, %v3204, %v3202
          %v3206 = vrsqrt.pop %v3193
          %v3207 = vmul.f32 %v3206, %v3193
          %v3208 = vmul.f32 %v3207, %v3206
          %v3209 = vmul.f32 0.5, %v3208
          %v3210 = vsub.f32 1.5, %v3209
          %v3211 = vmul.f32 %v3206, %v3210
          %v3212 = vmul.f32 %v3193, %v3211
          %vm3213 = vcmp.eq.f32.partialorder %v3193, inf
          %v3214 = vsel %vm3213, %v3193, %v3212
          %vm3215 = vcmp.eq.f32.partialorder %v3193, 0.0
          %v3216 = vand.u32 %v3193, 2147483648
          %v3217 = vsel %vm3215, %v3216, %v3214
          %v3218 = vadd.f32 %v3205, 1e-06
          %v3219 = vadd.f32 %v3217, 1e-06
          %v3220 = vrcp.pop %v3218
          %v3221 = vmul.f32 %v3218, %v3220
          %v3222 = vsub.f32 1.0, %v3221
          %v3223 = vmul.f32 %v3220, %v3222
          %v3224 = vadd.f32 %v3220, %v3223
          %vm3225 = vweird.f32 %v3218
          %vm3226 = vweird.f32 %v3220
          %vm3227 = vmor %vm3225, %vm3226
          %v3228 = vsel %vm3227, %v3220, %v3224
          %v3229 = vand.u32 2147483647, %v3218
          %vm3230 = vcmp.eq.f32.partialorder %v3229, 8.507059e+37
          %v3231 = vand.u32 %v3218, 2147483648
          %v3232 = vor.u32 1.1754944e-38, %v3231
          %v3233 = vsel %vm3230, %v3232, %v3228
          %v3234 = vmul.f32 1.0, %v3233
          %v3235 = vrcp.pop %v3219
          %v3236 = vmul.f32 %v3219, %v3235
          %v3237 = vsub.f32 1.0, %v3236
          %v3238 = vmul.f32 %v3235, %v3237
          %v3239 = vadd.f32 %v3235, %v3238
          %vm3240 = vweird.f32 %v3219
          %vm3241 = vweird.f32 %v3235
          %vm3242 = vmor %vm3240, %vm3241
          %v3243 = vsel %vm3242, %v3235, %v3239
          %v3244 = vand.u32 2147483647, %v3219
          %vm3245 = vcmp.eq.f32.partialorder %v3244, 8.507059e+37
          %v3246 = vand.u32 %v3219, 2147483648
          %v3247 = vor.u32 1.1754944e-38, %v3246
          %v3248 = vsel %vm3245, %v3247, %v3243
          %v3249 = vmul.f32 1.0, %v3248
          %v3250 = vmul.f32 %v3184, %v3234
          %v3251 = vmul.f32 %v3185, %v3249
          %v3253 = vperm.slane %v3176, 0
          %v3255 = vmul.f32 %v3253, %v3250
          %v3256 = vmul.f32 %v3253, %v3251
          %v3258 = vperm.slane %v3177, 0
          %v3260 = vadd.f32 %v3255, %v3258
          %v3261 = vadd.f32 %v3256, %v3258
          %3262 = vst [vmem:[#allocation26] sm:$0xff] %v3260
          %3263 = vst [vmem:[#allocation26 + $0x8] sm:$0xff] %v3261
        $region168: #{_lambda_.1} parent=103 // pred_fallthru
          _
        // Predicated region
        $region169: #{_lambda_.1} parent=103 // pred_check
          %p3264 = pneg %p589
        $region170: #{_lambda_.1} parent=103 // pred_check_branch
          %3266 = sbr.rel (%p3264) target = $region172
        $region171: #{_lambda_.1} parent=103 // pred_region
          %3268 = vsyncadd [#allocation5], 0
          %s3269 = sshll.u32 [#allocation26], 4
          %s3270 = int_to_ptr.vmem [resolvable:$true] %s3269
          %s3271 = sshll.u32 %s21, 4
          %s3272 = int_to_ptr.hbm [resolvable:$true] %s3271
          %3277 = dma.vmem_to_hbm [thread:$0]  %s3270, 256, %s3272, [#allocation5], 128, 128, 8
        $region172: #{_lambda_.1} parent=103 // pred_fallthru
          _
        // Predicated region
        $region173: #{_lambda_.1} parent=103 // pred_check
          %p3278 = pneg %p589
        $region174: #{_lambda_.1} parent=103 // pred_check_branch
          %3280 = sbr.rel (%p3278) target = $region176
        $region175: #{_lambda_.1} parent=103 // pred_region
          %3282 = dma.done [#allocation5], 256
        $region176: #{_lambda_.1} parent=103 // pred_fallthru
          _
      $region104: #{_lambda_.1} parent=5 // pred_fallthru
        _
      %p3283 = scmp.le.s32.totalorder 2, %s50
      // Predicated region
      $region177: #{_lambda_.1} parent=5 // pred_check
        %p3284 = pneg %p3283
      $region178: #{_lambda_.1} parent=5 // pred_check_branch
        %3286 = sbr.rel (%p3284) target = $region180
      $region179: #{_lambda_.1} parent=5 // pred_region
        %s3287 = ssub.s32 %s50, 2
      $region180: #{_lambda_.1} parent=5 // pred_fallthru
        _
    $region6: #{_lambda_.1} parent=1 // loop_footer
      %s54 = sadd.s32 1, %s50
    $region7: #{_lambda_.1} parent=1 // loop_footer_branch
      %49 = sbr.rel target = $region3
    $region8: #{_lambda_.1} parent=1 // loop_exit
      _
    %3288 = vsyncpa [#allocation4], 1
    %s3289 = scalar_lea.sflag [#allocation4], 1
    %3290 = vsyncpa %s3289, 1
    %3291 = vsyncpa [#allocation7], 1
    %s3292 = scalar_lea.sflag [#allocation7], 1
    %3293 = vsyncpa %s3292, 1
    %3294 = vsyncpa [#allocation10], 1
    %s3295 = scalar_lea.sflag [#allocation10], 1
    %3296 = vsyncpa %s3295, 1
    %3297 = vsyncpa [#allocation13], 1
    %s3298 = scalar_lea.sflag [#allocation13], 1
    %3299 = vsyncpa %s3298, 1
    %3300 = vsyncpa [#allocation16], 1
    %s3301 = scalar_lea.sflag [#allocation16], 1
    %3302 = vsyncpa %s3301, 1
    %3303 = vsyncpa [#allocation19], 1
    %s3304 = scalar_lea.sflag [#allocation19], 1
    %3305 = vsyncpa %s3304, 1
    %3306 = vsyncpa [#allocation22], 1
    %s3307 = scalar_lea.sflag [#allocation22], 1
    %3308 = vsyncpa %s3307, 1
    %3309 = vsyncpa [#allocation25], 1
    %s3310 = scalar_lea.sflag [#allocation25], 1
    %3311 = vsyncpa %s3310, 1
    %3312 = vsyncpa [#allocation5], 1
    %s3313 = scalar_lea.sflag [#allocation5], 1
    %3314 = vsyncpa %s3313, 1

</llo_original>
